<compile_context>
chip_gen: v7x
topology: tpu7x:2x2x1
jax: 0.10.0
libtpu: 0.0.40
codegen_flags: <defaults>
</compile_context>

<pallas_src>
import numpy as np
import jax
import jax.numpy as jnp
from jax.experimental import pallas as pl
from jax.experimental.pallas import tpu as pltpu


# --------------------------- fused GRU + classifier kernel ---------------------------
def _gru_classifier_kernel(
    x_ref,       # (TS*B, D)  bf16  time-major block of BERT features (rows = t*B + b)
    wih_ref,     # (D, 3H)    bf16  input-proj weight (gate order r, z, n)
    bih_ref,     # (1, 3H)    f32
    whh_r_ref,   # (H, H)     f32
    whh_z_ref,   # (H, H)     f32
    whh_n_ref,   # (H, H)     f32
    bhh_r_ref,   # (1, H)     f32
    bhh_z_ref,   # (1, H)     f32
    bhh_n_ref,   # (1, H)     f32
    wlin_ref,    # (S, H, O)  f32  classifier weight, per-timestep slices
    blin_ref,    # (1, O)     f32
    out_ref,     # (B, O)     f32
    gxr_ref,     # VMEM scratch (S, B, H) f32
    gxz_ref,     # VMEM scratch (S, B, H) f32
    gxn_ref,     # VMEM scratch (S, B, H) f32
):
    blk = pl.program_id(0)
    nblk = pl.num_programs(0)
    S, B, H = gxr_ref.shape
    TS = x_ref.shape[0] // B          # timesteps in this block (static)
    O = out_ref.shape[1]

    # ---- Phase 1: hoisted input projection for this block of timesteps (bf16 MXU) ----
    gx = jnp.dot(x_ref[...], wih_ref[...], preferred_element_type=jnp.float32)
    gx = gx + bih_ref[...]            # fold b_ih once per block         (TS*B, 3H) f32
    gx_r = gx[:, 0:H]                 # gate split done once per block, not per step
    gx_z = gx[:, H:2 * H]
    gx_n = gx[:, 2 * H:3 * H]
    base = blk * TS
    for i in range(TS):               # static unroll; amortized over the whole block
        rows = slice(i * B, (i + 1) * B)
        gxr_ref[base + i] = gx_r[rows]
        gxz_ref[base + i] = gx_z[rows]
        gxn_ref[base + i] = gx_n[rows]

    # ---- Phase 2 (last block): recurrence + fused linear/sigmoid classifier ----
    @pl.when(blk == nblk - 1)
    def _():
        whh_r = whh_r_ref[...]
        whh_z = whh_z_ref[...]
        whh_n = whh_n_ref[...]
        # hoist bias broadcasts out of the loop (JAX does not CSE broadcast_in_dim)
        bhh_r = jnp.broadcast_to(bhh_r_ref[...], (B, H))
        bhh_z = jnp.broadcast_to(bhh_z_ref[...], (B, H))
        bhh_n = jnp.broadcast_to(bhh_n_ref[...], (B, H))
        blin = blin_ref[...]

        def step(t, carry):
            h, logits = carry
            # only the tiny (B,H)x(H,H) recurrent matmuls sit on the serial chain
            gh_r = jnp.dot(h, whh_r, preferred_element_type=jnp.float32) + bhh_r
            gh_z = jnp.dot(h, whh_z, preferred_element_type=jnp.float32) + bhh_z
            gh_n = jnp.dot(h, whh_n, preferred_element_type=jnp.float32) + bhh_n
            r = jax.nn.sigmoid(gxr_ref[t] + gh_r)
            z = jax.nn.sigmoid(gxz_ref[t] + gh_z)
            n = jnp.tanh(gxn_ref[t] + r * gh_n)       # b_in already folded into gx_n
            h_new = (1.0 - z) * n + z * h
            # fused classifier: logits += h_t @ W_lin[t]
            logits = logits + jnp.dot(h_new, wlin_ref[t],
                                      preferred_element_type=jnp.float32)
            return (h_new, logits)

        h0 = jnp.zeros((B, H), jnp.float32)           # init_hidden: zeros
        l0 = jnp.zeros((B, O), jnp.float32)
        _, logits = jax.lax.fori_loop(0, S, step, (h0, l0), unroll=True)
        out_ref[...] = jax.nn.sigmoid(logits + blin).astype(out_ref.dtype)


def _const_spec(shape):
    zeros = (0,) * len(shape)
    return pl.BlockSpec(shape, lambda s: zeros)       # loaded once, resident across grid


# ------------------------------------ wrapper ----------------------------------------
def gru_classifier_forward(feats_bsd, torch_params, *, ts_block=None):
    """feats_bsd: (B, S, 768) f32 BERT features (stand-in for bert_model(x)[0]).

    torch_params (PyTorch layout, gate order r,z,n):
      wih (3H, D), whh (3H, H), bih (1, 3H), bhh (1, 3H), w_lin (O, S*H), b_lin (1, O)
    """
    B, S, D = feats_bsd.shape
    H = torch_params["whh"].shape[1]
    O = torch_params["w_lin"].shape[0]

    if ts_block is None:
        ts_block = S if S <= 128 else 128             # grid over timestep blocks
    assert S % ts_block == 0
    n_blocks = S // ts_block
    assert n_blocks == 1 or (ts_block * B) % 8 == 0   # sublane-aligned x blocks

    # ---- host-side parameter re-layout (once) ----
    wih_t = torch_params["wih"].T.astype(jnp.bfloat16)               # (D, 3H) bf16 MXU
    bih = torch_params["bih"].reshape(1, 3 * H).astype(jnp.float32)
    whh_t = torch_params["whh"].T.astype(jnp.float32)                # (H, 3H)
    whh_r, whh_z, whh_n = whh_t[:, 0:H], whh_t[:, H:2 * H], whh_t[:, 2 * H:3 * H]
    bhh = torch_params["bhh"].reshape(1, 3 * H).astype(jnp.float32)
    bhh_r, bhh_z, bhh_n = bhh[:, 0:H], bhh[:, H:2 * H], bhh[:, 2 * H:3 * H]
    wlin = torch_params["w_lin"].T.reshape(S, H, O).astype(jnp.float32)
    blin = torch_params["b_lin"].reshape(1, O).astype(jnp.float32)

    # time-major, flattened (row = t*B + b), bf16 for the MXU input projection
    x_flat = jnp.transpose(feats_bsd, (1, 0, 2)).reshape(S * B, D).astype(jnp.bfloat16)

    grid_spec = pltpu.PrefetchScalarGridSpec(
        num_scalar_prefetch=0,
        grid=(n_blocks,),
        in_specs=[
            pl.BlockSpec((ts_block * B, D), lambda s: (s, 0)),       # streamed x
            _const_spec((D, 3 * H)),
            _const_spec((1, 3 * H)),
            _const_spec((H, H)), _const_spec((H, H)), _const_spec((H, H)),
            _const_spec((1, H)), _const_spec((1, H)), _const_spec((1, H)),
            _const_spec((S, H, O)),
            _const_spec((1, O)),
        ],
        out_specs=pl.BlockSpec((B, O), lambda s: (0, 0)),
        scratch_shapes=[pltpu.VMEM((S, B, H), jnp.float32)] * 3,
    )
    return pl.pallas_call(
        _gru_classifier_kernel,
        out_shape=jax.ShapeDtypeStruct((B, O), jnp.float32),
        grid_spec=grid_spec,
        compiler_params=pltpu.CompilerParams(dimension_semantics=("arbitrary",)),
    )(x_flat, wih_t, bih, whh_r, whh_z, whh_n, bhh_r, bhh_z, bhh_n, wlin, blin)


# ----------------------------- Reference (pure JAX, f32) -----------------------------
def gru_classifier_reference(feats_bsd, torch_params):
    B, S, _ = feats_bsd.shape
    H = torch_params["whh"].shape[1]
    wih_t = torch_params["wih"].T.astype(jnp.float32)
    whh_t = torch_params["whh"].T.astype(jnp.float32)
    bih = torch_params["bih"].reshape(1, 3 * H)
    bhh = torch_params["bhh"].reshape(1, 3 * H)

    def step(h, x_t):
        gx = x_t @ wih_t + bih
        gh = h @ whh_t + bhh
        r = jax.nn.sigmoid(gx[:, :H] + gh[:, :H])
        z = jax.nn.sigmoid(gx[:, H:2 * H] + gh[:, H:2 * H])
        n = jnp.tanh(gx[:, 2 * H:] + r * gh[:, 2 * H:])
        h_new = (1.0 - z) * n + z * h
        return h_new, h_new

    _, outs = jax.lax.scan(step, jnp.zeros((B, H), jnp.float32),
                           jnp.transpose(feats_bsd, (1, 0, 2)))
    flat = jnp.transpose(outs, (1, 0, 2)).reshape(B, S * H)
    return jax.nn.sigmoid(flat @ torch_params["w_lin"].T + torch_params["b_lin"])


# ----------------------------------------- main --------------------------------------
if __name__ == "__main__":
    B, S, D = 2, 8, 768          # batch, seq len, BERT hidden size
    H, O = 32, 4                 # GRU hidden size, output size
    vocab_size = 100

    key = jax.random.PRNGKey(0)
    k_tok, k_feat, k1, k2, k3, k4, k5, k6 = jax.random.split(key, 8)

    # Token ids (module input) — shown only for shape fidelity.
    x_tokens = jax.random.randint(k_tok, (B, S), 0, vocab_size)

    # TODO(synk): `bert_model(x)` (KB/bert-base-swedish-cased) has no in-script Pallas
    # equivalent; a deterministic (B, S, 768) feature tensor stands in for its output.
    feats = (0.1 * jax.random.normal(k_feat, (B, S, D))).astype(jnp.float32)

    # GRU parameters, PyTorch default init: U(-1/sqrt(H), 1/sqrt(H)), gate order r,z,n.
    kgru = 1.0 / np.sqrt(H)
    wih = jax.random.uniform(k1, (3 * H, D), jnp.float32, -kgru, kgru)
    whh = jax.random.uniform(k2, (3 * H, H), jnp.float32, -kgru, kgru)
    bih = jax.random.uniform(k3, (1, 3 * H), jnp.float32, -kgru, kgru)
    bhh = jax.random.uniform(k4, (1, 3 * H), jnp.float32, -kgru, kgru)

    # Linear(S*H, O) — created fresh inside forward() in PyTorch; deterministic here.
    klin = 1.0 / np.sqrt(S * H)
    w_lin = jax.random.uniform(k5, (O, S * H), jnp.float32, -klin, klin)
    b_lin = jax.random.uniform(k6, (1, O), jnp.float32, -klin, klin)

    torch_params = dict(wih=wih, whh=whh, bih=bih, bhh=bhh, w_lin=w_lin, b_lin=b_lin)

    out = jax.block_until_ready(gru_classifier_forward(feats, torch_params))
    ref = jax.block_until_ready(gru_classifier_reference(feats, torch_params))

    assert out.shape == (B, O), out.shape
    # bf16 is used only for the hoisted (S*B,768)x(768,3H) input projection with f32
    # accumulation; everything else stays f32, so deviation from the f32 reference is
    # well inside 5e-3.
    np.testing.assert_allclose(np.asarray(out), np.asarray(ref), rtol=5e-3, atol=5e-3)
    print("KERNEL_OK")
</pallas_src>

<mosaic_0001>
module attributes {stable_mosaic.version = 11 : i64} {
  func.func @_gru_classifier_kernel(%arg0: i32, %arg1: memref<16x768xbf16, #tpu.memory_space<vmem>>, %arg2: memref<768x96xbf16, #tpu.memory_space<vmem>>, %arg3: memref<1x96xf32, #tpu.memory_space<vmem>>, %arg4: memref<32x32xf32, #tpu.memory_space<vmem>>, %arg5: memref<32x32xf32, #tpu.memory_space<vmem>>, %arg6: memref<32x32xf32, #tpu.memory_space<vmem>>, %arg7: memref<1x32xf32, #tpu.memory_space<vmem>>, %arg8: memref<1x32xf32, #tpu.memory_space<vmem>>, %arg9: memref<1x32xf32, #tpu.memory_space<vmem>>, %arg10: memref<8x32x4xf32, #tpu.memory_space<vmem>>, %arg11: memref<1x4xf32, #tpu.memory_space<vmem>>, %arg12: memref<2x4xf32, #tpu.memory_space<vmem>>, %arg13: memref<8x2x32xf32, #tpu.memory_space<vmem>>, %arg14: memref<8x2x32xf32, #tpu.memory_space<vmem>>, %arg15: memref<8x2x32xf32, #tpu.memory_space<vmem>>) attributes {dimension_semantics = [#tpu.dimension_semantics<arbitrary>], iteration_bounds = array<i64: 1>, scalar_prefetch = 0 : i64, scratch_operands = 3 : i64, tpu.core_type = #tpu.core_type<tc>, window_params = [{transform_indices = @transform_0, window_bounds = array<i64: 16, 768>}, {pipeline_mode = #tpu.pipeline_mode<synchronous>, transform_indices = @transform_1, window_bounds = array<i64: 768, 96>}, {pipeline_mode = #tpu.pipeline_mode<synchronous>, transform_indices = @transform_2, window_bounds = array<i64: 1, 96>}, {pipeline_mode = #tpu.pipeline_mode<synchronous>, transform_indices = @transform_3, window_bounds = array<i64: 32, 32>}, {pipeline_mode = #tpu.pipeline_mode<synchronous>, transform_indices = @transform_4, window_bounds = array<i64: 32, 32>}, {pipeline_mode = #tpu.pipeline_mode<synchronous>, transform_indices = @transform_5, window_bounds = array<i64: 32, 32>}, {pipeline_mode = #tpu.pipeline_mode<synchronous>, transform_indices = @transform_6, window_bounds = array<i64: 1, 32>}, {pipeline_mode = #tpu.pipeline_mode<synchronous>, transform_indices = @transform_7, window_bounds = array<i64: 1, 32>}, {pipeline_mode = #tpu.pipeline_mode<synchronous>, transform_indices = @transform_8, window_bounds = array<i64: 1, 32>}, {pipeline_mode = #tpu.pipeline_mode<synchronous>, transform_indices = @transform_9, window_bounds = array<i64: 8, 32, 4>}, {pipeline_mode = #tpu.pipeline_mode<synchronous>, transform_indices = @transform_10, window_bounds = array<i64: 1, 4>}, {pipeline_mode = #tpu.pipeline_mode<synchronous>, transform_indices = @transform_11, window_bounds = array<i64: 2, 4>}]} {
    %c0 = arith.constant 0 : index
    %c0_0 = arith.constant 0 : index
    %0 = vector.load %arg1[%c0, %c0_0] : memref<16x768xbf16, #tpu.memory_space<vmem>>, vector<16x768xbf16>
    %c0_1 = arith.constant 0 : index
    %c0_2 = arith.constant 0 : index
    %1 = vector.load %arg2[%c0_1, %c0_2] : memref<768x96xbf16, #tpu.memory_space<vmem>>, vector<768x96xbf16>
    %cst = arith.constant dense<0.000000e+00> : vector<16x96xf32>
    %2 = tpu.matmul %0, %1, %cst {dimension_numbers = #tpu.dot_dimension_numbers<[1], [0], [0], [1], [0, 0, 1, 1], [], []>} : vector<16x768xbf16>, vector<768x96xbf16>, vector<16x96xf32> -> vector<16x96xf32>
    %c0_3 = arith.constant 0 : index
    %c0_4 = arith.constant 0 : index
    %3 = vector.load %arg3[%c0_3, %c0_4] : memref<1x96xf32, #tpu.memory_space<vmem>>, vector<1x96xf32>
    %4 = vector.broadcast %3 : vector<1x96xf32> to vector<16x96xf32>
    %5 = arith.addf %2, %4 : vector<16x96xf32>
    %6 = vector.extract_strided_slice %5 {offsets = [0, 0], sizes = [16, 32], strides = [1, 1]} : vector<16x96xf32> to vector<16x32xf32>
    %7 = vector.extract_strided_slice %5 {offsets = [0, 32], sizes = [16, 32], strides = [1, 1]} : vector<16x96xf32> to vector<16x32xf32>
    %8 = vector.extract_strided_slice %5 {offsets = [0, 64], sizes = [16, 32], strides = [1, 1]} : vector<16x96xf32> to vector<16x32xf32>
    %c8_i32 = arith.constant 8 : i32
    %9 = arith.muli %arg0, %c8_i32 : i32
    %10 = vector.extract_strided_slice %6 {offsets = [0, 0], sizes = [2, 32], strides = [1, 1]} : vector<16x32xf32> to vector<2x32xf32>
    %c0_i32 = arith.constant 0 : i32
    %11 = arith.addi %9, %c0_i32 : i32
    %12 = arith.index_cast %11 : i32 to index
    %c0_5 = arith.constant 0 : index
    %c0_6 = arith.constant 0 : index
    %13 = vector.load %arg13[%12, %c0_5, %c0_6] : memref<8x2x32xf32, #tpu.memory_space<vmem>>, vector<1x2x32xf32>
    %14 = vector.shape_cast %13 : vector<1x2x32xf32> to vector<2x32xf32>
    %15 = vector.shape_cast %10 : vector<2x32xf32> to vector<1x2x32xf32>
    tpu.vector_store %arg13[%12, %c0_5, %c0_6], %15 {strides = array<i32>} : memref<8x2x32xf32, #tpu.memory_space<vmem>>, vector<1x2x32xf32>,
    %16 = vector.extract_strided_slice %7 {offsets = [0, 0], sizes = [2, 32], strides = [1, 1]} : vector<16x32xf32> to vector<2x32xf32>
    %c0_i32_7 = arith.constant 0 : i32
    %17 = arith.addi %9, %c0_i32_7 : i32
    %18 = arith.index_cast %17 : i32 to index
    %c0_8 = arith.constant 0 : index
    %c0_9 = arith.constant 0 : index
    %19 = vector.load %arg14[%18, %c0_8, %c0_9] : memref<8x2x32xf32, #tpu.memory_space<vmem>>, vector<1x2x32xf32>
    %20 = vector.shape_cast %19 : vector<1x2x32xf32> to vector<2x32xf32>
    %21 = vector.shape_cast %16 : vector<2x32xf32> to vector<1x2x32xf32>
    tpu.vector_store %arg14[%18, %c0_8, %c0_9], %21 {strides = array<i32>} : memref<8x2x32xf32, #tpu.memory_space<vmem>>, vector<1x2x32xf32>,
    %22 = vector.extract_strided_slice %8 {offsets = [0, 0], sizes = [2, 32], strides = [1, 1]} : vector<16x32xf32> to vector<2x32xf32>
    %c0_i32_10 = arith.constant 0 : i32
    %23 = arith.addi %9, %c0_i32_10 : i32
    %24 = arith.index_cast %23 : i32 to index
    %c0_11 = arith.constant 0 : index
    %c0_12 = arith.constant 0 : index
    %25 = vector.load %arg15[%24, %c0_11, %c0_12] : memref<8x2x32xf32, #tpu.memory_space<vmem>>, vector<1x2x32xf32>
    %26 = vector.shape_cast %25 : vector<1x2x32xf32> to vector<2x32xf32>
    %27 = vector.shape_cast %22 : vector<2x32xf32> to vector<1x2x32xf32>
    tpu.vector_store %arg15[%24, %c0_11, %c0_12], %27 {strides = array<i32>} : memref<8x2x32xf32, #tpu.memory_space<vmem>>, vector<1x2x32xf32>,
    %28 = vector.extract_strided_slice %6 {offsets = [2, 0], sizes = [2, 32], strides = [1, 1]} : vector<16x32xf32> to vector<2x32xf32>
    %c1_i32 = arith.constant 1 : i32
    %29 = arith.addi %9, %c1_i32 : i32
    %30 = arith.index_cast %29 : i32 to index
    %c0_13 = arith.constant 0 : index
    %c0_14 = arith.constant 0 : index
    %31 = vector.load %arg13[%30, %c0_13, %c0_14] : memref<8x2x32xf32, #tpu.memory_space<vmem>>, vector<1x2x32xf32>
    %32 = vector.shape_cast %31 : vector<1x2x32xf32> to vector<2x32xf32>
    %33 = vector.shape_cast %28 : vector<2x32xf32> to vector<1x2x32xf32>
    tpu.vector_store %arg13[%30, %c0_13, %c0_14], %33 {strides = array<i32>} : memref<8x2x32xf32, #tpu.memory_space<vmem>>, vector<1x2x32xf32>,
    %34 = vector.extract_strided_slice %7 {offsets = [2, 0], sizes = [2, 32], strides = [1, 1]} : vector<16x32xf32> to vector<2x32xf32>
    %c1_i32_15 = arith.constant 1 : i32
    %35 = arith.addi %9, %c1_i32_15 : i32
    %36 = arith.index_cast %35 : i32 to index
    %c0_16 = arith.constant 0 : index
    %c0_17 = arith.constant 0 : index
    %37 = vector.load %arg14[%36, %c0_16, %c0_17] : memref<8x2x32xf32, #tpu.memory_space<vmem>>, vector<1x2x32xf32>
    %38 = vector.shape_cast %37 : vector<1x2x32xf32> to vector<2x32xf32>
    %39 = vector.shape_cast %34 : vector<2x32xf32> to vector<1x2x32xf32>
    tpu.vector_store %arg14[%36, %c0_16, %c0_17], %39 {strides = array<i32>} : memref<8x2x32xf32, #tpu.memory_space<vmem>>, vector<1x2x32xf32>,
    %40 = vector.extract_strided_slice %8 {offsets = [2, 0], sizes = [2, 32], strides = [1, 1]} : vector<16x32xf32> to vector<2x32xf32>
    %c1_i32_18 = arith.constant 1 : i32
    %41 = arith.addi %9, %c1_i32_18 : i32
    %42 = arith.index_cast %41 : i32 to index
    %c0_19 = arith.constant 0 : index
    %c0_20 = arith.constant 0 : index
    %43 = vector.load %arg15[%42, %c0_19, %c0_20] : memref<8x2x32xf32, #tpu.memory_space<vmem>>, vector<1x2x32xf32>
    %44 = vector.shape_cast %43 : vector<1x2x32xf32> to vector<2x32xf32>
    %45 = vector.shape_cast %40 : vector<2x32xf32> to vector<1x2x32xf32>
    tpu.vector_store %arg15[%42, %c0_19, %c0_20], %45 {strides = array<i32>} : memref<8x2x32xf32, #tpu.memory_space<vmem>>, vector<1x2x32xf32>,
    %46 = vector.extract_strided_slice %6 {offsets = [4, 0], sizes = [2, 32], strides = [1, 1]} : vector<16x32xf32> to vector<2x32xf32>
    %c2_i32 = arith.constant 2 : i32
    %47 = arith.addi %9, %c2_i32 : i32
    %48 = arith.index_cast %47 : i32 to index
    %c0_21 = arith.constant 0 : index
    %c0_22 = arith.constant 0 : index
    %49 = vector.load %arg13[%48, %c0_21, %c0_22] : memref<8x2x32xf32, #tpu.memory_space<vmem>>, vector<1x2x32xf32>
    %50 = vector.shape_cast %49 : vector<1x2x32xf32> to vector<2x32xf32>
    %51 = vector.shape_cast %46 : vector<2x32xf32> to vector<1x2x32xf32>
    tpu.vector_store %arg13[%48, %c0_21, %c0_22], %51 {strides = array<i32>} : memref<8x2x32xf32, #tpu.memory_space<vmem>>, vector<1x2x32xf32>,
    %52 = vector.extract_strided_slice %7 {offsets = [4, 0], sizes = [2, 32], strides = [1, 1]} : vector<16x32xf32> to vector<2x32xf32>
    %c2_i32_23 = arith.constant 2 : i32
    %53 = arith.addi %9, %c2_i32_23 : i32
    %54 = arith.index_cast %53 : i32 to index
    %c0_24 = arith.constant 0 : index
    %c0_25 = arith.constant 0 : index
    %55 = vector.load %arg14[%54, %c0_24, %c0_25] : memref<8x2x32xf32, #tpu.memory_space<vmem>>, vector<1x2x32xf32>
    %56 = vector.shape_cast %55 : vector<1x2x32xf32> to vector<2x32xf32>
    %57 = vector.shape_cast %52 : vector<2x32xf32> to vector<1x2x32xf32>
    tpu.vector_store %arg14[%54, %c0_24, %c0_25], %57 {strides = array<i32>} : memref<8x2x32xf32, #tpu.memory_space<vmem>>, vector<1x2x32xf32>,
    %58 = vector.extract_strided_slice %8 {offsets = [4, 0], sizes = [2, 32], strides = [1, 1]} : vector<16x32xf32> to vector<2x32xf32>
    %c2_i32_26 = arith.constant 2 : i32
    %59 = arith.addi %9, %c2_i32_26 : i32
    %60 = arith.index_cast %59 : i32 to index
    %c0_27 = arith.constant 0 : index
    %c0_28 = arith.constant 0 : index
    %61 = vector.load %arg15[%60, %c0_27, %c0_28] : memref<8x2x32xf32, #tpu.memory_space<vmem>>, vector<1x2x32xf32>
    %62 = vector.shape_cast %61 : vector<1x2x32xf32> to vector<2x32xf32>
    %63 = vector.shape_cast %58 : vector<2x32xf32> to vector<1x2x32xf32>
    tpu.vector_store %arg15[%60, %c0_27, %c0_28], %63 {strides = array<i32>} : memref<8x2x32xf32, #tpu.memory_space<vmem>>, vector<1x2x32xf32>,
    %64 = vector.extract_strided_slice %6 {offsets = [6, 0], sizes = [2, 32], strides = [1, 1]} : vector<16x32xf32> to vector<2x32xf32>
    %c3_i32 = arith.constant 3 : i32
    %65 = arith.addi %9, %c3_i32 : i32
    %66 = arith.index_cast %65 : i32 to index
    %c0_29 = arith.constant 0 : index
    %c0_30 = arith.constant 0 : index
    %67 = vector.load %arg13[%66, %c0_29, %c0_30] : memref<8x2x32xf32, #tpu.memory_space<vmem>>, vector<1x2x32xf32>
    %68 = vector.shape_cast %67 : vector<1x2x32xf32> to vector<2x32xf32>
    %69 = vector.shape_cast %64 : vector<2x32xf32> to vector<1x2x32xf32>
    tpu.vector_store %arg13[%66, %c0_29, %c0_30], %69 {strides = array<i32>} : memref<8x2x32xf32, #tpu.memory_space<vmem>>, vector<1x2x32xf32>,
    %70 = vector.extract_strided_slice %7 {offsets = [6, 0], sizes = [2, 32], strides = [1, 1]} : vector<16x32xf32> to vector<2x32xf32>
    %c3_i32_31 = arith.constant 3 : i32
    %71 = arith.addi %9, %c3_i32_31 : i32
    %72 = arith.index_cast %71 : i32 to index
    %c0_32 = arith.constant 0 : index
    %c0_33 = arith.constant 0 : index
    %73 = vector.load %arg14[%72, %c0_32, %c0_33] : memref<8x2x32xf32, #tpu.memory_space<vmem>>, vector<1x2x32xf32>
    %74 = vector.shape_cast %73 : vector<1x2x32xf32> to vector<2x32xf32>
    %75 = vector.shape_cast %70 : vector<2x32xf32> to vector<1x2x32xf32>
    tpu.vector_store %arg14[%72, %c0_32, %c0_33], %75 {strides = array<i32>} : memref<8x2x32xf32, #tpu.memory_space<vmem>>, vector<1x2x32xf32>,
    %76 = vector.extract_strided_slice %8 {offsets = [6, 0], sizes = [2, 32], strides = [1, 1]} : vector<16x32xf32> to vector<2x32xf32>
    %c3_i32_34 = arith.constant 3 : i32
    %77 = arith.addi %9, %c3_i32_34 : i32
    %78 = arith.index_cast %77 : i32 to index
    %c0_35 = arith.constant 0 : index
    %c0_36 = arith.constant 0 : index
    %79 = vector.load %arg15[%78, %c0_35, %c0_36] : memref<8x2x32xf32, #tpu.memory_space<vmem>>, vector<1x2x32xf32>
    %80 = vector.shape_cast %79 : vector<1x2x32xf32> to vector<2x32xf32>
    %81 = vector.shape_cast %76 : vector<2x32xf32> to vector<1x2x32xf32>
    tpu.vector_store %arg15[%78, %c0_35, %c0_36], %81 {strides = array<i32>} : memref<8x2x32xf32, #tpu.memory_space<vmem>>, vector<1x2x32xf32>,
    %82 = vector.extract_strided_slice %6 {offsets = [8, 0], sizes = [2, 32], strides = [1, 1]} : vector<16x32xf32> to vector<2x32xf32>
    %c4_i32 = arith.constant 4 : i32
    %83 = arith.addi %9, %c4_i32 : i32
    %84 = arith.index_cast %83 : i32 to index
    %c0_37 = arith.constant 0 : index
    %c0_38 = arith.constant 0 : index
    %85 = vector.load %arg13[%84, %c0_37, %c0_38] : memref<8x2x32xf32, #tpu.memory_space<vmem>>, vector<1x2x32xf32>
    %86 = vector.shape_cast %85 : vector<1x2x32xf32> to vector<2x32xf32>
    %87 = vector.shape_cast %82 : vector<2x32xf32> to vector<1x2x32xf32>
    tpu.vector_store %arg13[%84, %c0_37, %c0_38], %87 {strides = array<i32>} : memref<8x2x32xf32, #tpu.memory_space<vmem>>, vector<1x2x32xf32>,
    %88 = vector.extract_strided_slice %7 {offsets = [8, 0], sizes = [2, 32], strides = [1, 1]} : vector<16x32xf32> to vector<2x32xf32>
    %c4_i32_39 = arith.constant 4 : i32
    %89 = arith.addi %9, %c4_i32_39 : i32
    %90 = arith.index_cast %89 : i32 to index
    %c0_40 = arith.constant 0 : index
    %c0_41 = arith.constant 0 : index
    %91 = vector.load %arg14[%90, %c0_40, %c0_41] : memref<8x2x32xf32, #tpu.memory_space<vmem>>, vector<1x2x32xf32>
    %92 = vector.shape_cast %91 : vector<1x2x32xf32> to vector<2x32xf32>
    %93 = vector.shape_cast %88 : vector<2x32xf32> to vector<1x2x32xf32>
    tpu.vector_store %arg14[%90, %c0_40, %c0_41], %93 {strides = array<i32>} : memref<8x2x32xf32, #tpu.memory_space<vmem>>, vector<1x2x32xf32>,
    %94 = vector.extract_strided_slice %8 {offsets = [8, 0], sizes = [2, 32], strides = [1, 1]} : vector<16x32xf32> to vector<2x32xf32>
    %c4_i32_42 = arith.constant 4 : i32
    %95 = arith.addi %9, %c4_i32_42 : i32
    %96 = arith.index_cast %95 : i32 to index
    %c0_43 = arith.constant 0 : index
    %c0_44 = arith.constant 0 : index
    %97 = vector.load %arg15[%96, %c0_43, %c0_44] : memref<8x2x32xf32, #tpu.memory_space<vmem>>, vector<1x2x32xf32>
    %98 = vector.shape_cast %97 : vector<1x2x32xf32> to vector<2x32xf32>
    %99 = vector.shape_cast %94 : vector<2x32xf32> to vector<1x2x32xf32>
    tpu.vector_store %arg15[%96, %c0_43, %c0_44], %99 {strides = array<i32>} : memref<8x2x32xf32, #tpu.memory_space<vmem>>, vector<1x2x32xf32>,
    %100 = vector.extract_strided_slice %6 {offsets = [10, 0], sizes = [2, 32], strides = [1, 1]} : vector<16x32xf32> to vector<2x32xf32>
    %c5_i32 = arith.constant 5 : i32
    %101 = arith.addi %9, %c5_i32 : i32
    %102 = arith.index_cast %101 : i32 to index
    %c0_45 = arith.constant 0 : index
    %c0_46 = arith.constant 0 : index
    %103 = vector.load %arg13[%102, %c0_45, %c0_46] : memref<8x2x32xf32, #tpu.memory_space<vmem>>, vector<1x2x32xf32>
    %104 = vector.shape_cast %103 : vector<1x2x32xf32> to vector<2x32xf32>
    %105 = vector.shape_cast %100 : vector<2x32xf32> to vector<1x2x32xf32>
    tpu.vector_store %arg13[%102, %c0_45, %c0_46], %105 {strides = array<i32>} : memref<8x2x32xf32, #tpu.memory_space<vmem>>, vector<1x2x32xf32>,
    %106 = vector.extract_strided_slice %7 {offsets = [10, 0], sizes = [2, 32], strides = [1, 1]} : vector<16x32xf32> to vector<2x32xf32>
    %c5_i32_47 = arith.constant 5 : i32
    %107 = arith.addi %9, %c5_i32_47 : i32
    %108 = arith.index_cast %107 : i32 to index
    %c0_48 = arith.constant 0 : index
    %c0_49 = arith.constant 0 : index
    %109 = vector.load %arg14[%108, %c0_48, %c0_49] : memref<8x2x32xf32, #tpu.memory_space<vmem>>, vector<1x2x32xf32>
    %110 = vector.shape_cast %109 : vector<1x2x32xf32> to vector<2x32xf32>
    %111 = vector.shape_cast %106 : vector<2x32xf32> to vector<1x2x32xf32>
    tpu.vector_store %arg14[%108, %c0_48, %c0_49], %111 {strides = array<i32>} : memref<8x2x32xf32, #tpu.memory_space<vmem>>, vector<1x2x32xf32>,
    %112 = vector.extract_strided_slice %8 {offsets = [10, 0], sizes = [2, 32], strides = [1, 1]} : vector<16x32xf32> to vector<2x32xf32>
    %c5_i32_50 = arith.constant 5 : i32
    %113 = arith.addi %9, %c5_i32_50 : i32
    %114 = arith.index_cast %113 : i32 to index
    %c0_51 = arith.constant 0 : index
    %c0_52 = arith.constant 0 : index
    %115 = vector.load %arg15[%114, %c0_51, %c0_52] : memref<8x2x32xf32, #tpu.memory_space<vmem>>, vector<1x2x32xf32>
    %116 = vector.shape_cast %115 : vector<1x2x32xf32> to vector<2x32xf32>
    %117 = vector.shape_cast %112 : vector<2x32xf32> to vector<1x2x32xf32>
    tpu.vector_store %arg15[%114, %c0_51, %c0_52], %117 {strides = array<i32>} : memref<8x2x32xf32, #tpu.memory_space<vmem>>, vector<1x2x32xf32>,
    %118 = vector.extract_strided_slice %6 {offsets = [12, 0], sizes = [2, 32], strides = [1, 1]} : vector<16x32xf32> to vector<2x32xf32>
    %c6_i32 = arith.constant 6 : i32
    %119 = arith.addi %9, %c6_i32 : i32
    %120 = arith.index_cast %119 : i32 to index
    %c0_53 = arith.constant 0 : index
    %c0_54 = arith.constant 0 : index
    %121 = vector.load %arg13[%120, %c0_53, %c0_54] : memref<8x2x32xf32, #tpu.memory_space<vmem>>, vector<1x2x32xf32>
    %122 = vector.shape_cast %121 : vector<1x2x32xf32> to vector<2x32xf32>
    %123 = vector.shape_cast %118 : vector<2x32xf32> to vector<1x2x32xf32>
    tpu.vector_store %arg13[%120, %c0_53, %c0_54], %123 {strides = array<i32>} : memref<8x2x32xf32, #tpu.memory_space<vmem>>, vector<1x2x32xf32>,
    %124 = vector.extract_strided_slice %7 {offsets = [12, 0], sizes = [2, 32], strides = [1, 1]} : vector<16x32xf32> to vector<2x32xf32>
    %c6_i32_55 = arith.constant 6 : i32
    %125 = arith.addi %9, %c6_i32_55 : i32
    %126 = arith.index_cast %125 : i32 to index
    %c0_56 = arith.constant 0 : index
    %c0_57 = arith.constant 0 : index
    %127 = vector.load %arg14[%126, %c0_56, %c0_57] : memref<8x2x32xf32, #tpu.memory_space<vmem>>, vector<1x2x32xf32>
    %128 = vector.shape_cast %127 : vector<1x2x32xf32> to vector<2x32xf32>
    %129 = vector.shape_cast %124 : vector<2x32xf32> to vector<1x2x32xf32>
    tpu.vector_store %arg14[%126, %c0_56, %c0_57], %129 {strides = array<i32>} : memref<8x2x32xf32, #tpu.memory_space<vmem>>, vector<1x2x32xf32>,
    %130 = vector.extract_strided_slice %8 {offsets = [12, 0], sizes = [2, 32], strides = [1, 1]} : vector<16x32xf32> to vector<2x32xf32>
    %c6_i32_58 = arith.constant 6 : i32
    %131 = arith.addi %9, %c6_i32_58 : i32
    %132 = arith.index_cast %131 : i32 to index
    %c0_59 = arith.constant 0 : index
    %c0_60 = arith.constant 0 : index
    %133 = vector.load %arg15[%132, %c0_59, %c0_60] : memref<8x2x32xf32, #tpu.memory_space<vmem>>, vector<1x2x32xf32>
    %134 = vector.shape_cast %133 : vector<1x2x32xf32> to vector<2x32xf32>
    %135 = vector.shape_cast %130 : vector<2x32xf32> to vector<1x2x32xf32>
    tpu.vector_store %arg15[%132, %c0_59, %c0_60], %135 {strides = array<i32>} : memref<8x2x32xf32, #tpu.memory_space<vmem>>, vector<1x2x32xf32>,
    %136 = vector.extract_strided_slice %6 {offsets = [14, 0], sizes = [2, 32], strides = [1, 1]} : vector<16x32xf32> to vector<2x32xf32>
    %c7_i32 = arith.constant 7 : i32
    %137 = arith.addi %9, %c7_i32 : i32
    %138 = arith.index_cast %137 : i32 to index
    %c0_61 = arith.constant 0 : index
    %c0_62 = arith.constant 0 : index
    %139 = vector.load %arg13[%138, %c0_61, %c0_62] : memref<8x2x32xf32, #tpu.memory_space<vmem>>, vector<1x2x32xf32>
    %140 = vector.shape_cast %139 : vector<1x2x32xf32> to vector<2x32xf32>
    %141 = vector.shape_cast %136 : vector<2x32xf32> to vector<1x2x32xf32>
    tpu.vector_store %arg13[%138, %c0_61, %c0_62], %141 {strides = array<i32>} : memref<8x2x32xf32, #tpu.memory_space<vmem>>, vector<1x2x32xf32>,
    %142 = vector.extract_strided_slice %7 {offsets = [14, 0], sizes = [2, 32], strides = [1, 1]} : vector<16x32xf32> to vector<2x32xf32>
    %c7_i32_63 = arith.constant 7 : i32
    %143 = arith.addi %9, %c7_i32_63 : i32
    %144 = arith.index_cast %143 : i32 to index
    %c0_64 = arith.constant 0 : index
    %c0_65 = arith.constant 0 : index
    %145 = vector.load %arg14[%144, %c0_64, %c0_65] : memref<8x2x32xf32, #tpu.memory_space<vmem>>, vector<1x2x32xf32>
    %146 = vector.shape_cast %145 : vector<1x2x32xf32> to vector<2x32xf32>
    %147 = vector.shape_cast %142 : vector<2x32xf32> to vector<1x2x32xf32>
    tpu.vector_store %arg14[%144, %c0_64, %c0_65], %147 {strides = array<i32>} : memref<8x2x32xf32, #tpu.memory_space<vmem>>, vector<1x2x32xf32>,
    %148 = vector.extract_strided_slice %8 {offsets = [14, 0], sizes = [2, 32], strides = [1, 1]} : vector<16x32xf32> to vector<2x32xf32>
    %c7_i32_66 = arith.constant 7 : i32
    %149 = arith.addi %9, %c7_i32_66 : i32
    %150 = arith.index_cast %149 : i32 to index
    %c0_67 = arith.constant 0 : index
    %c0_68 = arith.constant 0 : index
    %151 = vector.load %arg15[%150, %c0_67, %c0_68] : memref<8x2x32xf32, #tpu.memory_space<vmem>>, vector<1x2x32xf32>
    %152 = vector.shape_cast %151 : vector<1x2x32xf32> to vector<2x32xf32>
    %153 = vector.shape_cast %148 : vector<2x32xf32> to vector<1x2x32xf32>
    tpu.vector_store %arg15[%150, %c0_67, %c0_68], %153 {strides = array<i32>} : memref<8x2x32xf32, #tpu.memory_space<vmem>>, vector<1x2x32xf32>,
    %c0_i32_69 = arith.constant 0 : i32
    %154 = arith.cmpi eq, %arg0, %c0_i32_69 : i32
    %155 = arith.extui %154 : i1 to i32
    %c0_i32_70 = arith.constant 0 : i32
    %156 = arith.cmpi ne, %155, %c0_i32_70 : i32
    scf.if %156 {
      %c0_71 = arith.constant 0 : index
      %c0_72 = arith.constant 0 : index
      %157 = vector.load %arg4[%c0_71, %c0_72] : memref<32x32xf32, #tpu.memory_space<vmem>>, vector<32x32xf32>
      %c0_73 = arith.constant 0 : index
      %c0_74 = arith.constant 0 : index
      %158 = vector.load %arg5[%c0_73, %c0_74] : memref<32x32xf32, #tpu.memory_space<vmem>>, vector<32x32xf32>
      %c0_75 = arith.constant 0 : index
      %c0_76 = arith.constant 0 : index
      %159 = vector.load %arg6[%c0_75, %c0_76] : memref<32x32xf32, #tpu.memory_space<vmem>>, vector<32x32xf32>
      %c0_77 = arith.constant 0 : index
      %c0_78 = arith.constant 0 : index
      %160 = vector.load %arg7[%c0_77, %c0_78] : memref<1x32xf32, #tpu.memory_space<vmem>>, vector<1x32xf32>
      %161 = vector.shape_cast %160 : vector<1x32xf32> to vector<1x32xf32>
      %162 = vector.broadcast %161 : vector<1x32xf32> to vector<2x32xf32>
      %c0_79 = arith.constant 0 : index
      %c0_80 = arith.constant 0 : index
      %163 = vector.load %arg8[%c0_79, %c0_80] : memref<1x32xf32, #tpu.memory_space<vmem>>, vector<1x32xf32>
      %164 = vector.shape_cast %163 : vector<1x32xf32> to vector<1x32xf32>
      %165 = vector.broadcast %164 : vector<1x32xf32> to vector<2x32xf32>
      %c0_81 = arith.constant 0 : index
      %c0_82 = arith.constant 0 : index
      %166 = vector.load %arg9[%c0_81, %c0_82] : memref<1x32xf32, #tpu.memory_space<vmem>>, vector<1x32xf32>
      %167 = vector.shape_cast %166 : vector<1x32xf32> to vector<1x32xf32>
      %168 = vector.broadcast %167 : vector<1x32xf32> to vector<2x32xf32>
      %c0_83 = arith.constant 0 : index
      %c0_84 = arith.constant 0 : index
      %169 = vector.load %arg11[%c0_83, %c0_84] : memref<1x4xf32, #tpu.memory_space<vmem>>, vector<1x4xf32>
      %cst_85 = arith.constant 0.000000e+00 : f32
      %170 = vector.broadcast %cst_85 : f32 to vector<2x32xf32>
      %cst_86 = arith.constant 0.000000e+00 : f32
      %171 = vector.broadcast %cst_86 : f32 to vector<2x4xf32>
      %c0_i32_87 = arith.constant 0 : i32
      %cst_88 = arith.constant dense<0.000000e+00> : vector<2x32xf32>
      %172 = tpu.matmul %170, %157, %cst_88 {dimension_numbers = #tpu.dot_dimension_numbers<[1], [0], [0], [1], [0, 0, 1, 1], [], []>} : vector<2x32xf32>, vector<32x32xf32>, vector<2x32xf32> -> vector<2x32xf32>
      %173 = arith.addf %172, %162 : vector<2x32xf32>
      %cst_89 = arith.constant dense<0.000000e+00> : vector<2x32xf32>
      %174 = tpu.matmul %170, %158, %cst_89 {dimension_numbers = #tpu.dot_dimension_numbers<[1], [0], [0], [1], [0, 0, 1, 1], [], []>} : vector<2x32xf32>, vector<32x32xf32>, vector<2x32xf32> -> vector<2x32xf32>
      %175 = arith.addf %174, %165 : vector<2x32xf32>
      %cst_90 = arith.constant dense<0.000000e+00> : vector<2x32xf32>
      %176 = tpu.matmul %170, %159, %cst_90 {dimension_numbers = #tpu.dot_dimension_numbers<[1], [0], [0], [1], [0, 0, 1, 1], [], []>} : vector<2x32xf32>, vector<32x32xf32>, vector<2x32xf32> -> vector<2x32xf32>
      %177 = arith.addf %176, %168 : vector<2x32xf32>
      %178 = arith.index_cast %c0_i32_87 : i32 to index
      %c0_91 = arith.constant 0 : index
      %c0_92 = arith.constant 0 : index
      %179 = vector.load %arg13[%178, %c0_91, %c0_92] : memref<8x2x32xf32, #tpu.memory_space<vmem>>, vector<1x2x32xf32>
      %180 = vector.shape_cast %179 : vector<1x2x32xf32> to vector<2x32xf32>
      %181 = arith.addf %180, %173 : vector<2x32xf32>
      %182 = arith.negf %181 : vector<2x32xf32>
      %183 = math.exp %182 : vector<2x32xf32>
      %cst_93 = arith.constant 1.000000e+00 : f32
      %184 = vector.broadcast %cst_93 : f32 to vector<2x32xf32>
      %185 = arith.addf %184, %183 : vector<2x32xf32>
      %186 = arith.divf %184, %185 : vector<2x32xf32>
      %187 = arith.index_cast %c0_i32_87 : i32 to index
      %c0_94 = arith.constant 0 : index
      %c0_95 = arith.constant 0 : index
      %188 = vector.load %arg14[%187, %c0_94, %c0_95] : memref<8x2x32xf32, #tpu.memory_space<vmem>>, vector<1x2x32xf32>
      %189 = vector.shape_cast %188 : vector<1x2x32xf32> to vector<2x32xf32>
      %190 = arith.addf %189, %175 : vector<2x32xf32>
      %191 = arith.negf %190 : vector<2x32xf32>
      %192 = math.exp %191 : vector<2x32xf32>
      %cst_96 = arith.constant 1.000000e+00 : f32
      %193 = vector.broadcast %cst_96 : f32 to vector<2x32xf32>
      %194 = arith.addf %193, %192 : vector<2x32xf32>
      %195 = arith.divf %193, %194 : vector<2x32xf32>
      %196 = arith.index_cast %c0_i32_87 : i32 to index
      %c0_97 = arith.constant 0 : index
      %c0_98 = arith.constant 0 : index
      %197 = vector.load %arg15[%196, %c0_97, %c0_98] : memref<8x2x32xf32, #tpu.memory_space<vmem>>, vector<1x2x32xf32>
      %198 = vector.shape_cast %197 : vector<1x2x32xf32> to vector<2x32xf32>
      %199 = arith.mulf %186, %177 : vector<2x32xf32>
      %200 = arith.addf %198, %199 : vector<2x32xf32>
      %201 = math.tanh %200 : vector<2x32xf32>
      %cst_99 = arith.constant 1.000000e+00 : f32
      %202 = vector.broadcast %cst_99 : f32 to vector<2x32xf32>
      %203 = arith.subf %202, %195 : vector<2x32xf32>
      %204 = arith.mulf %203, %201 : vector<2x32xf32>
      %205 = arith.mulf %195, %170 : vector<2x32xf32>
      %206 = arith.addf %204, %205 : vector<2x32xf32>
      %207 = arith.index_cast %c0_i32_87 : i32 to index
      %c0_100 = arith.constant 0 : index
      %c0_101 = arith.constant 0 : index
      %208 = vector.load %arg10[%207, %c0_100, %c0_101] : memref<8x32x4xf32, #tpu.memory_space<vmem>>, vector<1x32x4xf32>
      %209 = vector.shape_cast %208 : vector<1x32x4xf32> to vector<32x4xf32>
      %cst_102 = arith.constant dense<0.000000e+00> : vector<2x4xf32>
      %210 = tpu.matmul %206, %209, %cst_102 {dimension_numbers = #tpu.dot_dimension_numbers<[1], [0], [0], [1], [0, 0, 1, 1], [], []>} : vector<2x32xf32>, vector<32x4xf32>, vector<2x4xf32> -> vector<2x4xf32>
      %211 = arith.addf %171, %210 : vector<2x4xf32>
      %c1_i32_103 = arith.constant 1 : i32
      %cst_104 = arith.constant dense<0.000000e+00> : vector<2x32xf32>
      %212 = tpu.matmul %206, %157, %cst_104 {dimension_numbers = #tpu.dot_dimension_numbers<[1], [0], [0], [1], [0, 0, 1, 1], [], []>} : vector<2x32xf32>, vector<32x32xf32>, vector<2x32xf32> -> vector<2x32xf32>
      %213 = arith.addf %212, %162 : vector<2x32xf32>
      %cst_105 = arith.constant dense<0.000000e+00> : vector<2x32xf32>
      %214 = tpu.matmul %206, %158, %cst_105 {dimension_numbers = #tpu.dot_dimension_numbers<[1], [0], [0], [1], [0, 0, 1, 1], [], []>} : vector<2x32xf32>, vector<32x32xf32>, vector<2x32xf32> -> vector<2x32xf32>
      %215 = arith.addf %214, %165 : vector<2x32xf32>
      %cst_106 = arith.constant dense<0.000000e+00> : vector<2x32xf32>
      %216 = tpu.matmul %206, %159, %cst_106 {dimension_numbers = #tpu.dot_dimension_numbers<[1], [0], [0], [1], [0, 0, 1, 1], [], []>} : vector<2x32xf32>, vector<32x32xf32>, vector<2x32xf32> -> vector<2x32xf32>
      %217 = arith.addf %216, %168 : vector<2x32xf32>
      %218 = arith.index_cast %c1_i32_103 : i32 to index
      %c0_107 = arith.constant 0 : index
      %c0_108 = arith.constant 0 : index
      %219 = vector.load %arg13[%218, %c0_107, %c0_108] : memref<8x2x32xf32, #tpu.memory_space<vmem>>, vector<1x2x32xf32>
      %220 = vector.shape_cast %219 : vector<1x2x32xf32> to vector<2x32xf32>
      %221 = arith.addf %220, %213 : vector<2x32xf32>
      %222 = arith.negf %221 : vector<2x32xf32>
      %223 = math.exp %222 : vector<2x32xf32>
      %cst_109 = arith.constant 1.000000e+00 : f32
      %224 = vector.broadcast %cst_109 : f32 to vector<2x32xf32>
      %225 = arith.addf %224, %223 : vector<2x32xf32>
      %226 = arith.divf %224, %225 : vector<2x32xf32>
      %227 = arith.index_cast %c1_i32_103 : i32 to index
      %c0_110 = arith.constant 0 : index
      %c0_111 = arith.constant 0 : index
      %228 = vector.load %arg14[%227, %c0_110, %c0_111] : memref<8x2x32xf32, #tpu.memory_space<vmem>>, vector<1x2x32xf32>
      %229 = vector.shape_cast %228 : vector<1x2x32xf32> to vector<2x32xf32>
      %230 = arith.addf %229, %215 : vector<2x32xf32>
      %231 = arith.negf %230 : vector<2x32xf32>
      %232 = math.exp %231 : vector<2x32xf32>
      %cst_112 = arith.constant 1.000000e+00 : f32
      %233 = vector.broadcast %cst_112 : f32 to vector<2x32xf32>
      %234 = arith.addf %233, %232 : vector<2x32xf32>
      %235 = arith.divf %233, %234 : vector<2x32xf32>
      %236 = arith.index_cast %c1_i32_103 : i32 to index
      %c0_113 = arith.constant 0 : index
      %c0_114 = arith.constant 0 : index
      %237 = vector.load %arg15[%236, %c0_113, %c0_114] : memref<8x2x32xf32, #tpu.memory_space<vmem>>, vector<1x2x32xf32>
      %238 = vector.shape_cast %237 : vector<1x2x32xf32> to vector<2x32xf32>
      %239 = arith.mulf %226, %217 : vector<2x32xf32>
      %240 = arith.addf %238, %239 : vector<2x32xf32>
      %241 = math.tanh %240 : vector<2x32xf32>
      %cst_115 = arith.constant 1.000000e+00 : f32
      %242 = vector.broadcast %cst_115 : f32 to vector<2x32xf32>
      %243 = arith.subf %242, %235 : vector<2x32xf32>
      %244 = arith.mulf %243, %241 : vector<2x32xf32>
      %245 = arith.mulf %235, %206 : vector<2x32xf32>
      %246 = arith.addf %244, %245 : vector<2x32xf32>
      %247 = arith.index_cast %c1_i32_103 : i32 to index
      %c0_116 = arith.constant 0 : index
      %c0_117 = arith.constant 0 : index
      %248 = vector.load %arg10[%247, %c0_116, %c0_117] : memref<8x32x4xf32, #tpu.memory_space<vmem>>, vector<1x32x4xf32>
      %249 = vector.shape_cast %248 : vector<1x32x4xf32> to vector<32x4xf32>
      %cst_118 = arith.constant dense<0.000000e+00> : vector<2x4xf32>
      %250 = tpu.matmul %246, %249, %cst_118 {dimension_numbers = #tpu.dot_dimension_numbers<[1], [0], [0], [1], [0, 0, 1, 1], [], []>} : vector<2x32xf32>, vector<32x4xf32>, vector<2x4xf32> -> vector<2x4xf32>
      %251 = arith.addf %211, %250 : vector<2x4xf32>
      %c2_i32_119 = arith.constant 2 : i32
      %cst_120 = arith.constant dense<0.000000e+00> : vector<2x32xf32>
      %252 = tpu.matmul %246, %157, %cst_120 {dimension_numbers = #tpu.dot_dimension_numbers<[1], [0], [0], [1], [0, 0, 1, 1], [], []>} : vector<2x32xf32>, vector<32x32xf32>, vector<2x32xf32> -> vector<2x32xf32>
      %253 = arith.addf %252, %162 : vector<2x32xf32>
      %cst_121 = arith.constant dense<0.000000e+00> : vector<2x32xf32>
      %254 = tpu.matmul %246, %158, %cst_121 {dimension_numbers = #tpu.dot_dimension_numbers<[1], [0], [0], [1], [0, 0, 1, 1], [], []>} : vector<2x32xf32>, vector<32x32xf32>, vector<2x32xf32> -> vector<2x32xf32>
      %255 = arith.addf %254, %165 : vector<2x32xf32>
      %cst_122 = arith.constant dense<0.000000e+00> : vector<2x32xf32>
      %256 = tpu.matmul %246, %159, %cst_122 {dimension_numbers = #tpu.dot_dimension_numbers<[1], [0], [0], [1], [0, 0, 1, 1], [], []>} : vector<2x32xf32>, vector<32x32xf32>, vector<2x32xf32> -> vector<2x32xf32>
      %257 = arith.addf %256, %168 : vector<2x32xf32>
      %258 = arith.index_cast %c2_i32_119 : i32 to index
      %c0_123 = arith.constant 0 : index
      %c0_124 = arith.constant 0 : index
      %259 = vector.load %arg13[%258, %c0_123, %c0_124] : memref<8x2x32xf32, #tpu.memory_space<vmem>>, vector<1x2x32xf32>
      %260 = vector.shape_cast %259 : vector<1x2x32xf32> to vector<2x32xf32>
      %261 = arith.addf %260, %253 : vector<2x32xf32>
      %262 = arith.negf %261 : vector<2x32xf32>
      %263 = math.exp %262 : vector<2x32xf32>
      %cst_125 = arith.constant 1.000000e+00 : f32
      %264 = vector.broadcast %cst_125 : f32 to vector<2x32xf32>
      %265 = arith.addf %264, %263 : vector<2x32xf32>
      %266 = arith.divf %264, %265 : vector<2x32xf32>
      %267 = arith.index_cast %c2_i32_119 : i32 to index
      %c0_126 = arith.constant 0 : index
      %c0_127 = arith.constant 0 : index
      %268 = vector.load %arg14[%267, %c0_126, %c0_127] : memref<8x2x32xf32, #tpu.memory_space<vmem>>, vector<1x2x32xf32>
      %269 = vector.shape_cast %268 : vector<1x2x32xf32> to vector<2x32xf32>
      %270 = arith.addf %269, %255 : vector<2x32xf32>
      %271 = arith.negf %270 : vector<2x32xf32>
      %272 = math.exp %271 : vector<2x32xf32>
      %cst_128 = arith.constant 1.000000e+00 : f32
      %273 = vector.broadcast %cst_128 : f32 to vector<2x32xf32>
      %274 = arith.addf %273, %272 : vector<2x32xf32>
      %275 = arith.divf %273, %274 : vector<2x32xf32>
      %276 = arith.index_cast %c2_i32_119 : i32 to index
      %c0_129 = arith.constant 0 : index
      %c0_130 = arith.constant 0 : index
      %277 = vector.load %arg15[%276, %c0_129, %c0_130] : memref<8x2x32xf32, #tpu.memory_space<vmem>>, vector<1x2x32xf32>
      %278 = vector.shape_cast %277 : vector<1x2x32xf32> to vector<2x32xf32>
      %279 = arith.mulf %266, %257 : vector<2x32xf32>
      %280 = arith.addf %278, %279 : vector<2x32xf32>
      %281 = math.tanh %280 : vector<2x32xf32>
      %cst_131 = arith.constant 1.000000e+00 : f32
      %282 = vector.broadcast %cst_131 : f32 to vector<2x32xf32>
      %283 = arith.subf %282, %275 : vector<2x32xf32>
      %284 = arith.mulf %283, %281 : vector<2x32xf32>
      %285 = arith.mulf %275, %246 : vector<2x32xf32>
      %286 = arith.addf %284, %285 : vector<2x32xf32>
      %287 = arith.index_cast %c2_i32_119 : i32 to index
      %c0_132 = arith.constant 0 : index
      %c0_133 = arith.constant 0 : index
      %288 = vector.load %arg10[%287, %c0_132, %c0_133] : memref<8x32x4xf32, #tpu.memory_space<vmem>>, vector<1x32x4xf32>
      %289 = vector.shape_cast %288 : vector<1x32x4xf32> to vector<32x4xf32>
      %cst_134 = arith.constant dense<0.000000e+00> : vector<2x4xf32>
      %290 = tpu.matmul %286, %289, %cst_134 {dimension_numbers = #tpu.dot_dimension_numbers<[1], [0], [0], [1], [0, 0, 1, 1], [], []>} : vector<2x32xf32>, vector<32x4xf32>, vector<2x4xf32> -> vector<2x4xf32>
      %291 = arith.addf %251, %290 : vector<2x4xf32>
      %c3_i32_135 = arith.constant 3 : i32
      %cst_136 = arith.constant dense<0.000000e+00> : vector<2x32xf32>
      %292 = tpu.matmul %286, %157, %cst_136 {dimension_numbers = #tpu.dot_dimension_numbers<[1], [0], [0], [1], [0, 0, 1, 1], [], []>} : vector<2x32xf32>, vector<32x32xf32>, vector<2x32xf32> -> vector<2x32xf32>
      %293 = arith.addf %292, %162 : vector<2x32xf32>
      %cst_137 = arith.constant dense<0.000000e+00> : vector<2x32xf32>
      %294 = tpu.matmul %286, %158, %cst_137 {dimension_numbers = #tpu.dot_dimension_numbers<[1], [0], [0], [1], [0, 0, 1, 1], [], []>} : vector<2x32xf32>, vector<32x32xf32>, vector<2x32xf32> -> vector<2x32xf32>
      %295 = arith.addf %294, %165 : vector<2x32xf32>
      %cst_138 = arith.constant dense<0.000000e+00> : vector<2x32xf32>
      %296 = tpu.matmul %286, %159, %cst_138 {dimension_numbers = #tpu.dot_dimension_numbers<[1], [0], [0], [1], [0, 0, 1, 1], [], []>} : vector<2x32xf32>, vector<32x32xf32>, vector<2x32xf32> -> vector<2x32xf32>
      %297 = arith.addf %296, %168 : vector<2x32xf32>
      %298 = arith.index_cast %c3_i32_135 : i32 to index
      %c0_139 = arith.constant 0 : index
      %c0_140 = arith.constant 0 : index
      %299 = vector.load %arg13[%298, %c0_139, %c0_140] : memref<8x2x32xf32, #tpu.memory_space<vmem>>, vector<1x2x32xf32>
      %300 = vector.shape_cast %299 : vector<1x2x32xf32> to vector<2x32xf32>
      %301 = arith.addf %300, %293 : vector<2x32xf32>
      %302 = arith.negf %301 : vector<2x32xf32>
      %303 = math.exp %302 : vector<2x32xf32>
      %cst_141 = arith.constant 1.000000e+00 : f32
      %304 = vector.broadcast %cst_141 : f32 to vector<2x32xf32>
      %305 = arith.addf %304, %303 : vector<2x32xf32>
      %306 = arith.divf %304, %305 : vector<2x32xf32>
      %307 = arith.index_cast %c3_i32_135 : i32 to index
      %c0_142 = arith.constant 0 : index
      %c0_143 = arith.constant 0 : index
      %308 = vector.load %arg14[%307, %c0_142, %c0_143] : memref<8x2x32xf32, #tpu.memory_space<vmem>>, vector<1x2x32xf32>
      %309 = vector.shape_cast %308 : vector<1x2x32xf32> to vector<2x32xf32>
      %310 = arith.addf %309, %295 : vector<2x32xf32>
      %311 = arith.negf %310 : vector<2x32xf32>
      %312 = math.exp %311 : vector<2x32xf32>
      %cst_144 = arith.constant 1.000000e+00 : f32
      %313 = vector.broadcast %cst_144 : f32 to vector<2x32xf32>
      %314 = arith.addf %313, %312 : vector<2x32xf32>
      %315 = arith.divf %313, %314 : vector<2x32xf32>
      %316 = arith.index_cast %c3_i32_135 : i32 to index
      %c0_145 = arith.constant 0 : index
      %c0_146 = arith.constant 0 : index
      %317 = vector.load %arg15[%316, %c0_145, %c0_146] : memref<8x2x32xf32, #tpu.memory_space<vmem>>, vector<1x2x32xf32>
      %318 = vector.shape_cast %317 : vector<1x2x32xf32> to vector<2x32xf32>
      %319 = arith.mulf %306, %297 : vector<2x32xf32>
      %320 = arith.addf %318, %319 : vector<2x32xf32>
      %321 = math.tanh %320 : vector<2x32xf32>
      %cst_147 = arith.constant 1.000000e+00 : f32
      %322 = vector.broadcast %cst_147 : f32 to vector<2x32xf32>
      %323 = arith.subf %322, %315 : vector<2x32xf32>
      %324 = arith.mulf %323, %321 : vector<2x32xf32>
      %325 = arith.mulf %315, %286 : vector<2x32xf32>
      %326 = arith.addf %324, %325 : vector<2x32xf32>
      %327 = arith.index_cast %c3_i32_135 : i32 to index
      %c0_148 = arith.constant 0 : index
      %c0_149 = arith.constant 0 : index
      %328 = vector.load %arg10[%327, %c0_148, %c0_149] : memref<8x32x4xf32, #tpu.memory_space<vmem>>, vector<1x32x4xf32>
      %329 = vector.shape_cast %328 : vector<1x32x4xf32> to vector<32x4xf32>
      %cst_150 = arith.constant dense<0.000000e+00> : vector<2x4xf32>
      %330 = tpu.matmul %326, %329, %cst_150 {dimension_numbers = #tpu.dot_dimension_numbers<[1], [0], [0], [1], [0, 0, 1, 1], [], []>} : vector<2x32xf32>, vector<32x4xf32>, vector<2x4xf32> -> vector<2x4xf32>
      %331 = arith.addf %291, %330 : vector<2x4xf32>
      %c4_i32_151 = arith.constant 4 : i32
      %cst_152 = arith.constant dense<0.000000e+00> : vector<2x32xf32>
      %332 = tpu.matmul %326, %157, %cst_152 {dimension_numbers = #tpu.dot_dimension_numbers<[1], [0], [0], [1], [0, 0, 1, 1], [], []>} : vector<2x32xf32>, vector<32x32xf32>, vector<2x32xf32> -> vector<2x32xf32>
      %333 = arith.addf %332, %162 : vector<2x32xf32>
      %cst_153 = arith.constant dense<0.000000e+00> : vector<2x32xf32>
      %334 = tpu.matmul %326, %158, %cst_153 {dimension_numbers = #tpu.dot_dimension_numbers<[1], [0], [0], [1], [0, 0, 1, 1], [], []>} : vector<2x32xf32>, vector<32x32xf32>, vector<2x32xf32> -> vector<2x32xf32>
      %335 = arith.addf %334, %165 : vector<2x32xf32>
      %cst_154 = arith.constant dense<0.000000e+00> : vector<2x32xf32>
      %336 = tpu.matmul %326, %159, %cst_154 {dimension_numbers = #tpu.dot_dimension_numbers<[1], [0], [0], [1], [0, 0, 1, 1], [], []>} : vector<2x32xf32>, vector<32x32xf32>, vector<2x32xf32> -> vector<2x32xf32>
      %337 = arith.addf %336, %168 : vector<2x32xf32>
      %338 = arith.index_cast %c4_i32_151 : i32 to index
      %c0_155 = arith.constant 0 : index
      %c0_156 = arith.constant 0 : index
      %339 = vector.load %arg13[%338, %c0_155, %c0_156] : memref<8x2x32xf32, #tpu.memory_space<vmem>>, vector<1x2x32xf32>
      %340 = vector.shape_cast %339 : vector<1x2x32xf32> to vector<2x32xf32>
      %341 = arith.addf %340, %333 : vector<2x32xf32>
      %342 = arith.negf %341 : vector<2x32xf32>
      %343 = math.exp %342 : vector<2x32xf32>
      %cst_157 = arith.constant 1.000000e+00 : f32
      %344 = vector.broadcast %cst_157 : f32 to vector<2x32xf32>
      %345 = arith.addf %344, %343 : vector<2x32xf32>
      %346 = arith.divf %344, %345 : vector<2x32xf32>
      %347 = arith.index_cast %c4_i32_151 : i32 to index
      %c0_158 = arith.constant 0 : index
      %c0_159 = arith.constant 0 : index
      %348 = vector.load %arg14[%347, %c0_158, %c0_159] : memref<8x2x32xf32, #tpu.memory_space<vmem>>, vector<1x2x32xf32>
      %349 = vector.shape_cast %348 : vector<1x2x32xf32> to vector<2x32xf32>
      %350 = arith.addf %349, %335 : vector<2x32xf32>
      %351 = arith.negf %350 : vector<2x32xf32>
      %352 = math.exp %351 : vector<2x32xf32>
      %cst_160 = arith.constant 1.000000e+00 : f32
      %353 = vector.broadcast %cst_160 : f32 to vector<2x32xf32>
      %354 = arith.addf %353, %352 : vector<2x32xf32>
      %355 = arith.divf %353, %354 : vector<2x32xf32>
      %356 = arith.index_cast %c4_i32_151 : i32 to index
      %c0_161 = arith.constant 0 : index
      %c0_162 = arith.constant 0 : index
      %357 = vector.load %arg15[%356, %c0_161, %c0_162] : memref<8x2x32xf32, #tpu.memory_space<vmem>>, vector<1x2x32xf32>
      %358 = vector.shape_cast %357 : vector<1x2x32xf32> to vector<2x32xf32>
      %359 = arith.mulf %346, %337 : vector<2x32xf32>
      %360 = arith.addf %358, %359 : vector<2x32xf32>
      %361 = math.tanh %360 : vector<2x32xf32>
      %cst_163 = arith.constant 1.000000e+00 : f32
      %362 = vector.broadcast %cst_163 : f32 to vector<2x32xf32>
      %363 = arith.subf %362, %355 : vector<2x32xf32>
      %364 = arith.mulf %363, %361 : vector<2x32xf32>
      %365 = arith.mulf %355, %326 : vector<2x32xf32>
      %366 = arith.addf %364, %365 : vector<2x32xf32>
      %367 = arith.index_cast %c4_i32_151 : i32 to index
      %c0_164 = arith.constant 0 : index
      %c0_165 = arith.constant 0 : index
      %368 = vector.load %arg10[%367, %c0_164, %c0_165] : memref<8x32x4xf32, #tpu.memory_space<vmem>>, vector<1x32x4xf32>
      %369 = vector.shape_cast %368 : vector<1x32x4xf32> to vector<32x4xf32>
      %cst_166 = arith.constant dense<0.000000e+00> : vector<2x4xf32>
      %370 = tpu.matmul %366, %369, %cst_166 {dimension_numbers = #tpu.dot_dimension_numbers<[1], [0], [0], [1], [0, 0, 1, 1], [], []>} : vector<2x32xf32>, vector<32x4xf32>, vector<2x4xf32> -> vector<2x4xf32>
      %371 = arith.addf %331, %370 : vector<2x4xf32>
      %c5_i32_167 = arith.constant 5 : i32
      %cst_168 = arith.constant dense<0.000000e+00> : vector<2x32xf32>
      %372 = tpu.matmul %366, %157, %cst_168 {dimension_numbers = #tpu.dot_dimension_numbers<[1], [0], [0], [1], [0, 0, 1, 1], [], []>} : vector<2x32xf32>, vector<32x32xf32>, vector<2x32xf32> -> vector<2x32xf32>
      %373 = arith.addf %372, %162 : vector<2x32xf32>
      %cst_169 = arith.constant dense<0.000000e+00> : vector<2x32xf32>
      %374 = tpu.matmul %366, %158, %cst_169 {dimension_numbers = #tpu.dot_dimension_numbers<[1], [0], [0], [1], [0, 0, 1, 1], [], []>} : vector<2x32xf32>, vector<32x32xf32>, vector<2x32xf32> -> vector<2x32xf32>
      %375 = arith.addf %374, %165 : vector<2x32xf32>
      %cst_170 = arith.constant dense<0.000000e+00> : vector<2x32xf32>
      %376 = tpu.matmul %366, %159, %cst_170 {dimension_numbers = #tpu.dot_dimension_numbers<[1], [0], [0], [1], [0, 0, 1, 1], [], []>} : vector<2x32xf32>, vector<32x32xf32>, vector<2x32xf32> -> vector<2x32xf32>
      %377 = arith.addf %376, %168 : vector<2x32xf32>
      %378 = arith.index_cast %c5_i32_167 : i32 to index
      %c0_171 = arith.constant 0 : index
      %c0_172 = arith.constant 0 : index
      %379 = vector.load %arg13[%378, %c0_171, %c0_172] : memref<8x2x32xf32, #tpu.memory_space<vmem>>, vector<1x2x32xf32>
      %380 = vector.shape_cast %379 : vector<1x2x32xf32> to vector<2x32xf32>
      %381 = arith.addf %380, %373 : vector<2x32xf32>
      %382 = arith.negf %381 : vector<2x32xf32>
      %383 = math.exp %382 : vector<2x32xf32>
      %cst_173 = arith.constant 1.000000e+00 : f32
      %384 = vector.broadcast %cst_173 : f32 to vector<2x32xf32>
      %385 = arith.addf %384, %383 : vector<2x32xf32>
      %386 = arith.divf %384, %385 : vector<2x32xf32>
      %387 = arith.index_cast %c5_i32_167 : i32 to index
      %c0_174 = arith.constant 0 : index
      %c0_175 = arith.constant 0 : index
      %388 = vector.load %arg14[%387, %c0_174, %c0_175] : memref<8x2x32xf32, #tpu.memory_space<vmem>>, vector<1x2x32xf32>
      %389 = vector.shape_cast %388 : vector<1x2x32xf32> to vector<2x32xf32>
      %390 = arith.addf %389, %375 : vector<2x32xf32>
      %391 = arith.negf %390 : vector<2x32xf32>
      %392 = math.exp %391 : vector<2x32xf32>
      %cst_176 = arith.constant 1.000000e+00 : f32
      %393 = vector.broadcast %cst_176 : f32 to vector<2x32xf32>
      %394 = arith.addf %393, %392 : vector<2x32xf32>
      %395 = arith.divf %393, %394 : vector<2x32xf32>
      %396 = arith.index_cast %c5_i32_167 : i32 to index
      %c0_177 = arith.constant 0 : index
      %c0_178 = arith.constant 0 : index
      %397 = vector.load %arg15[%396, %c0_177, %c0_178] : memref<8x2x32xf32, #tpu.memory_space<vmem>>, vector<1x2x32xf32>
      %398 = vector.shape_cast %397 : vector<1x2x32xf32> to vector<2x32xf32>
      %399 = arith.mulf %386, %377 : vector<2x32xf32>
      %400 = arith.addf %398, %399 : vector<2x32xf32>
      %401 = math.tanh %400 : vector<2x32xf32>
      %cst_179 = arith.constant 1.000000e+00 : f32
      %402 = vector.broadcast %cst_179 : f32 to vector<2x32xf32>
      %403 = arith.subf %402, %395 : vector<2x32xf32>
      %404 = arith.mulf %403, %401 : vector<2x32xf32>
      %405 = arith.mulf %395, %366 : vector<2x32xf32>
      %406 = arith.addf %404, %405 : vector<2x32xf32>
      %407 = arith.index_cast %c5_i32_167 : i32 to index
      %c0_180 = arith.constant 0 : index
      %c0_181 = arith.constant 0 : index
      %408 = vector.load %arg10[%407, %c0_180, %c0_181] : memref<8x32x4xf32, #tpu.memory_space<vmem>>, vector<1x32x4xf32>
      %409 = vector.shape_cast %408 : vector<1x32x4xf32> to vector<32x4xf32>
      %cst_182 = arith.constant dense<0.000000e+00> : vector<2x4xf32>
      %410 = tpu.matmul %406, %409, %cst_182 {dimension_numbers = #tpu.dot_dimension_numbers<[1], [0], [0], [1], [0, 0, 1, 1], [], []>} : vector<2x32xf32>, vector<32x4xf32>, vector<2x4xf32> -> vector<2x4xf32>
      %411 = arith.addf %371, %410 : vector<2x4xf32>
      %c6_i32_183 = arith.constant 6 : i32
      %cst_184 = arith.constant dense<0.000000e+00> : vector<2x32xf32>
      %412 = tpu.matmul %406, %157, %cst_184 {dimension_numbers = #tpu.dot_dimension_numbers<[1], [0], [0], [1], [0, 0, 1, 1], [], []>} : vector<2x32xf32>, vector<32x32xf32>, vector<2x32xf32> -> vector<2x32xf32>
      %413 = arith.addf %412, %162 : vector<2x32xf32>
      %cst_185 = arith.constant dense<0.000000e+00> : vector<2x32xf32>
      %414 = tpu.matmul %406, %158, %cst_185 {dimension_numbers = #tpu.dot_dimension_numbers<[1], [0], [0], [1], [0, 0, 1, 1], [], []>} : vector<2x32xf32>, vector<32x32xf32>, vector<2x32xf32> -> vector<2x32xf32>
      %415 = arith.addf %414, %165 : vector<2x32xf32>
      %cst_186 = arith.constant dense<0.000000e+00> : vector<2x32xf32>
      %416 = tpu.matmul %406, %159, %cst_186 {dimension_numbers = #tpu.dot_dimension_numbers<[1], [0], [0], [1], [0, 0, 1, 1], [], []>} : vector<2x32xf32>, vector<32x32xf32>, vector<2x32xf32> -> vector<2x32xf32>
      %417 = arith.addf %416, %168 : vector<2x32xf32>
      %418 = arith.index_cast %c6_i32_183 : i32 to index
      %c0_187 = arith.constant 0 : index
      %c0_188 = arith.constant 0 : index
      %419 = vector.load %arg13[%418, %c0_187, %c0_188] : memref<8x2x32xf32, #tpu.memory_space<vmem>>, vector<1x2x32xf32>
      %420 = vector.shape_cast %419 : vector<1x2x32xf32> to vector<2x32xf32>
      %421 = arith.addf %420, %413 : vector<2x32xf32>
      %422 = arith.negf %421 : vector<2x32xf32>
      %423 = math.exp %422 : vector<2x32xf32>
      %cst_189 = arith.constant 1.000000e+00 : f32
      %424 = vector.broadcast %cst_189 : f32 to vector<2x32xf32>
      %425 = arith.addf %424, %423 : vector<2x32xf32>
      %426 = arith.divf %424, %425 : vector<2x32xf32>
      %427 = arith.index_cast %c6_i32_183 : i32 to index
      %c0_190 = arith.constant 0 : index
      %c0_191 = arith.constant 0 : index
      %428 = vector.load %arg14[%427, %c0_190, %c0_191] : memref<8x2x32xf32, #tpu.memory_space<vmem>>, vector<1x2x32xf32>
      %429 = vector.shape_cast %428 : vector<1x2x32xf32> to vector<2x32xf32>
      %430 = arith.addf %429, %415 : vector<2x32xf32>
      %431 = arith.negf %430 : vector<2x32xf32>
      %432 = math.exp %431 : vector<2x32xf32>
      %cst_192 = arith.constant 1.000000e+00 : f32
      %433 = vector.broadcast %cst_192 : f32 to vector<2x32xf32>
      %434 = arith.addf %433, %432 : vector<2x32xf32>
      %435 = arith.divf %433, %434 : vector<2x32xf32>
      %436 = arith.index_cast %c6_i32_183 : i32 to index
      %c0_193 = arith.constant 0 : index
      %c0_194 = arith.constant 0 : index
      %437 = vector.load %arg15[%436, %c0_193, %c0_194] : memref<8x2x32xf32, #tpu.memory_space<vmem>>, vector<1x2x32xf32>
      %438 = vector.shape_cast %437 : vector<1x2x32xf32> to vector<2x32xf32>
      %439 = arith.mulf %426, %417 : vector<2x32xf32>
      %440 = arith.addf %438, %439 : vector<2x32xf32>
      %441 = math.tanh %440 : vector<2x32xf32>
      %cst_195 = arith.constant 1.000000e+00 : f32
      %442 = vector.broadcast %cst_195 : f32 to vector<2x32xf32>
      %443 = arith.subf %442, %435 : vector<2x32xf32>
      %444 = arith.mulf %443, %441 : vector<2x32xf32>
      %445 = arith.mulf %435, %406 : vector<2x32xf32>
      %446 = arith.addf %444, %445 : vector<2x32xf32>
      %447 = arith.index_cast %c6_i32_183 : i32 to index
      %c0_196 = arith.constant 0 : index
      %c0_197 = arith.constant 0 : index
      %448 = vector.load %arg10[%447, %c0_196, %c0_197] : memref<8x32x4xf32, #tpu.memory_space<vmem>>, vector<1x32x4xf32>
      %449 = vector.shape_cast %448 : vector<1x32x4xf32> to vector<32x4xf32>
      %cst_198 = arith.constant dense<0.000000e+00> : vector<2x4xf32>
      %450 = tpu.matmul %446, %449, %cst_198 {dimension_numbers = #tpu.dot_dimension_numbers<[1], [0], [0], [1], [0, 0, 1, 1], [], []>} : vector<2x32xf32>, vector<32x4xf32>, vector<2x4xf32> -> vector<2x4xf32>
      %451 = arith.addf %411, %450 : vector<2x4xf32>
      %c7_i32_199 = arith.constant 7 : i32
      %cst_200 = arith.constant dense<0.000000e+00> : vector<2x32xf32>
      %452 = tpu.matmul %446, %157, %cst_200 {dimension_numbers = #tpu.dot_dimension_numbers<[1], [0], [0], [1], [0, 0, 1, 1], [], []>} : vector<2x32xf32>, vector<32x32xf32>, vector<2x32xf32> -> vector<2x32xf32>
      %453 = arith.addf %452, %162 : vector<2x32xf32>
      %cst_201 = arith.constant dense<0.000000e+00> : vector<2x32xf32>
      %454 = tpu.matmul %446, %158, %cst_201 {dimension_numbers = #tpu.dot_dimension_numbers<[1], [0], [0], [1], [0, 0, 1, 1], [], []>} : vector<2x32xf32>, vector<32x32xf32>, vector<2x32xf32> -> vector<2x32xf32>
      %455 = arith.addf %454, %165 : vector<2x32xf32>
      %cst_202 = arith.constant dense<0.000000e+00> : vector<2x32xf32>
      %456 = tpu.matmul %446, %159, %cst_202 {dimension_numbers = #tpu.dot_dimension_numbers<[1], [0], [0], [1], [0, 0, 1, 1], [], []>} : vector<2x32xf32>, vector<32x32xf32>, vector<2x32xf32> -> vector<2x32xf32>
      %457 = arith.addf %456, %168 : vector<2x32xf32>
      %458 = arith.index_cast %c7_i32_199 : i32 to index
      %c0_203 = arith.constant 0 : index
      %c0_204 = arith.constant 0 : index
      %459 = vector.load %arg13[%458, %c0_203, %c0_204] : memref<8x2x32xf32, #tpu.memory_space<vmem>>, vector<1x2x32xf32>
      %460 = vector.shape_cast %459 : vector<1x2x32xf32> to vector<2x32xf32>
      %461 = arith.addf %460, %453 : vector<2x32xf32>
      %462 = arith.negf %461 : vector<2x32xf32>
      %463 = math.exp %462 : vector<2x32xf32>
      %cst_205 = arith.constant 1.000000e+00 : f32
      %464 = vector.broadcast %cst_205 : f32 to vector<2x32xf32>
      %465 = arith.addf %464, %463 : vector<2x32xf32>
      %466 = arith.divf %464, %465 : vector<2x32xf32>
      %467 = arith.index_cast %c7_i32_199 : i32 to index
      %c0_206 = arith.constant 0 : index
      %c0_207 = arith.constant 0 : index
      %468 = vector.load %arg14[%467, %c0_206, %c0_207] : memref<8x2x32xf32, #tpu.memory_space<vmem>>, vector<1x2x32xf32>
      %469 = vector.shape_cast %468 : vector<1x2x32xf32> to vector<2x32xf32>
      %470 = arith.addf %469, %455 : vector<2x32xf32>
      %471 = arith.negf %470 : vector<2x32xf32>
      %472 = math.exp %471 : vector<2x32xf32>
      %cst_208 = arith.constant 1.000000e+00 : f32
      %473 = vector.broadcast %cst_208 : f32 to vector<2x32xf32>
      %474 = arith.addf %473, %472 : vector<2x32xf32>
      %475 = arith.divf %473, %474 : vector<2x32xf32>
      %476 = arith.index_cast %c7_i32_199 : i32 to index
      %c0_209 = arith.constant 0 : index
      %c0_210 = arith.constant 0 : index
      %477 = vector.load %arg15[%476, %c0_209, %c0_210] : memref<8x2x32xf32, #tpu.memory_space<vmem>>, vector<1x2x32xf32>
      %478 = vector.shape_cast %477 : vector<1x2x32xf32> to vector<2x32xf32>
      %479 = arith.mulf %466, %457 : vector<2x32xf32>
      %480 = arith.addf %478, %479 : vector<2x32xf32>
      %481 = math.tanh %480 : vector<2x32xf32>
      %cst_211 = arith.constant 1.000000e+00 : f32
      %482 = vector.broadcast %cst_211 : f32 to vector<2x32xf32>
      %483 = arith.subf %482, %475 : vector<2x32xf32>
      %484 = arith.mulf %483, %481 : vector<2x32xf32>
      %485 = arith.mulf %475, %446 : vector<2x32xf32>
      %486 = arith.addf %484, %485 : vector<2x32xf32>
      %487 = arith.index_cast %c7_i32_199 : i32 to index
      %c0_212 = arith.constant 0 : index
      %c0_213 = arith.constant 0 : index
      %488 = vector.load %arg10[%487, %c0_212, %c0_213] : memref<8x32x4xf32, #tpu.memory_space<vmem>>, vector<1x32x4xf32>
      %489 = vector.shape_cast %488 : vector<1x32x4xf32> to vector<32x4xf32>
      %cst_214 = arith.constant dense<0.000000e+00> : vector<2x4xf32>
      %490 = tpu.matmul %486, %489, %cst_214 {dimension_numbers = #tpu.dot_dimension_numbers<[1], [0], [0], [1], [0, 0, 1, 1], [], []>} : vector<2x32xf32>, vector<32x4xf32>, vector<2x4xf32> -> vector<2x4xf32>
      %491 = arith.addf %451, %490 : vector<2x4xf32>
      %c8_i32_215 = arith.constant 8 : i32
      %492 = vector.broadcast %169 : vector<1x4xf32> to vector<2x4xf32>
      %493 = arith.addf %491, %492 : vector<2x4xf32>
      %494 = arith.negf %493 : vector<2x4xf32>
      %495 = math.exp %494 : vector<2x4xf32>
      %cst_216 = arith.constant 1.000000e+00 : f32
      %496 = vector.broadcast %cst_216 : f32 to vector<2x4xf32>
      %497 = arith.addf %496, %495 : vector<2x4xf32>
      %498 = arith.divf %496, %497 : vector<2x4xf32>
      %c0_217 = arith.constant 0 : index
      %c0_218 = arith.constant 0 : index
      %499 = vector.load %arg12[%c0_217, %c0_218] : memref<2x4xf32, #tpu.memory_space<vmem>>, vector<2x4xf32>
      tpu.vector_store %arg12[%c0_217, %c0_218], %498 {strides = array<i32>} : memref<2x4xf32, #tpu.memory_space<vmem>>, vector<2x4xf32>,
    } else {
    }
    return
  }
  func.func @transform_0(%arg0: i32) -> (i32, i32) {
    %c0_i32 = arith.constant 0 : i32
    %c0_i32_0 = arith.constant 0 : i32
    return %arg0, %c0_i32 : i32, i32
  }
  func.func @transform_1(%arg0: i32) -> (i32, i32) {
    %c0_i32 = arith.constant 0 : i32
    %c0_i32_0 = arith.constant 0 : i32
    %c0_i32_1 = arith.constant 0 : i32
    return %c0_i32, %c0_i32_0 : i32, i32
  }
  func.func @transform_2(%arg0: i32) -> (i32, i32) {
    %c0_i32 = arith.constant 0 : i32
    %c0_i32_0 = arith.constant 0 : i32
    %c0_i32_1 = arith.constant 0 : i32
    return %c0_i32, %c0_i32_0 : i32, i32
  }
  func.func @transform_3(%arg0: i32) -> (i32, i32) {
    %c0_i32 = arith.constant 0 : i32
    %c0_i32_0 = arith.constant 0 : i32
    %c0_i32_1 = arith.constant 0 : i32
    return %c0_i32, %c0_i32_0 : i32, i32
  }
  func.func @transform_4(%arg0: i32) -> (i32, i32) {
    %c0_i32 = arith.constant 0 : i32
    %c0_i32_0 = arith.constant 0 : i32
    %c0_i32_1 = arith.constant 0 : i32
    return %c0_i32, %c0_i32_0 : i32, i32
  }
  func.func @transform_5(%arg0: i32) -> (i32, i32) {
    %c0_i32 = arith.constant 0 : i32
    %c0_i32_0 = arith.constant 0 : i32
    %c0_i32_1 = arith.constant 0 : i32
    return %c0_i32, %c0_i32_0 : i32, i32
  }
  func.func @transform_6(%arg0: i32) -> (i32, i32) {
    %c0_i32 = arith.constant 0 : i32
    %c0_i32_0 = arith.constant 0 : i32
    %c0_i32_1 = arith.constant 0 : i32
    return %c0_i32, %c0_i32_0 : i32, i32
  }
  func.func @transform_7(%arg0: i32) -> (i32, i32) {
    %c0_i32 = arith.constant 0 : i32
    %c0_i32_0 = arith.constant 0 : i32
    %c0_i32_1 = arith.constant 0 : i32
    return %c0_i32, %c0_i32_0 : i32, i32
  }
  func.func @transform_8(%arg0: i32) -> (i32, i32) {
    %c0_i32 = arith.constant 0 : i32
    %c0_i32_0 = arith.constant 0 : i32
    %c0_i32_1 = arith.constant 0 : i32
    return %c0_i32, %c0_i32_0 : i32, i32
  }
  func.func @transform_9(%arg0: i32) -> (i32, i32, i32) {
    %c0_i32 = arith.constant 0 : i32
    %c0_i32_0 = arith.constant 0 : i32
    %c0_i32_1 = arith.constant 0 : i32
    %c0_i32_2 = arith.constant 0 : i32
    return %c0_i32, %c0_i32_0, %c0_i32_1 : i32, i32, i32
  }
  func.func @transform_10(%arg0: i32) -> (i32, i32) {
    %c0_i32 = arith.constant 0 : i32
    %c0_i32_0 = arith.constant 0 : i32
    %c0_i32_1 = arith.constant 0 : i32
    return %c0_i32, %c0_i32_0 : i32, i32
  }
  func.func @transform_11(%arg0: i32) -> (i32, i32) {
    %c0_i32 = arith.constant 0 : i32
    %c0_i32_0 = arith.constant 0 : i32
    %c0_i32_1 = arith.constant 0 : i32
    return %c0_i32, %c0_i32_0 : i32, i32
  }
}

</mosaic_0001>

<llo_original>
// kernel: tpu_custom_call.1
$region0: #{tpu_custom_call.1}
  #allocation0 [shape = 'u32[]', space=smem, size = 0x4, offset = 0x4, fixed_abs, tag = 'smem constant byte address 0x4 - core index']
  #allocation1 [shape = 'u32[144,128]{1,0:T(1,128)}', space=vmem, size = 0x12000, scoped, tag = 'internal scratch']
  #allocation2 [shape = 'f32[8,2,32]{2,1,0:T(2,128)}', space=vmem, size = 0x2000, scoped, tag = 'scratch operand']
  #allocation3 [shape = 'f32[8,2,32]{2,1,0:T(2,128)}', space=vmem, size = 0x2000, scoped, tag = 'scratch operand']
  #allocation4 [shape = 'f32[8,2,32]{2,1,0:T(2,128)}', space=vmem, size = 0x2000, scoped, tag = 'scratch operand']
  %s0 = inlined_call_operand.vmem [shape: bf16[16,768], index: 0, kind: input, shape index: {}]
  %s1 = inlined_call_operand.vmem [shape: bf16[768,96], index: 1, kind: input, shape index: {}]
  %s2 = inlined_call_operand.vmem [shape: f32[1,96], index: 2, kind: input, shape index: {}]
  %s3 = inlined_call_operand.vmem [shape: f32[32,32], index: 3, kind: input, shape index: {}]
  %s4 = inlined_call_operand.vmem [shape: f32[32,32], index: 4, kind: input, shape index: {}]
  %s5 = inlined_call_operand.vmem [shape: f32[32,32], index: 5, kind: input, shape index: {}]
  %s6 = inlined_call_operand.vmem [shape: f32[1,32], index: 6, kind: input, shape index: {}]
  %s7 = inlined_call_operand.vmem [shape: f32[1,32], index: 7, kind: input, shape index: {}]
  %s8 = inlined_call_operand.vmem [shape: f32[1,32], index: 8, kind: input, shape index: {}]
  %s9 = inlined_call_operand.vmem [shape: f32[8,32,4], index: 9, kind: input, shape index: {}]
  %s10 = inlined_call_operand.vmem [shape: f32[1,4], index: 10, kind: input, shape index: {}]
  %s11 = inlined_call_operand.hbm [shape: f32[2,4], index: 11, kind: output, shape index: {}]
  %s12 = sld [smem:[#allocation0]]
  $region58: #{tpu_custom_call.1} parent=0
    _
  %s14 = ssub.s32 1, %s12
  %s15 = scalar_select 0, %s14, %s12
  $region1: #{tpu_custom_call.1} parent=0
    #allocation5 [shape = 'u8[1024]{0}', space=vmem, size = 0x400, scoped, tag = 'output window, operand 0, single buffered']
    #allocation6 [shape = 's32[1]{0}', space=sflag, size = 0x4, scoped, tag = 'scoped memory for tpu_custom_call.1']
    %16 = vsyncpa [#allocation6], 0
    // Predicated region
    $region2: #{tpu_custom_call.1} parent=1 // pred_check
      _
    $region3: #{tpu_custom_call.1} parent=1 // pred_check_branch
      %18 = sbr.rel (0) target = $region5
    $region4: #{tpu_custom_call.1} parent=1 // pred_region
      _
    $region5: #{tpu_custom_call.1} parent=1 // pred_fallthru
      _
    // Predicated region
    $region6: #{tpu_custom_call.1} parent=1 // pred_check
      _
    $region7: #{tpu_custom_call.1} parent=1 // pred_check_branch
      %20 = sbr.rel (0) target = $region9
    $region8: #{tpu_custom_call.1} parent=1 // pred_region
      _
    $region9: #{tpu_custom_call.1} parent=1 // pred_fallthru
      _
    // Predicated region
    $region10: #{tpu_custom_call.1} parent=1 // pred_check
      _
    $region11: #{tpu_custom_call.1} parent=1 // pred_check_branch
      %22 = sbr.rel (0) target = $region13
    $region12: #{tpu_custom_call.1} parent=1 // pred_region
      _
    $region13: #{tpu_custom_call.1} parent=1 // pred_fallthru
      _
    // Predicated region
    $region14: #{tpu_custom_call.1} parent=1 // pred_check
      _
    $region15: #{tpu_custom_call.1} parent=1 // pred_check_branch
      %24 = sbr.rel (0) target = $region17
    $region16: #{tpu_custom_call.1} parent=1 // pred_region
      _
    $region17: #{tpu_custom_call.1} parent=1 // pred_fallthru
      _
    // Predicated region
    $region18: #{tpu_custom_call.1} parent=1 // pred_check
      _
    $region19: #{tpu_custom_call.1} parent=1 // pred_check_branch
      %26 = sbr.rel (0) target = $region21
    $region20: #{tpu_custom_call.1} parent=1 // pred_region
      _
    $region21: #{tpu_custom_call.1} parent=1 // pred_fallthru
      _
    // Predicated region
    $region22: #{tpu_custom_call.1} parent=1 // pred_check
      _
    $region23: #{tpu_custom_call.1} parent=1 // pred_check_branch
      %28 = sbr.rel (0) target = $region25
    $region24: #{tpu_custom_call.1} parent=1 // pred_region
      _
    $region25: #{tpu_custom_call.1} parent=1 // pred_fallthru
      _
    // Predicated region
    $region26: #{tpu_custom_call.1} parent=1 // pred_check
      _
    $region27: #{tpu_custom_call.1} parent=1 // pred_check_branch
      %30 = sbr.rel (0) target = $region29
    $region28: #{tpu_custom_call.1} parent=1 // pred_region
      _
    $region29: #{tpu_custom_call.1} parent=1 // pred_fallthru
      _
    // Predicated region
    $region30: #{tpu_custom_call.1} parent=1 // pred_check
      _
    $region31: #{tpu_custom_call.1} parent=1 // pred_check_branch
      %32 = sbr.rel (0) target = $region33
    $region32: #{tpu_custom_call.1} parent=1 // pred_region
      _
    $region33: #{tpu_custom_call.1} parent=1 // pred_fallthru
      _
    // Predicated region
    $region34: #{tpu_custom_call.1} parent=1 // pred_check
      _
    $region35: #{tpu_custom_call.1} parent=1 // pred_check_branch
      %34 = sbr.rel (0) target = $region37
    $region36: #{tpu_custom_call.1} parent=1 // pred_region
      _
    $region37: #{tpu_custom_call.1} parent=1 // pred_fallthru
      _
    // Predicated region
    $region38: #{tpu_custom_call.1} parent=1 // pred_check
      _
    $region39: #{tpu_custom_call.1} parent=1 // pred_check_branch
      %36 = sbr.rel (0) target = $region41
    $region40: #{tpu_custom_call.1} parent=1 // pred_region
      _
    $region41: #{tpu_custom_call.1} parent=1 // pred_fallthru
      _
    // Predicated region
    $region42: #{tpu_custom_call.1} parent=1 // pred_check
      _
    $region43: #{tpu_custom_call.1} parent=1 // pred_check_branch
      %38 = sbr.rel (0) target = $region45
    $region44: #{tpu_custom_call.1} parent=1 // pred_region
      _
    $region45: #{tpu_custom_call.1} parent=1 // pred_fallthru
      _
    %v40 = vld [vmem:[%s0] sm:$0xff]
    %v41 = vld [vmem:[%s0 + $0x8] sm:$0xff]
    %v42 = vld [vmem:[%s0 + $0x10] sm:$0xff]
    %v43 = vld [vmem:[%s0 + $0x18] sm:$0xff]
    %v44 = vld [vmem:[%s0 + $0x20] sm:$0xff]
    %v45 = vld [vmem:[%s0 + $0x28] sm:$0xff]
    %v46 = vld [vmem:[%s1] sm:$0xf]
    %v47 = vld [vmem:[%s1 + $0x4] sm:$0xf]
    %v48 = vld [vmem:[%s1 + $0x8] sm:$0xf]
    %v49 = vld [vmem:[%s1 + $0xc] sm:$0xf]
    %v50 = vld [vmem:[%s1 + $0x10] sm:$0xf]
    %v51 = vld [vmem:[%s1 + $0x14] sm:$0xf]
    %v52 = vld [vmem:[%s1 + $0x18] sm:$0xf]
    %v53 = vld [vmem:[%s1 + $0x1c] sm:$0xf]
    %v54 = vld [vmem:[%s1 + $0x20] sm:$0xf]
    %v55 = vld [vmem:[%s1 + $0x24] sm:$0xf]
    %v56 = vld [vmem:[%s1 + $0x28] sm:$0xf]
    %v57 = vld [vmem:[%s1 + $0x2c] sm:$0xf]
    %v58 = vld [vmem:[%s1 + $0x30] sm:$0xf]
    %v59 = vld [vmem:[%s1 + $0x34] sm:$0xf]
    %v60 = vld [vmem:[%s1 + $0x38] sm:$0xf]
    %v61 = vld [vmem:[%s1 + $0x3c] sm:$0xf]
    %v62 = vld [vmem:[%s1 + $0x40] sm:$0xf]
    %v63 = vld [vmem:[%s1 + $0x44] sm:$0xf]
    %v64 = vld [vmem:[%s1 + $0x48] sm:$0xf]
    %v65 = vld [vmem:[%s1 + $0x4c] sm:$0xf]
    %v66 = vld [vmem:[%s1 + $0x50] sm:$0xf]
    %v67 = vld [vmem:[%s1 + $0x54] sm:$0xf]
    %v68 = vld [vmem:[%s1 + $0x58] sm:$0xf]
    %v69 = vld [vmem:[%s1 + $0x5c] sm:$0xf]
    %v70 = vld [vmem:[%s1 + $0x60] sm:$0xf]
    %v71 = vld [vmem:[%s1 + $0x64] sm:$0xf]
    %v72 = vld [vmem:[%s1 + $0x68] sm:$0xf]
    %v73 = vld [vmem:[%s1 + $0x6c] sm:$0xf]
    %v74 = vld [vmem:[%s1 + $0x70] sm:$0xf]
    %v75 = vld [vmem:[%s1 + $0x74] sm:$0xf]
    %v76 = vld [vmem:[%s1 + $0x78] sm:$0xf]
    %v77 = vld [vmem:[%s1 + $0x7c] sm:$0xf]
    %v78 = vld [vmem:[%s1 + $0x80] sm:$0xf]
    %v79 = vld [vmem:[%s1 + $0x84] sm:$0xf]
    %v80 = vld [vmem:[%s1 + $0x88] sm:$0xf]
    %v81 = vld [vmem:[%s1 + $0x8c] sm:$0xf]
    %v82 = vld [vmem:[%s1 + $0x90] sm:$0xf]
    %v83 = vld [vmem:[%s1 + $0x94] sm:$0xf]
    %v84 = vld [vmem:[%s1 + $0x98] sm:$0xf]
    %v85 = vld [vmem:[%s1 + $0x9c] sm:$0xf]
    %v86 = vld [vmem:[%s1 + $0xa0] sm:$0xf]
    %v87 = vld [vmem:[%s1 + $0xa4] sm:$0xf]
    %v88 = vld [vmem:[%s1 + $0xa8] sm:$0xf]
    %v89 = vld [vmem:[%s1 + $0xac] sm:$0xf]
    %v90 = vld [vmem:[%s1 + $0xb0] sm:$0xf]
    %v91 = vld [vmem:[%s1 + $0xb4] sm:$0xf]
    %v92 = vld [vmem:[%s1 + $0xb8] sm:$0xf]
    %v93 = vld [vmem:[%s1 + $0xbc] sm:$0xf]
    %v94 = vld [vmem:[%s1 + $0xc0] sm:$0xf]
    %v95 = vld [vmem:[%s1 + $0xc4] sm:$0xf]
    %v96 = vld [vmem:[%s1 + $0xc8] sm:$0xf]
    %v97 = vld [vmem:[%s1 + $0xcc] sm:$0xf]
    %v98 = vld [vmem:[%s1 + $0xd0] sm:$0xf]
    %v99 = vld [vmem:[%s1 + $0xd4] sm:$0xf]
    %v100 = vld [vmem:[%s1 + $0xd8] sm:$0xf]
    %v101 = vld [vmem:[%s1 + $0xdc] sm:$0xf]
    %v102 = vld [vmem:[%s1 + $0xe0] sm:$0xf]
    %v103 = vld [vmem:[%s1 + $0xe4] sm:$0xf]
    %v104 = vld [vmem:[%s1 + $0xe8] sm:$0xf]
    %v105 = vld [vmem:[%s1 + $0xec] sm:$0xf]
    %v106 = vld [vmem:[%s1 + $0xf0] sm:$0xf]
    %v107 = vld [vmem:[%s1 + $0xf4] sm:$0xf]
    %v108 = vld [vmem:[%s1 + $0xf8] sm:$0xf]
    %v109 = vld [vmem:[%s1 + $0xfc] sm:$0xf]
    %v110 = vld [vmem:[%s1 + $0x100] sm:$0xf]
    %v111 = vld [vmem:[%s1 + $0x104] sm:$0xf]
    %v112 = vld [vmem:[%s1 + $0x108] sm:$0xf]
    %v113 = vld [vmem:[%s1 + $0x10c] sm:$0xf]
    %v114 = vld [vmem:[%s1 + $0x110] sm:$0xf]
    %v115 = vld [vmem:[%s1 + $0x114] sm:$0xf]
    %v116 = vld [vmem:[%s1 + $0x118] sm:$0xf]
    %v117 = vld [vmem:[%s1 + $0x11c] sm:$0xf]
    %v118 = vld [vmem:[%s1 + $0x120] sm:$0xf]
    %v119 = vld [vmem:[%s1 + $0x124] sm:$0xf]
    %v120 = vld [vmem:[%s1 + $0x128] sm:$0xf]
    %v121 = vld [vmem:[%s1 + $0x12c] sm:$0xf]
    %v122 = vld [vmem:[%s1 + $0x130] sm:$0xf]
    %v123 = vld [vmem:[%s1 + $0x134] sm:$0xf]
    %v124 = vld [vmem:[%s1 + $0x138] sm:$0xf]
    %v125 = vld [vmem:[%s1 + $0x13c] sm:$0xf]
    %v126 = vld [vmem:[%s1 + $0x140] sm:$0xf]
    %v127 = vld [vmem:[%s1 + $0x144] sm:$0xf]
    %v128 = vld [vmem:[%s1 + $0x148] sm:$0xf]
    %v129 = vld [vmem:[%s1 + $0x14c] sm:$0xf]
    %v130 = vld [vmem:[%s1 + $0x150] sm:$0xf]
    %v131 = vld [vmem:[%s1 + $0x154] sm:$0xf]
    %v132 = vld [vmem:[%s1 + $0x158] sm:$0xf]
    %v133 = vld [vmem:[%s1 + $0x15c] sm:$0xf]
    %v134 = vld [vmem:[%s1 + $0x160] sm:$0xf]
    %v135 = vld [vmem:[%s1 + $0x164] sm:$0xf]
    %v136 = vld [vmem:[%s1 + $0x168] sm:$0xf]
    %v137 = vld [vmem:[%s1 + $0x16c] sm:$0xf]
    %v138 = vld [vmem:[%s1 + $0x170] sm:$0xf]
    %v139 = vld [vmem:[%s1 + $0x174] sm:$0xf]
    %v140 = vld [vmem:[%s1 + $0x178] sm:$0xf]
    %v141 = vld [vmem:[%s1 + $0x17c] sm:$0xf]
    %v142 = vld [vmem:[%s2] sm:$0x1]
    %v144 = vlaneseq
    %v145 = vshrl.u32 %v144, 7
    %v146 = vsub.s32 0, %v145
    %v147 = vrot.slane %v142, %v146
    %v155 = vunpack.c.l.b16 %v40
    %v156 = vunpack.c.h.b16 %v40
    %v157 = vunpack.c.l.b16 %v41
    %v158 = vunpack.c.h.b16 %v41
    %v159 = vunpack.c.l.b16 %v42
    %v160 = vunpack.c.h.b16 %v42
    %v161 = vunpack.c.l.b16 %v43
    %v162 = vunpack.c.h.b16 %v43
    %v163 = vunpack.c.l.b16 %v44
    %v164 = vunpack.c.h.b16 %v44
    %v165 = vunpack.c.l.b16 %v45
    %v166 = vunpack.c.h.b16 %v45
    %v167 = vpack.c.b16 %v161, %v155
    %v168 = vpack.c.b16 %v162, %v156
    %v169 = vpack.c.b16 %v163, %v157
    %v170 = vpack.c.b16 %v164, %v158
    %v171 = vpack.c.b16 %v165, %v159
    %v172 = vpack.c.b16 %v166, %v160
    %v275 = vunpack.c.l.b16 %v46
    %v276 = vunpack.c.l.b16 %v47
    %v277 = vunpack.c.l.b16 %v48
    %v278 = vunpack.c.l.b16 %v49
    %v279 = vunpack.c.l.b16 %v50
    %v280 = vunpack.c.l.b16 %v51
    %v281 = vunpack.c.l.b16 %v52
    %v282 = vunpack.c.l.b16 %v53
    %v283 = vunpack.c.l.b16 %v54
    %v284 = vunpack.c.l.b16 %v55
    %v285 = vunpack.c.l.b16 %v56
    %v286 = vunpack.c.l.b16 %v57
    %v287 = vunpack.c.l.b16 %v58
    %v288 = vunpack.c.l.b16 %v59
    %v289 = vunpack.c.l.b16 %v60
    %v290 = vunpack.c.l.b16 %v61
    %v291 = vunpack.c.l.b16 %v62
    %v292 = vunpack.c.l.b16 %v63
    %v293 = vunpack.c.l.b16 %v64
    %v294 = vunpack.c.l.b16 %v65
    %v295 = vunpack.c.l.b16 %v66
    %v296 = vunpack.c.l.b16 %v67
    %v297 = vunpack.c.l.b16 %v68
    %v298 = vunpack.c.l.b16 %v69
    %v299 = vunpack.c.l.b16 %v70
    %v300 = vunpack.c.l.b16 %v71
    %v301 = vunpack.c.l.b16 %v72
    %v302 = vunpack.c.l.b16 %v73
    %v303 = vunpack.c.l.b16 %v74
    %v304 = vunpack.c.l.b16 %v75
    %v305 = vunpack.c.l.b16 %v76
    %v306 = vunpack.c.l.b16 %v77
    %v307 = vunpack.c.l.b16 %v78
    %v308 = vunpack.c.l.b16 %v79
    %v309 = vunpack.c.l.b16 %v80
    %v310 = vunpack.c.l.b16 %v81
    %v311 = vunpack.c.l.b16 %v82
    %v312 = vunpack.c.l.b16 %v83
    %v313 = vunpack.c.l.b16 %v84
    %v314 = vunpack.c.l.b16 %v85
    %v315 = vunpack.c.l.b16 %v86
    %v316 = vunpack.c.l.b16 %v87
    %v317 = vunpack.c.l.b16 %v88
    %v318 = vunpack.c.l.b16 %v89
    %v319 = vunpack.c.l.b16 %v90
    %v320 = vunpack.c.l.b16 %v91
    %v321 = vunpack.c.l.b16 %v92
    %v322 = vunpack.c.l.b16 %v93
    %v323 = vunpack.c.l.b16 %v94
    %v324 = vunpack.c.l.b16 %v95
    %v325 = vunpack.c.l.b16 %v96
    %v326 = vunpack.c.l.b16 %v97
    %v327 = vunpack.c.l.b16 %v98
    %v328 = vunpack.c.l.b16 %v99
    %v329 = vunpack.c.l.b16 %v100
    %v330 = vunpack.c.l.b16 %v101
    %v331 = vunpack.c.l.b16 %v102
    %v332 = vunpack.c.l.b16 %v103
    %v333 = vunpack.c.l.b16 %v104
    %v334 = vunpack.c.l.b16 %v105
    %v335 = vunpack.c.l.b16 %v106
    %v336 = vunpack.c.l.b16 %v107
    %v337 = vunpack.c.l.b16 %v108
    %v338 = vunpack.c.l.b16 %v109
    %v339 = vunpack.c.l.b16 %v110
    %v340 = vunpack.c.l.b16 %v111
    %v341 = vunpack.c.l.b16 %v112
    %v342 = vunpack.c.l.b16 %v113
    %v343 = vunpack.c.l.b16 %v114
    %v344 = vunpack.c.l.b16 %v115
    %v345 = vunpack.c.l.b16 %v116
    %v346 = vunpack.c.l.b16 %v117
    %v347 = vunpack.c.l.b16 %v118
    %v348 = vunpack.c.l.b16 %v119
    %v349 = vunpack.c.l.b16 %v120
    %v350 = vunpack.c.l.b16 %v121
    %v351 = vunpack.c.l.b16 %v122
    %v352 = vunpack.c.l.b16 %v123
    %v353 = vunpack.c.l.b16 %v124
    %v354 = vunpack.c.l.b16 %v125
    %v355 = vunpack.c.l.b16 %v126
    %v356 = vunpack.c.l.b16 %v127
    %v357 = vunpack.c.l.b16 %v128
    %v358 = vunpack.c.l.b16 %v129
    %v359 = vunpack.c.l.b16 %v130
    %v360 = vunpack.c.l.b16 %v131
    %v361 = vunpack.c.l.b16 %v132
    %v362 = vunpack.c.l.b16 %v133
    %v363 = vunpack.c.l.b16 %v134
    %v364 = vunpack.c.l.b16 %v135
    %v365 = vunpack.c.l.b16 %v136
    %v366 = vunpack.c.l.b16 %v137
    %v367 = vunpack.c.l.b16 %v138
    %v368 = vunpack.c.l.b16 %v139
    %v369 = vunpack.c.l.b16 %v140
    %v370 = vunpack.c.l.b16 %v141
    %v371 = vpack.c.b16 %v276, %v275
    %v372 = vpack.c.b16 %v278, %v277
    %v373 = vpack.c.b16 %v280, %v279
    %v374 = vpack.c.b16 %v282, %v281
    %v375 = vpack.c.b16 %v284, %v283
    %v376 = vpack.c.b16 %v286, %v285
    %v377 = vpack.c.b16 %v288, %v287
    %v378 = vpack.c.b16 %v290, %v289
    %v379 = vpack.c.b16 %v292, %v291
    %v380 = vpack.c.b16 %v294, %v293
    %v381 = vpack.c.b16 %v296, %v295
    %v382 = vpack.c.b16 %v298, %v297
    %v383 = vpack.c.b16 %v300, %v299
    %v384 = vpack.c.b16 %v302, %v301
    %v385 = vpack.c.b16 %v304, %v303
    %v386 = vpack.c.b16 %v306, %v305
    %v387 = vpack.c.b16 %v308, %v307
    %v388 = vpack.c.b16 %v310, %v309
    %v389 = vpack.c.b16 %v312, %v311
    %v390 = vpack.c.b16 %v314, %v313
    %v391 = vpack.c.b16 %v316, %v315
    %v392 = vpack.c.b16 %v318, %v317
    %v393 = vpack.c.b16 %v320, %v319
    %v394 = vpack.c.b16 %v322, %v321
    %v395 = vpack.c.b16 %v324, %v323
    %v396 = vpack.c.b16 %v326, %v325
    %v397 = vpack.c.b16 %v328, %v327
    %v398 = vpack.c.b16 %v330, %v329
    %v399 = vpack.c.b16 %v332, %v331
    %v400 = vpack.c.b16 %v334, %v333
    %v401 = vpack.c.b16 %v336, %v335
    %v402 = vpack.c.b16 %v338, %v337
    %v403 = vpack.c.b16 %v340, %v339
    %v404 = vpack.c.b16 %v342, %v341
    %v405 = vpack.c.b16 %v344, %v343
    %v406 = vpack.c.b16 %v346, %v345
    %v407 = vpack.c.b16 %v348, %v347
    %v408 = vpack.c.b16 %v350, %v349
    %v409 = vpack.c.b16 %v352, %v351
    %v410 = vpack.c.b16 %v354, %v353
    %v411 = vpack.c.b16 %v356, %v355
    %v412 = vpack.c.b16 %v358, %v357
    %v413 = vpack.c.b16 %v360, %v359
    %v414 = vpack.c.b16 %v362, %v361
    %v415 = vpack.c.b16 %v364, %v363
    %v416 = vpack.c.b16 %v366, %v365
    %v417 = vpack.c.b16 %v368, %v367
    %v418 = vpack.c.b16 %v370, %v369
    %467 = vmatprep.subr.bf16.mxu0 0
    %468 = vmatpush1.bf16.msra.mxu0 %v371
    %469 = vmatprep.subr.bf16.mxu0 0
    %470 = vmatpush1.bf16.msra.mxu0 %v372
    %471 = vmatprep.subr.bf16.mxu0 0
    %472 = vmatpush1.bf16.msra.mxu0 %v373
    %473 = vmatprep.subr.bf16.mxu0 0
    %474 = vmatpush1.bf16.msra.mxu0 %v374
    %475 = vmatprep.subr.bf16.mxu0 0
    %476 = vmatpush1.bf16.msra.mxu0 %v375
    %477 = vmatprep.subr.bf16.mxu0 0
    %478 = vmatpush1.bf16.msra.mxu0 %v376
    %479 = vmatprep.subr.bf16.mxu0 0
    %480 = vmatpush1.bf16.msra.mxu0 %v377
    %481 = vmatprep.subr.bf16.mxu0 0
    %482 = vmatpush1.bf16.msra.mxu0 %v378
    %483 = vmatprep.subr.bf16.mxu0 0
    %484 = vmatpush1.bf16.msra.mxu0 %v379
    %485 = vmatprep.subr.bf16.mxu0 0
    %486 = vmatpush1.bf16.msra.mxu0 %v380
    %487 = vmatprep.subr.bf16.mxu0 0
    %488 = vmatpush1.bf16.msra.mxu0 %v381
    %489 = vmatprep.subr.bf16.mxu0 0
    %490 = vmatpush1.bf16.msra.mxu0 %v382
    %491 = vmatprep.subr.bf16.mxu0 0
    %492 = vmatpush1.bf16.msra.mxu0 %v383
    %493 = vmatprep.subr.bf16.mxu0 0
    %494 = vmatpush1.bf16.msra.mxu0 %v384
    %495 = vmatprep.subr.bf16.mxu0 0
    %496 = vmatpush1.bf16.msra.mxu0 %v385
    %497 = vmatprep.subr.bf16.mxu0 0
    %498 = vmatpush1.bf16.msra.mxu0 %v386
    %499 = vmatprep.mubr.bf16.mxu0 %v168
    %500 = vmatmul.mubr.bf16.gmra.mrb[0].mxu0 %v167
    %v501 = vpop.f32.mrb[0].mxu0
    %v502 = vadd.f32 %v147, %v501
    %v503 = vpop.f32.mrb[0].mxu0
    %v504 = vpop.f32.mrb[0].mxu0
    %v505 = vadd.f32 %v147, %v504
    %v506 = vpop.f32.mrb[0].mxu0
    %507 = vdwg.mxu0
    %508 = vmatprep.subr.bf16.mxu0 0
    %509 = vmatpush1.bf16.msra.mxu0 %v387
    %510 = vmatprep.subr.bf16.mxu0 0
    %511 = vmatpush1.bf16.msra.mxu0 %v388
    %512 = vmatprep.subr.bf16.mxu0 0
    %513 = vmatpush1.bf16.msra.mxu0 %v389
    %514 = vmatprep.subr.bf16.mxu0 0
    %515 = vmatpush1.bf16.msra.mxu0 %v390
    %516 = vmatprep.subr.bf16.mxu0 0
    %517 = vmatpush1.bf16.msra.mxu0 %v391
    %518 = vmatprep.subr.bf16.mxu0 0
    %519 = vmatpush1.bf16.msra.mxu0 %v392
    %520 = vmatprep.subr.bf16.mxu0 0
    %521 = vmatpush1.bf16.msra.mxu0 %v393
    %522 = vmatprep.subr.bf16.mxu0 0
    %523 = vmatpush1.bf16.msra.mxu0 %v394
    %524 = vmatprep.subr.bf16.mxu0 0
    %525 = vmatpush1.bf16.msra.mxu0 %v395
    %526 = vmatprep.subr.bf16.mxu0 0
    %527 = vmatpush1.bf16.msra.mxu0 %v396
    %528 = vmatprep.subr.bf16.mxu0 0
    %529 = vmatpush1.bf16.msra.mxu0 %v397
    %530 = vmatprep.subr.bf16.mxu0 0
    %531 = vmatpush1.bf16.msra.mxu0 %v398
    %532 = vmatprep.subr.bf16.mxu0 0
    %533 = vmatpush1.bf16.msra.mxu0 %v399
    %534 = vmatprep.subr.bf16.mxu0 0
    %535 = vmatpush1.bf16.msra.mxu0 %v400
    %536 = vmatprep.subr.bf16.mxu0 0
    %537 = vmatpush1.bf16.msra.mxu0 %v401
    %538 = vmatprep.subr.bf16.mxu0 0
    %539 = vmatpush1.bf16.msra.mxu0 %v402
    %540 = vmatprep.mubr.bf16.mxu0 %v170
    %541 = vmatmul.mubr.bf16.gmra.mrb[0].mxu0 %v169
    %v542 = vpop.f32.mrb[0].mxu0
    %v543 = vadd.f32 %v502, %v542
    %v544 = vpop.f32.mrb[0].mxu0
    %v545 = vpop.f32.mrb[0].mxu0
    %v546 = vadd.f32 %v505, %v545
    %v547 = vpop.f32.mrb[0].mxu0
    %548 = vdwg.mxu0
    %549 = vmatprep.subr.bf16.mxu0 0
    %550 = vmatpush1.bf16.msra.mxu0 %v403
    %551 = vmatprep.subr.bf16.mxu0 0
    %552 = vmatpush1.bf16.msra.mxu0 %v404
    %553 = vmatprep.subr.bf16.mxu0 0
    %554 = vmatpush1.bf16.msra.mxu0 %v405
    %555 = vmatprep.subr.bf16.mxu0 0
    %556 = vmatpush1.bf16.msra.mxu0 %v406
    %557 = vmatprep.subr.bf16.mxu0 0
    %558 = vmatpush1.bf16.msra.mxu0 %v407
    %559 = vmatprep.subr.bf16.mxu0 0
    %560 = vmatpush1.bf16.msra.mxu0 %v408
    %561 = vmatprep.subr.bf16.mxu0 0
    %562 = vmatpush1.bf16.msra.mxu0 %v409
    %563 = vmatprep.subr.bf16.mxu0 0
    %564 = vmatpush1.bf16.msra.mxu0 %v410
    %565 = vmatprep.subr.bf16.mxu0 0
    %566 = vmatpush1.bf16.msra.mxu0 %v411
    %567 = vmatprep.subr.bf16.mxu0 0
    %568 = vmatpush1.bf16.msra.mxu0 %v412
    %569 = vmatprep.subr.bf16.mxu0 0
    %570 = vmatpush1.bf16.msra.mxu0 %v413
    %571 = vmatprep.subr.bf16.mxu0 0
    %572 = vmatpush1.bf16.msra.mxu0 %v414
    %573 = vmatprep.subr.bf16.mxu0 0
    %574 = vmatpush1.bf16.msra.mxu0 %v415
    %575 = vmatprep.subr.bf16.mxu0 0
    %576 = vmatpush1.bf16.msra.mxu0 %v416
    %577 = vmatprep.subr.bf16.mxu0 0
    %578 = vmatpush1.bf16.msra.mxu0 %v417
    %579 = vmatprep.subr.bf16.mxu0 0
    %580 = vmatpush1.bf16.msra.mxu0 %v418
    %581 = vmatprep.mubr.bf16.mxu0 %v172
    %582 = vmatmul.mubr.bf16.gmra.mrb[0].mxu0 %v171
    %v583 = vpop.f32.mrb[0].mxu0
    %v584 = vadd.f32 %v543, %v583
    %v585 = vpop.f32.mrb[0].mxu0
    %v586 = vpop.f32.mrb[0].mxu0
    %v587 = vadd.f32 %v546, %v586
    %v588 = vpop.f32.mrb[0].mxu0
    %589 = vdwg.mxu0
    %s590 = smul.u32 0, 8
    %s591 = smul.u32 %s590, 2
    %s592 = scalar_lea.vmem [#allocation2], %s591
    %vm593 = vcmask 254976
    %594 = vst.msk [vmem:[%s592] sm:$0x3] %vm593, %v584
    %596 = vrot.lane.b32.xlu0 %v584, 96
    %v597 = vpop.permute.xlu0 %596
    %s599 = scalar_lea.vmem [#allocation3], %s591
    %600 = vst.msk [vmem:[%s599] sm:$0x3] %vm593, %v597
    %601 = vrot.lane.b32.xlu0 %v584, 64
    %v602 = vpop.permute.xlu0 %601
    %s604 = scalar_lea.vmem [#allocation4], %s591
    %605 = vst.msk [vmem:[%s604] sm:$0x3] %vm593, %v602
    %s606 = sadd.s32 %s590, 1
    %s607 = smul.u32 %s606, 2
    %s608 = scalar_lea.vmem [#allocation2], %s607
    %vm609 = vcmask 257026
    %610 = vst.msk [vmem:[%s608 - $0x2] sm:$0xc] %vm609, %v584
    %s611 = scalar_lea.vmem [#allocation3], %s607
    %612 = vst.msk [vmem:[%s611 - $0x2] sm:$0xc] %vm609, %v597
    %s613 = scalar_lea.vmem [#allocation4], %s607
    %614 = vst.msk [vmem:[%s613 - $0x2] sm:$0xc] %vm609, %v602
    %s615 = sadd.s32 %s590, 2
    %s616 = smul.u32 %s615, 2
    %s617 = scalar_lea.vmem [#allocation2], %s616
    %vm618 = vcmask 259076
    %619 = vst.msk [vmem:[%s617 - $0x4] sm:$0x30] %vm618, %v584
    %s620 = scalar_lea.vmem [#allocation3], %s616
    %621 = vst.msk [vmem:[%s620 - $0x4] sm:$0x30] %vm618, %v597
    %s622 = scalar_lea.vmem [#allocation4], %s616
    %623 = vst.msk [vmem:[%s622 - $0x4] sm:$0x30] %vm618, %v602
    %s624 = sadd.s32 %s590, 3
    %s625 = smul.u32 %s624, 2
    %s626 = scalar_lea.vmem [#allocation2], %s625
    %vm627 = vcmask 261126
    %628 = vst.msk [vmem:[%s626 - $0x6] sm:$0xc0] %vm627, %v584
    %s629 = scalar_lea.vmem [#allocation3], %s625
    %630 = vst.msk [vmem:[%s629 - $0x6] sm:$0xc0] %vm627, %v597
    %s631 = scalar_lea.vmem [#allocation4], %s625
    %632 = vst.msk [vmem:[%s631 - $0x6] sm:$0xc0] %vm627, %v602
    %s633 = sadd.s32 %s590, 4
    %s634 = smul.u32 %s633, 2
    %s635 = scalar_lea.vmem [#allocation2], %s634
    %636 = vst.msk [vmem:[%s635] sm:$0x3] %vm593, %v587
    %638 = vrot.lane.b32.xlu0 %v587, 96
    %v639 = vpop.permute.xlu0 %638
    %s641 = scalar_lea.vmem [#allocation3], %s634
    %642 = vst.msk [vmem:[%s641] sm:$0x3] %vm593, %v639
    %643 = vrot.lane.b32.xlu0 %v587, 64
    %v644 = vpop.permute.xlu0 %643
    %s646 = scalar_lea.vmem [#allocation4], %s634
    %647 = vst.msk [vmem:[%s646] sm:$0x3] %vm593, %v644
    %s648 = sadd.s32 %s590, 5
    %s649 = smul.u32 %s648, 2
    %s650 = scalar_lea.vmem [#allocation2], %s649
    %651 = vst.msk [vmem:[%s650 - $0x2] sm:$0xc] %vm609, %v587
    %s652 = scalar_lea.vmem [#allocation3], %s649
    %653 = vst.msk [vmem:[%s652 - $0x2] sm:$0xc] %vm609, %v639
    %s654 = scalar_lea.vmem [#allocation4], %s649
    %655 = vst.msk [vmem:[%s654 - $0x2] sm:$0xc] %vm609, %v644
    %s656 = sadd.s32 %s590, 6
    %s657 = smul.u32 %s656, 2
    %s658 = scalar_lea.vmem [#allocation2], %s657
    %659 = vst.msk [vmem:[%s658 - $0x4] sm:$0x30] %vm618, %v587
    %s660 = scalar_lea.vmem [#allocation3], %s657
    %661 = vst.msk [vmem:[%s660 - $0x4] sm:$0x30] %vm618, %v639
    %s662 = scalar_lea.vmem [#allocation4], %s657
    %663 = vst.msk [vmem:[%s662 - $0x4] sm:$0x30] %vm618, %v644
    %s664 = sadd.s32 %s590, 7
    %s665 = smul.u32 %s664, 2
    %s666 = scalar_lea.vmem [#allocation2], %s665
    %667 = vst.msk [vmem:[%s666 - $0x6] sm:$0xc0] %vm627, %v587
    %s668 = scalar_lea.vmem [#allocation3], %s665
    %669 = vst.msk [vmem:[%s668 - $0x6] sm:$0xc0] %vm627, %v639
    %s670 = scalar_lea.vmem [#allocation4], %s665
    %671 = vst.msk [vmem:[%s670 - $0x6] sm:$0xc0] %vm627, %v644
    %p672 = scmp.eq.s32.totalorder 0, 0
    // Predicated region
    $region46: #{tpu_custom_call.1} parent=1 // pred_check
      %p673 = pneg %p672
    $region47: #{tpu_custom_call.1} parent=1 // pred_check_branch
      %675 = sbr.rel (%p673) target = $region49
    $region48: #{tpu_custom_call.1} parent=1 // pred_region
      %v676 = vld [vmem:[%s3] sm:$0xff]
      %v677 = vld [vmem:[%s3 + $0x8] sm:$0xff]
      %v678 = vld [vmem:[%s3 + $0x10] sm:$0xff]
      %v679 = vld [vmem:[%s3 + $0x18] sm:$0xff]
      %v680 = vld [vmem:[%s4] sm:$0xff]
      %v681 = vld [vmem:[%s4 + $0x8] sm:$0xff]
      %v682 = vld [vmem:[%s4 + $0x10] sm:$0xff]
      %v683 = vld [vmem:[%s4 + $0x18] sm:$0xff]
      %v684 = vld [vmem:[%s5] sm:$0xff]
      %v685 = vld [vmem:[%s5 + $0x8] sm:$0xff]
      %v686 = vld [vmem:[%s5 + $0x10] sm:$0xff]
      %v687 = vld [vmem:[%s5 + $0x18] sm:$0xff]
      %v688 = vld [vmem:[%s6] sm:$0x1]
      %v690 = vlaneseq
      %v691 = vshrl.u32 %v690, 7
      %v692 = vsub.s32 0, %v691
      %v693 = vrot.slane %v688, %v692
      %v695 = vld [vmem:[%s7] sm:$0x1]
      %v697 = vlaneseq
      %v698 = vshrl.u32 %v697, 7
      %v699 = vsub.s32 0, %v698
      %v700 = vrot.slane %v695, %v699
      %v702 = vld [vmem:[%s8] sm:$0x1]
      %v704 = vlaneseq
      %v705 = vshrl.u32 %v704, 7
      %v706 = vsub.s32 0, %v705
      %v707 = vrot.slane %v702, %v706
      %v709 = vld [vmem:[%s10] sm:$0x1]
      %vm710 = vcmask 261120
      %v712 = vsel %vm710, 0.0, 0
      %714 = vmatprep.subr.mxu0 0.0
      %715 = vmatpush1.msra.mxu0 %v676
      %716 = vmatprep.subr.mxu0 0.0
      %717 = vmatpush1.msra.mxu0 %v677
      %718 = vmatprep.subr.mxu0 0.0
      %719 = vmatpush1.msra.mxu0 %v678
      %720 = vmatprep.subr.mxu0 0.0
      %721 = vmatpush1.msra.mxu0 %v679
      %722 = vmatprep.subr.mxu0 0.0
      %723 = vmatpush1.msra.mxu0 0.0
      %724 = vmatprep.subr.mxu0 0.0
      %725 = vmatpush1.msra.mxu0 0.0
      %726 = vmatprep.subr.mxu0 0.0
      %727 = vmatpush1.msra.mxu0 0.0
      %728 = vmatprep.subr.mxu0 0.0
      %729 = vmatpush1.msra.mxu0 0.0
      %730 = vmatprep.subr.mxu0 0.0
      %731 = vmatpush1.msra.mxu0 0.0
      %732 = vmatprep.subr.mxu0 0.0
      %733 = vmatpush1.msra.mxu0 0.0
      %734 = vmatprep.subr.mxu0 0.0
      %735 = vmatpush1.msra.mxu0 0.0
      %736 = vmatprep.subr.mxu0 0.0
      %737 = vmatpush1.msra.mxu0 0.0
      %738 = vmatprep.subr.mxu0 0.0
      %739 = vmatpush1.msra.mxu0 0.0
      %740 = vmatprep.subr.mxu0 0.0
      %741 = vmatpush1.msra.mxu0 0.0
      %742 = vmatprep.subr.mxu0 0.0
      %743 = vmatpush1.msra.mxu0 0.0
      %744 = vmatprep.subr.mxu0 0.0
      %745 = vmatpush1.msra.mxu0 0.0
      %746 = vmatprep.subr.mxu0 0.0
      %747 = vmatpush1.msra.mxu0 0.0
      %748 = vmatprep.subr.mxu0 0.0
      %749 = vmatpush1.msra.mxu0 0.0
      %750 = vmatprep.subr.mxu0 0.0
      %751 = vmatpush1.msra.mxu0 0.0
      %752 = vmatprep.subr.mxu0 0.0
      %753 = vmatpush1.msra.mxu0 0.0
      %754 = vmatprep.subr.mxu0 0.0
      %755 = vmatpush1.msra.mxu0 0.0
      %756 = vmatprep.subr.mxu0 0.0
      %757 = vmatpush1.msra.mxu0 0.0
      %758 = vmatprep.subr.mxu0 0.0
      %759 = vmatpush1.msra.mxu0 0.0
      %760 = vmatprep.subr.mxu0 0.0
      %761 = vmatpush1.msra.mxu0 0.0
      %762 = vmatprep.subr.mxu0 0.0
      %763 = vmatpush1.msra.mxu0 0.0
      %764 = vmatprep.subr.mxu0 0.0
      %765 = vmatpush1.msra.mxu0 0.0
      %766 = vmatprep.subr.mxu0 0.0
      %767 = vmatpush1.msra.mxu0 0.0
      %768 = vmatprep.subr.mxu0 0.0
      %769 = vmatpush1.msra.mxu0 0.0
      %770 = vmatprep.subr.mxu0 0.0
      %771 = vmatpush1.msra.mxu0 0.0
      %772 = vmatprep.subr.mxu0 0.0
      %773 = vmatpush1.msra.mxu0 0.0
      %774 = vmatprep.subr.mxu0 0.0
      %775 = vmatpush1.msra.mxu0 0.0
      %776 = vmatprep.subr.mxu0 0.0
      %777 = vmatpush1.msra.mxu0 0.0
      %778 = vmatprep.mubr.f32.mxu0 0.0
      %779 = vmatmul.mubr.f32.gmra.mrb[0].mxu0 %v712
      %v780 = vpop.f32.mrb[0].mxu0
      %v781 = vadd.f32 %v693, %v780
      %v782 = vpop.f32.mrb[0].mxu0
      %783 = vdwg.mxu0
      %784 = vmatprep.subr.mxu0 0.0
      %785 = vmatpush1.msra.mxu0 %v680
      %786 = vmatprep.subr.mxu0 0.0
      %787 = vmatpush1.msra.mxu0 %v681
      %788 = vmatprep.subr.mxu0 0.0
      %789 = vmatpush1.msra.mxu0 %v682
      %790 = vmatprep.subr.mxu0 0.0
      %791 = vmatpush1.msra.mxu0 %v683
      %792 = vmatprep.subr.mxu0 0.0
      %793 = vmatpush1.msra.mxu0 0.0
      %794 = vmatprep.subr.mxu0 0.0
      %795 = vmatpush1.msra.mxu0 0.0
      %796 = vmatprep.subr.mxu0 0.0
      %797 = vmatpush1.msra.mxu0 0.0
      %798 = vmatprep.subr.mxu0 0.0
      %799 = vmatpush1.msra.mxu0 0.0
      %800 = vmatprep.subr.mxu0 0.0
      %801 = vmatpush1.msra.mxu0 0.0
      %802 = vmatprep.subr.mxu0 0.0
      %803 = vmatpush1.msra.mxu0 0.0
      %804 = vmatprep.subr.mxu0 0.0
      %805 = vmatpush1.msra.mxu0 0.0
      %806 = vmatprep.subr.mxu0 0.0
      %807 = vmatpush1.msra.mxu0 0.0
      %808 = vmatprep.subr.mxu0 0.0
      %809 = vmatpush1.msra.mxu0 0.0
      %810 = vmatprep.subr.mxu0 0.0
      %811 = vmatpush1.msra.mxu0 0.0
      %812 = vmatprep.subr.mxu0 0.0
      %813 = vmatpush1.msra.mxu0 0.0
      %814 = vmatprep.subr.mxu0 0.0
      %815 = vmatpush1.msra.mxu0 0.0
      %816 = vmatprep.subr.mxu0 0.0
      %817 = vmatpush1.msra.mxu0 0.0
      %818 = vmatprep.subr.mxu0 0.0
      %819 = vmatpush1.msra.mxu0 0.0
      %820 = vmatprep.subr.mxu0 0.0
      %821 = vmatpush1.msra.mxu0 0.0
      %822 = vmatprep.subr.mxu0 0.0
      %823 = vmatpush1.msra.mxu0 0.0
      %824 = vmatprep.subr.mxu0 0.0
      %825 = vmatpush1.msra.mxu0 0.0
      %826 = vmatprep.subr.mxu0 0.0
      %827 = vmatpush1.msra.mxu0 0.0
      %828 = vmatprep.subr.mxu0 0.0
      %829 = vmatpush1.msra.mxu0 0.0
      %830 = vmatprep.subr.mxu0 0.0
      %831 = vmatpush1.msra.mxu0 0.0
      %832 = vmatprep.subr.mxu0 0.0
      %833 = vmatpush1.msra.mxu0 0.0
      %834 = vmatprep.subr.mxu0 0.0
      %835 = vmatpush1.msra.mxu0 0.0
      %836 = vmatprep.subr.mxu0 0.0
      %837 = vmatpush1.msra.mxu0 0.0
      %838 = vmatprep.subr.mxu0 0.0
      %839 = vmatpush1.msra.mxu0 0.0
      %840 = vmatprep.subr.mxu0 0.0
      %841 = vmatpush1.msra.mxu0 0.0
      %842 = vmatprep.subr.mxu0 0.0
      %843 = vmatpush1.msra.mxu0 0.0
      %844 = vmatprep.subr.mxu0 0.0
      %845 = vmatpush1.msra.mxu0 0.0
      %846 = vmatprep.subr.mxu0 0.0
      %847 = vmatpush1.msra.mxu0 0.0
      %848 = vmatprep.mubr.f32.mxu0 0.0
      %849 = vmatmul.mubr.f32.gmra.mrb[0].mxu0 %v712
      %v850 = vpop.f32.mrb[0].mxu0
      %v851 = vadd.f32 %v700, %v850
      %v852 = vpop.f32.mrb[0].mxu0
      %853 = vdwg.mxu0
      %854 = vmatprep.subr.mxu0 0.0
      %855 = vmatpush1.msra.mxu0 %v684
      %856 = vmatprep.subr.mxu0 0.0
      %857 = vmatpush1.msra.mxu0 %v685
      %858 = vmatprep.subr.mxu0 0.0
      %859 = vmatpush1.msra.mxu0 %v686
      %860 = vmatprep.subr.mxu0 0.0
      %861 = vmatpush1.msra.mxu0 %v687
      %862 = vmatprep.subr.mxu0 0.0
      %863 = vmatpush1.msra.mxu0 0.0
      %864 = vmatprep.subr.mxu0 0.0
      %865 = vmatpush1.msra.mxu0 0.0
      %866 = vmatprep.subr.mxu0 0.0
      %867 = vmatpush1.msra.mxu0 0.0
      %868 = vmatprep.subr.mxu0 0.0
      %869 = vmatpush1.msra.mxu0 0.0
      %870 = vmatprep.subr.mxu0 0.0
      %871 = vmatpush1.msra.mxu0 0.0
      %872 = vmatprep.subr.mxu0 0.0
      %873 = vmatpush1.msra.mxu0 0.0
      %874 = vmatprep.subr.mxu0 0.0
      %875 = vmatpush1.msra.mxu0 0.0
      %876 = vmatprep.subr.mxu0 0.0
      %877 = vmatpush1.msra.mxu0 0.0
      %878 = vmatprep.subr.mxu0 0.0
      %879 = vmatpush1.msra.mxu0 0.0
      %880 = vmatprep.subr.mxu0 0.0
      %881 = vmatpush1.msra.mxu0 0.0
      %882 = vmatprep.subr.mxu0 0.0
      %883 = vmatpush1.msra.mxu0 0.0
      %884 = vmatprep.subr.mxu0 0.0
      %885 = vmatpush1.msra.mxu0 0.0
      %886 = vmatprep.subr.mxu0 0.0
      %887 = vmatpush1.msra.mxu0 0.0
      %888 = vmatprep.subr.mxu0 0.0
      %889 = vmatpush1.msra.mxu0 0.0
      %890 = vmatprep.subr.mxu0 0.0
      %891 = vmatpush1.msra.mxu0 0.0
      %892 = vmatprep.subr.mxu0 0.0
      %893 = vmatpush1.msra.mxu0 0.0
      %894 = vmatprep.subr.mxu0 0.0
      %895 = vmatpush1.msra.mxu0 0.0
      %896 = vmatprep.subr.mxu0 0.0
      %897 = vmatpush1.msra.mxu0 0.0
      %898 = vmatprep.subr.mxu0 0.0
      %899 = vmatpush1.msra.mxu0 0.0
      %900 = vmatprep.subr.mxu0 0.0
      %901 = vmatpush1.msra.mxu0 0.0
      %902 = vmatprep.subr.mxu0 0.0
      %903 = vmatpush1.msra.mxu0 0.0
      %904 = vmatprep.subr.mxu0 0.0
      %905 = vmatpush1.msra.mxu0 0.0
      %906 = vmatprep.subr.mxu0 0.0
      %907 = vmatpush1.msra.mxu0 0.0
      %908 = vmatprep.subr.mxu0 0.0
      %909 = vmatpush1.msra.mxu0 0.0
      %910 = vmatprep.subr.mxu0 0.0
      %911 = vmatpush1.msra.mxu0 0.0
      %912 = vmatprep.subr.mxu0 0.0
      %913 = vmatpush1.msra.mxu0 0.0
      %914 = vmatprep.subr.mxu0 0.0
      %915 = vmatpush1.msra.mxu0 0.0
      %916 = vmatprep.subr.mxu0 0.0
      %917 = vmatpush1.msra.mxu0 0.0
      %918 = vmatprep.mubr.f32.mxu0 0.0
      %919 = vmatmul.mubr.f32.gmra.mrb[0].mxu0 %v712
      %v920 = vpop.f32.mrb[0].mxu0
      %v921 = vadd.f32 %v707, %v920
      %v922 = vpop.f32.mrb[0].mxu0
      %923 = vdwg.mxu0
      %v924 = vld [vmem:[#allocation2] sm:$0x3]
      %v925 = vadd.f32 %v924, %v781
      %v926 = vxor.u32 %v925, 2147483648
      %v927 = vmul.f32 %v926, 1.442695
      %v928 = vpow.pop %v927
      %v929 = vadd.f32 %v928, 1.0
      %v930 = vrcp.pop %v929
      %v931 = vmul.f32 1.0, %v930
      %v932 = vld [vmem:[#allocation3] sm:$0x3]
      %v933 = vadd.f32 %v932, %v851
      %v934 = vxor.u32 %v933, 2147483648
      %v935 = vmul.f32 %v934, 1.442695
      %v936 = vpow.pop %v935
      %v937 = vadd.f32 %v936, 1.0
      %v938 = vrcp.pop %v937
      %v939 = vmul.f32 1.0, %v938
      %v940 = vld [vmem:[#allocation4] sm:$0x3]
      %v941 = vmul.f32 %v931, %v921
      %v942 = vadd.f32 %v940, %v941
      %v943 = vtanh.pop %v942
      %v944 = vsub.f32 1.0, %v939
      %v945 = vmul.f32 %v944, %v943
      %v946 = vmul.f32 %v939, 0.0
      %v947 = vadd.f32 %v945, %v946
      %v948 = vld [vmem:[%s9] sm:$0xff]
      %v949 = vld [vmem:[%s9 + $0x8] sm:$0xff]
      %v950 = vld [vmem:[%s9 + $0x10] sm:$0xff]
      %v951 = vld [vmem:[%s9 + $0x18] sm:$0xff]
      %v953 = vsel %vm710, %v947, 0
      %955 = vmatprep.subr.mxu0 0.0
      %956 = vmatpush1.msra.mxu0 %v676
      %957 = vmatprep.subr.mxu0 0.0
      %958 = vmatpush1.msra.mxu0 %v677
      %959 = vmatprep.subr.mxu0 0.0
      %960 = vmatpush1.msra.mxu0 %v678
      %961 = vmatprep.subr.mxu0 0.0
      %962 = vmatpush1.msra.mxu0 %v679
      %963 = vmatprep.subr.mxu0 0.0
      %964 = vmatpush1.msra.mxu0 0.0
      %965 = vmatprep.subr.mxu0 0.0
      %966 = vmatpush1.msra.mxu0 0.0
      %967 = vmatprep.subr.mxu0 0.0
      %968 = vmatpush1.msra.mxu0 0.0
      %969 = vmatprep.subr.mxu0 0.0
      %970 = vmatpush1.msra.mxu0 0.0
      %971 = vmatprep.subr.mxu0 0.0
      %972 = vmatpush1.msra.mxu0 0.0
      %973 = vmatprep.subr.mxu0 0.0
      %974 = vmatpush1.msra.mxu0 0.0
      %975 = vmatprep.subr.mxu0 0.0
      %976 = vmatpush1.msra.mxu0 0.0
      %977 = vmatprep.subr.mxu0 0.0
      %978 = vmatpush1.msra.mxu0 0.0
      %979 = vmatprep.subr.mxu0 0.0
      %980 = vmatpush1.msra.mxu0 0.0
      %981 = vmatprep.subr.mxu0 0.0
      %982 = vmatpush1.msra.mxu0 0.0
      %983 = vmatprep.subr.mxu0 0.0
      %984 = vmatpush1.msra.mxu0 0.0
      %985 = vmatprep.subr.mxu0 0.0
      %986 = vmatpush1.msra.mxu0 0.0
      %987 = vmatprep.subr.mxu0 0.0
      %988 = vmatpush1.msra.mxu0 0.0
      %989 = vmatprep.subr.mxu0 0.0
      %990 = vmatpush1.msra.mxu0 0.0
      %991 = vmatprep.subr.mxu0 0.0
      %992 = vmatpush1.msra.mxu0 0.0
      %993 = vmatprep.subr.mxu0 0.0
      %994 = vmatpush1.msra.mxu0 0.0
      %995 = vmatprep.subr.mxu0 0.0
      %996 = vmatpush1.msra.mxu0 0.0
      %997 = vmatprep.subr.mxu0 0.0
      %998 = vmatpush1.msra.mxu0 0.0
      %999 = vmatprep.subr.mxu0 0.0
      %1000 = vmatpush1.msra.mxu0 0.0
      %1001 = vmatprep.subr.mxu0 0.0
      %1002 = vmatpush1.msra.mxu0 0.0
      %1003 = vmatprep.subr.mxu0 0.0
      %1004 = vmatpush1.msra.mxu0 0.0
      %1005 = vmatprep.subr.mxu0 0.0
      %1006 = vmatpush1.msra.mxu0 0.0
      %1007 = vmatprep.subr.mxu0 0.0
      %1008 = vmatpush1.msra.mxu0 0.0
      %1009 = vmatprep.subr.mxu0 0.0
      %1010 = vmatpush1.msra.mxu0 0.0
      %1011 = vmatprep.subr.mxu0 0.0
      %1012 = vmatpush1.msra.mxu0 0.0
      %1013 = vmatprep.subr.mxu0 0.0
      %1014 = vmatpush1.msra.mxu0 0.0
      %1015 = vmatprep.subr.mxu0 0.0
      %1016 = vmatpush1.msra.mxu0 0.0
      %1017 = vmatprep.subr.mxu0 0.0
      %1018 = vmatpush1.msra.mxu0 0.0
      %1019 = vmatprep.mubr.f32.mxu0 0.0
      %1020 = vmatmul.mubr.f32.gmra.mrb[0].mxu0 %v953
      %v1021 = vpop.f32.mrb[0].mxu0
      %v1022 = vadd.f32 %v693, %v1021
      %v1023 = vpop.f32.mrb[0].mxu0
      %1024 = vdwg.mxu0
      %1025 = vmatprep.subr.mxu0 0.0
      %1026 = vmatpush1.msra.mxu0 %v680
      %1027 = vmatprep.subr.mxu0 0.0
      %1028 = vmatpush1.msra.mxu0 %v681
      %1029 = vmatprep.subr.mxu0 0.0
      %1030 = vmatpush1.msra.mxu0 %v682
      %1031 = vmatprep.subr.mxu0 0.0
      %1032 = vmatpush1.msra.mxu0 %v683
      %1033 = vmatprep.subr.mxu0 0.0
      %1034 = vmatpush1.msra.mxu0 0.0
      %1035 = vmatprep.subr.mxu0 0.0
      %1036 = vmatpush1.msra.mxu0 0.0
      %1037 = vmatprep.subr.mxu0 0.0
      %1038 = vmatpush1.msra.mxu0 0.0
      %1039 = vmatprep.subr.mxu0 0.0
      %1040 = vmatpush1.msra.mxu0 0.0
      %1041 = vmatprep.subr.mxu0 0.0
      %1042 = vmatpush1.msra.mxu0 0.0
      %1043 = vmatprep.subr.mxu0 0.0
      %1044 = vmatpush1.msra.mxu0 0.0
      %1045 = vmatprep.subr.mxu0 0.0
      %1046 = vmatpush1.msra.mxu0 0.0
      %1047 = vmatprep.subr.mxu0 0.0
      %1048 = vmatpush1.msra.mxu0 0.0
      %1049 = vmatprep.subr.mxu0 0.0
      %1050 = vmatpush1.msra.mxu0 0.0
      %1051 = vmatprep.subr.mxu0 0.0
      %1052 = vmatpush1.msra.mxu0 0.0
      %1053 = vmatprep.subr.mxu0 0.0
      %1054 = vmatpush1.msra.mxu0 0.0
      %1055 = vmatprep.subr.mxu0 0.0
      %1056 = vmatpush1.msra.mxu0 0.0
      %1057 = vmatprep.subr.mxu0 0.0
      %1058 = vmatpush1.msra.mxu0 0.0
      %1059 = vmatprep.subr.mxu0 0.0
      %1060 = vmatpush1.msra.mxu0 0.0
      %1061 = vmatprep.subr.mxu0 0.0
      %1062 = vmatpush1.msra.mxu0 0.0
      %1063 = vmatprep.subr.mxu0 0.0
      %1064 = vmatpush1.msra.mxu0 0.0
      %1065 = vmatprep.subr.mxu0 0.0
      %1066 = vmatpush1.msra.mxu0 0.0
      %1067 = vmatprep.subr.mxu0 0.0
      %1068 = vmatpush1.msra.mxu0 0.0
      %1069 = vmatprep.subr.mxu0 0.0
      %1070 = vmatpush1.msra.mxu0 0.0
      %1071 = vmatprep.subr.mxu0 0.0
      %1072 = vmatpush1.msra.mxu0 0.0
      %1073 = vmatprep.subr.mxu0 0.0
      %1074 = vmatpush1.msra.mxu0 0.0
      %1075 = vmatprep.subr.mxu0 0.0
      %1076 = vmatpush1.msra.mxu0 0.0
      %1077 = vmatprep.subr.mxu0 0.0
      %1078 = vmatpush1.msra.mxu0 0.0
      %1079 = vmatprep.subr.mxu0 0.0
      %1080 = vmatpush1.msra.mxu0 0.0
      %1081 = vmatprep.subr.mxu0 0.0
      %1082 = vmatpush1.msra.mxu0 0.0
      %1083 = vmatprep.subr.mxu0 0.0
      %1084 = vmatpush1.msra.mxu0 0.0
      %1085 = vmatprep.subr.mxu0 0.0
      %1086 = vmatpush1.msra.mxu0 0.0
      %1087 = vmatprep.subr.mxu0 0.0
      %1088 = vmatpush1.msra.mxu0 0.0
      %1089 = vmatprep.mubr.f32.mxu0 0.0
      %1090 = vmatmul.mubr.f32.gmra.mrb[0].mxu0 %v953
      %v1091 = vpop.f32.mrb[0].mxu0
      %v1092 = vadd.f32 %v700, %v1091
      %v1093 = vpop.f32.mrb[0].mxu0
      %1094 = vdwg.mxu0
      %1095 = vmatprep.subr.mxu0 0.0
      %1096 = vmatpush1.msra.mxu0 %v684
      %1097 = vmatprep.subr.mxu0 0.0
      %1098 = vmatpush1.msra.mxu0 %v685
      %1099 = vmatprep.subr.mxu0 0.0
      %1100 = vmatpush1.msra.mxu0 %v686
      %1101 = vmatprep.subr.mxu0 0.0
      %1102 = vmatpush1.msra.mxu0 %v687
      %1103 = vmatprep.subr.mxu0 0.0
      %1104 = vmatpush1.msra.mxu0 0.0
      %1105 = vmatprep.subr.mxu0 0.0
      %1106 = vmatpush1.msra.mxu0 0.0
      %1107 = vmatprep.subr.mxu0 0.0
      %1108 = vmatpush1.msra.mxu0 0.0
      %1109 = vmatprep.subr.mxu0 0.0
      %1110 = vmatpush1.msra.mxu0 0.0
      %1111 = vmatprep.subr.mxu0 0.0
      %1112 = vmatpush1.msra.mxu0 0.0
      %1113 = vmatprep.subr.mxu0 0.0
      %1114 = vmatpush1.msra.mxu0 0.0
      %1115 = vmatprep.subr.mxu0 0.0
      %1116 = vmatpush1.msra.mxu0 0.0
      %1117 = vmatprep.subr.mxu0 0.0
      %1118 = vmatpush1.msra.mxu0 0.0
      %1119 = vmatprep.subr.mxu0 0.0
      %1120 = vmatpush1.msra.mxu0 0.0
      %1121 = vmatprep.subr.mxu0 0.0
      %1122 = vmatpush1.msra.mxu0 0.0
      %1123 = vmatprep.subr.mxu0 0.0
      %1124 = vmatpush1.msra.mxu0 0.0
      %1125 = vmatprep.subr.mxu0 0.0
      %1126 = vmatpush1.msra.mxu0 0.0
      %1127 = vmatprep.subr.mxu0 0.0
      %1128 = vmatpush1.msra.mxu0 0.0
      %1129 = vmatprep.subr.mxu0 0.0
      %1130 = vmatpush1.msra.mxu0 0.0
      %1131 = vmatprep.subr.mxu0 0.0
      %1132 = vmatpush1.msra.mxu0 0.0
      %1133 = vmatprep.subr.mxu0 0.0
      %1134 = vmatpush1.msra.mxu0 0.0
      %1135 = vmatprep.subr.mxu0 0.0
      %1136 = vmatpush1.msra.mxu0 0.0
      %1137 = vmatprep.subr.mxu0 0.0
      %1138 = vmatpush1.msra.mxu0 0.0
      %1139 = vmatprep.subr.mxu0 0.0
      %1140 = vmatpush1.msra.mxu0 0.0
      %1141 = vmatprep.subr.mxu0 0.0
      %1142 = vmatpush1.msra.mxu0 0.0
      %1143 = vmatprep.subr.mxu0 0.0
      %1144 = vmatpush1.msra.mxu0 0.0
      %1145 = vmatprep.subr.mxu0 0.0
      %1146 = vmatpush1.msra.mxu0 0.0
      %1147 = vmatprep.subr.mxu0 0.0
      %1148 = vmatpush1.msra.mxu0 0.0
      %1149 = vmatprep.subr.mxu0 0.0
      %1150 = vmatpush1.msra.mxu0 0.0
      %1151 = vmatprep.subr.mxu0 0.0
      %1152 = vmatpush1.msra.mxu0 0.0
      %1153 = vmatprep.subr.mxu0 0.0
      %1154 = vmatpush1.msra.mxu0 0.0
      %1155 = vmatprep.subr.mxu0 0.0
      %1156 = vmatpush1.msra.mxu0 0.0
      %1157 = vmatprep.subr.mxu0 0.0
      %1158 = vmatpush1.msra.mxu0 0.0
      %1159 = vmatprep.mubr.f32.mxu0 0.0
      %1160 = vmatmul.mubr.f32.gmra.mrb[0].mxu0 %v953
      %v1161 = vpop.f32.mrb[0].mxu0
      %v1162 = vadd.f32 %v707, %v1161
      %v1163 = vpop.f32.mrb[0].mxu0
      %1164 = vdwg.mxu0
      %s1165 = scalar_lea.vmem [#allocation2], 2
      %v1166 = vld [vmem:[%s1165] sm:$0x3]
      %v1167 = vadd.f32 %v1166, %v1022
      %v1168 = vxor.u32 %v1167, 2147483648
      %v1169 = vmul.f32 %v1168, 1.442695
      %v1170 = vpow.pop %v1169
      %v1171 = vadd.f32 %v1170, 1.0
      %v1172 = vrcp.pop %v1171
      %v1173 = vmul.f32 1.0, %v1172
      %s1174 = scalar_lea.vmem [#allocation3], 2
      %v1175 = vld [vmem:[%s1174] sm:$0x3]
      %v1176 = vadd.f32 %v1175, %v1092
      %v1177 = vxor.u32 %v1176, 2147483648
      %v1178 = vmul.f32 %v1177, 1.442695
      %v1179 = vpow.pop %v1178
      %v1180 = vadd.f32 %v1179, 1.0
      %v1181 = vrcp.pop %v1180
      %v1182 = vmul.f32 1.0, %v1181
      %s1183 = scalar_lea.vmem [#allocation4], 2
      %v1184 = vld [vmem:[%s1183] sm:$0x3]
      %v1185 = vmul.f32 %v1173, %v1162
      %v1186 = vadd.f32 %v1184, %v1185
      %v1187 = vtanh.pop %v1186
      %v1188 = vsub.f32 1.0, %v1182
      %v1189 = vmul.f32 %v1188, %v1187
      %v1190 = vmul.f32 %v1182, %v947
      %v1191 = vadd.f32 %v1189, %v1190
      %s1192 = scalar_lea.vmem %s9, 32
      %v1193 = vld [vmem:[%s1192] sm:$0xff]
      %v1194 = vld [vmem:[%s1192 + $0x8] sm:$0xff]
      %v1195 = vld [vmem:[%s1192 + $0x10] sm:$0xff]
      %v1196 = vld [vmem:[%s1192 + $0x18] sm:$0xff]
      %v1198 = vsel %vm710, %v1191, 0
      %1200 = vmatprep.subr.mxu0 0.0
      %1201 = vmatpush1.msra.mxu0 %v1193
      %1202 = vmatprep.subr.mxu0 0.0
      %1203 = vmatpush1.msra.mxu0 %v1194
      %1204 = vmatprep.subr.mxu0 0.0
      %1205 = vmatpush1.msra.mxu0 %v1195
      %1206 = vmatprep.subr.mxu0 0.0
      %1207 = vmatpush1.msra.mxu0 %v1196
      %1208 = vmatprep.subr.mxu0 0.0
      %1209 = vmatpush1.msra.mxu0 0.0
      %1210 = vmatprep.subr.mxu0 0.0
      %1211 = vmatpush1.msra.mxu0 0.0
      %1212 = vmatprep.subr.mxu0 0.0
      %1213 = vmatpush1.msra.mxu0 0.0
      %1214 = vmatprep.subr.mxu0 0.0
      %1215 = vmatpush1.msra.mxu0 0.0
      %1216 = vmatprep.subr.mxu0 0.0
      %1217 = vmatpush1.msra.mxu0 0.0
      %1218 = vmatprep.subr.mxu0 0.0
      %1219 = vmatpush1.msra.mxu0 0.0
      %1220 = vmatprep.subr.mxu0 0.0
      %1221 = vmatpush1.msra.mxu0 0.0
      %1222 = vmatprep.subr.mxu0 0.0
      %1223 = vmatpush1.msra.mxu0 0.0
      %1224 = vmatprep.subr.mxu0 0.0
      %1225 = vmatpush1.msra.mxu0 0.0
      %1226 = vmatprep.subr.mxu0 0.0
      %1227 = vmatpush1.msra.mxu0 0.0
      %1228 = vmatprep.subr.mxu0 0.0
      %1229 = vmatpush1.msra.mxu0 0.0
      %1230 = vmatprep.subr.mxu0 0.0
      %1231 = vmatpush1.msra.mxu0 0.0
      %1232 = vmatprep.subr.mxu0 0.0
      %1233 = vmatpush1.msra.mxu0 0.0
      %1234 = vmatprep.subr.mxu0 0.0
      %1235 = vmatpush1.msra.mxu0 0.0
      %1236 = vmatprep.subr.mxu0 0.0
      %1237 = vmatpush1.msra.mxu0 0.0
      %1238 = vmatprep.subr.mxu0 0.0
      %1239 = vmatpush1.msra.mxu0 0.0
      %1240 = vmatprep.subr.mxu0 0.0
      %1241 = vmatpush1.msra.mxu0 0.0
      %1242 = vmatprep.subr.mxu0 0.0
      %1243 = vmatpush1.msra.mxu0 0.0
      %1244 = vmatprep.subr.mxu0 0.0
      %1245 = vmatpush1.msra.mxu0 0.0
      %1246 = vmatprep.subr.mxu0 0.0
      %1247 = vmatpush1.msra.mxu0 0.0
      %1248 = vmatprep.subr.mxu0 0.0
      %1249 = vmatpush1.msra.mxu0 0.0
      %1250 = vmatprep.subr.mxu0 0.0
      %1251 = vmatpush1.msra.mxu0 0.0
      %1252 = vmatprep.subr.mxu0 0.0
      %1253 = vmatpush1.msra.mxu0 0.0
      %1254 = vmatprep.subr.mxu0 0.0
      %1255 = vmatpush1.msra.mxu0 0.0
      %1256 = vmatprep.subr.mxu0 0.0
      %1257 = vmatpush1.msra.mxu0 0.0
      %1258 = vmatprep.subr.mxu0 0.0
      %1259 = vmatpush1.msra.mxu0 0.0
      %1260 = vmatprep.subr.mxu0 0.0
      %1261 = vmatpush1.msra.mxu0 0.0
      %1262 = vmatprep.subr.mxu0 0.0
      %1263 = vmatpush1.msra.mxu0 0.0
      %1264 = vmatprep.mubr.f32.mxu0 0.0
      %1265 = vmatmul.mubr.f32.gmra.mrb[0].mxu0 %v1198
      %v1266 = vpop.f32.mrb[0].mxu0
      %v1267 = vadd.f32 0.0, %v1266
      %v1268 = vpop.f32.mrb[0].mxu0
      %1269 = vdwg.mxu0
      %1270 = vmatprep.subr.mxu0 0.0
      %1271 = vmatpush1.msra.mxu0 %v948
      %1272 = vmatprep.subr.mxu0 0.0
      %1273 = vmatpush1.msra.mxu0 %v949
      %1274 = vmatprep.subr.mxu0 0.0
      %1275 = vmatpush1.msra.mxu0 %v950
      %1276 = vmatprep.subr.mxu0 0.0
      %1277 = vmatpush1.msra.mxu0 %v951
      %1278 = vmatprep.subr.mxu0 0.0
      %1279 = vmatpush1.msra.mxu0 0.0
      %1280 = vmatprep.subr.mxu0 0.0
      %1281 = vmatpush1.msra.mxu0 0.0
      %1282 = vmatprep.subr.mxu0 0.0
      %1283 = vmatpush1.msra.mxu0 0.0
      %1284 = vmatprep.subr.mxu0 0.0
      %1285 = vmatpush1.msra.mxu0 0.0
      %1286 = vmatprep.subr.mxu0 0.0
      %1287 = vmatpush1.msra.mxu0 0.0
      %1288 = vmatprep.subr.mxu0 0.0
      %1289 = vmatpush1.msra.mxu0 0.0
      %1290 = vmatprep.subr.mxu0 0.0
      %1291 = vmatpush1.msra.mxu0 0.0
      %1292 = vmatprep.subr.mxu0 0.0
      %1293 = vmatpush1.msra.mxu0 0.0
      %1294 = vmatprep.subr.mxu0 0.0
      %1295 = vmatpush1.msra.mxu0 0.0
      %1296 = vmatprep.subr.mxu0 0.0
      %1297 = vmatpush1.msra.mxu0 0.0
      %1298 = vmatprep.subr.mxu0 0.0
      %1299 = vmatpush1.msra.mxu0 0.0
      %1300 = vmatprep.subr.mxu0 0.0
      %1301 = vmatpush1.msra.mxu0 0.0
      %1302 = vmatprep.subr.mxu0 0.0
      %1303 = vmatpush1.msra.mxu0 0.0
      %1304 = vmatprep.subr.mxu0 0.0
      %1305 = vmatpush1.msra.mxu0 0.0
      %1306 = vmatprep.subr.mxu0 0.0
      %1307 = vmatpush1.msra.mxu0 0.0
      %1308 = vmatprep.subr.mxu0 0.0
      %1309 = vmatpush1.msra.mxu0 0.0
      %1310 = vmatprep.subr.mxu0 0.0
      %1311 = vmatpush1.msra.mxu0 0.0
      %1312 = vmatprep.subr.mxu0 0.0
      %1313 = vmatpush1.msra.mxu0 0.0
      %1314 = vmatprep.subr.mxu0 0.0
      %1315 = vmatpush1.msra.mxu0 0.0
      %1316 = vmatprep.subr.mxu0 0.0
      %1317 = vmatpush1.msra.mxu0 0.0
      %1318 = vmatprep.subr.mxu0 0.0
      %1319 = vmatpush1.msra.mxu0 0.0
      %1320 = vmatprep.subr.mxu0 0.0
      %1321 = vmatpush1.msra.mxu0 0.0
      %1322 = vmatprep.subr.mxu0 0.0
      %1323 = vmatpush1.msra.mxu0 0.0
      %1324 = vmatprep.subr.mxu0 0.0
      %1325 = vmatpush1.msra.mxu0 0.0
      %1326 = vmatprep.subr.mxu0 0.0
      %1327 = vmatpush1.msra.mxu0 0.0
      %1328 = vmatprep.subr.mxu0 0.0
      %1329 = vmatpush1.msra.mxu0 0.0
      %1330 = vmatprep.subr.mxu0 0.0
      %1331 = vmatpush1.msra.mxu0 0.0
      %1332 = vmatprep.subr.mxu0 0.0
      %1333 = vmatpush1.msra.mxu0 0.0
      %1334 = vmatprep.mubr.f32.mxu0 0.0
      %1335 = vmatmul.mubr.f32.gmra.mrb[0].mxu0 %v953
      %v1336 = vpop.f32.mrb[0].mxu0
      %v1337 = vadd.f32 %v1267, %v1336
      %v1338 = vpop.f32.mrb[0].mxu0
      %1339 = vdwg.mxu0
      %1340 = vmatprep.subr.mxu0 0.0
      %1341 = vmatpush1.msra.mxu0 %v676
      %1342 = vmatprep.subr.mxu0 0.0
      %1343 = vmatpush1.msra.mxu0 %v677
      %1344 = vmatprep.subr.mxu0 0.0
      %1345 = vmatpush1.msra.mxu0 %v678
      %1346 = vmatprep.subr.mxu0 0.0
      %1347 = vmatpush1.msra.mxu0 %v679
      %1348 = vmatprep.subr.mxu0 0.0
      %1349 = vmatpush1.msra.mxu0 0.0
      %1350 = vmatprep.subr.mxu0 0.0
      %1351 = vmatpush1.msra.mxu0 0.0
      %1352 = vmatprep.subr.mxu0 0.0
      %1353 = vmatpush1.msra.mxu0 0.0
      %1354 = vmatprep.subr.mxu0 0.0
      %1355 = vmatpush1.msra.mxu0 0.0
      %1356 = vmatprep.subr.mxu0 0.0
      %1357 = vmatpush1.msra.mxu0 0.0
      %1358 = vmatprep.subr.mxu0 0.0
      %1359 = vmatpush1.msra.mxu0 0.0
      %1360 = vmatprep.subr.mxu0 0.0
      %1361 = vmatpush1.msra.mxu0 0.0
      %1362 = vmatprep.subr.mxu0 0.0
      %1363 = vmatpush1.msra.mxu0 0.0
      %1364 = vmatprep.subr.mxu0 0.0
      %1365 = vmatpush1.msra.mxu0 0.0
      %1366 = vmatprep.subr.mxu0 0.0
      %1367 = vmatpush1.msra.mxu0 0.0
      %1368 = vmatprep.subr.mxu0 0.0
      %1369 = vmatpush1.msra.mxu0 0.0
      %1370 = vmatprep.subr.mxu0 0.0
      %1371 = vmatpush1.msra.mxu0 0.0
      %1372 = vmatprep.subr.mxu0 0.0
      %1373 = vmatpush1.msra.mxu0 0.0
      %1374 = vmatprep.subr.mxu0 0.0
      %1375 = vmatpush1.msra.mxu0 0.0
      %1376 = vmatprep.subr.mxu0 0.0
      %1377 = vmatpush1.msra.mxu0 0.0
      %1378 = vmatprep.subr.mxu0 0.0
      %1379 = vmatpush1.msra.mxu0 0.0
      %1380 = vmatprep.subr.mxu0 0.0
      %1381 = vmatpush1.msra.mxu0 0.0
      %1382 = vmatprep.subr.mxu0 0.0
      %1383 = vmatpush1.msra.mxu0 0.0
      %1384 = vmatprep.subr.mxu0 0.0
      %1385 = vmatpush1.msra.mxu0 0.0
      %1386 = vmatprep.subr.mxu0 0.0
      %1387 = vmatpush1.msra.mxu0 0.0
      %1388 = vmatprep.subr.mxu0 0.0
      %1389 = vmatpush1.msra.mxu0 0.0
      %1390 = vmatprep.subr.mxu0 0.0
      %1391 = vmatpush1.msra.mxu0 0.0
      %1392 = vmatprep.subr.mxu0 0.0
      %1393 = vmatpush1.msra.mxu0 0.0
      %1394 = vmatprep.subr.mxu0 0.0
      %1395 = vmatpush1.msra.mxu0 0.0
      %1396 = vmatprep.subr.mxu0 0.0
      %1397 = vmatpush1.msra.mxu0 0.0
      %1398 = vmatprep.subr.mxu0 0.0
      %1399 = vmatpush1.msra.mxu0 0.0
      %1400 = vmatprep.subr.mxu0 0.0
      %1401 = vmatpush1.msra.mxu0 0.0
      %1402 = vmatprep.subr.mxu0 0.0
      %1403 = vmatpush1.msra.mxu0 0.0
      %1404 = vmatprep.mubr.f32.mxu0 0.0
      %1405 = vmatmul.mubr.f32.gmra.mrb[0].mxu0 %v1198
      %v1406 = vpop.f32.mrb[0].mxu0
      %v1407 = vadd.f32 %v693, %v1406
      %v1408 = vpop.f32.mrb[0].mxu0
      %1409 = vdwg.mxu0
      %1410 = vmatprep.subr.mxu0 0.0
      %1411 = vmatpush1.msra.mxu0 %v680
      %1412 = vmatprep.subr.mxu0 0.0
      %1413 = vmatpush1.msra.mxu0 %v681
      %1414 = vmatprep.subr.mxu0 0.0
      %1415 = vmatpush1.msra.mxu0 %v682
      %1416 = vmatprep.subr.mxu0 0.0
      %1417 = vmatpush1.msra.mxu0 %v683
      %1418 = vmatprep.subr.mxu0 0.0
      %1419 = vmatpush1.msra.mxu0 0.0
      %1420 = vmatprep.subr.mxu0 0.0
      %1421 = vmatpush1.msra.mxu0 0.0
      %1422 = vmatprep.subr.mxu0 0.0
      %1423 = vmatpush1.msra.mxu0 0.0
      %1424 = vmatprep.subr.mxu0 0.0
      %1425 = vmatpush1.msra.mxu0 0.0
      %1426 = vmatprep.subr.mxu0 0.0
      %1427 = vmatpush1.msra.mxu0 0.0
      %1428 = vmatprep.subr.mxu0 0.0
      %1429 = vmatpush1.msra.mxu0 0.0
      %1430 = vmatprep.subr.mxu0 0.0
      %1431 = vmatpush1.msra.mxu0 0.0
      %1432 = vmatprep.subr.mxu0 0.0
      %1433 = vmatpush1.msra.mxu0 0.0
      %1434 = vmatprep.subr.mxu0 0.0
      %1435 = vmatpush1.msra.mxu0 0.0
      %1436 = vmatprep.subr.mxu0 0.0
      %1437 = vmatpush1.msra.mxu0 0.0
      %1438 = vmatprep.subr.mxu0 0.0
      %1439 = vmatpush1.msra.mxu0 0.0
      %1440 = vmatprep.subr.mxu0 0.0
      %1441 = vmatpush1.msra.mxu0 0.0
      %1442 = vmatprep.subr.mxu0 0.0
      %1443 = vmatpush1.msra.mxu0 0.0
      %1444 = vmatprep.subr.mxu0 0.0
      %1445 = vmatpush1.msra.mxu0 0.0
      %1446 = vmatprep.subr.mxu0 0.0
      %1447 = vmatpush1.msra.mxu0 0.0
      %1448 = vmatprep.subr.mxu0 0.0
      %1449 = vmatpush1.msra.mxu0 0.0
      %1450 = vmatprep.subr.mxu0 0.0
      %1451 = vmatpush1.msra.mxu0 0.0
      %1452 = vmatprep.subr.mxu0 0.0
      %1453 = vmatpush1.msra.mxu0 0.0
      %1454 = vmatprep.subr.mxu0 0.0
      %1455 = vmatpush1.msra.mxu0 0.0
      %1456 = vmatprep.subr.mxu0 0.0
      %1457 = vmatpush1.msra.mxu0 0.0
      %1458 = vmatprep.subr.mxu0 0.0
      %1459 = vmatpush1.msra.mxu0 0.0
      %1460 = vmatprep.subr.mxu0 0.0
      %1461 = vmatpush1.msra.mxu0 0.0
      %1462 = vmatprep.subr.mxu0 0.0
      %1463 = vmatpush1.msra.mxu0 0.0
      %1464 = vmatprep.subr.mxu0 0.0
      %1465 = vmatpush1.msra.mxu0 0.0
      %1466 = vmatprep.subr.mxu0 0.0
      %1467 = vmatpush1.msra.mxu0 0.0
      %1468 = vmatprep.subr.mxu0 0.0
      %1469 = vmatpush1.msra.mxu0 0.0
      %1470 = vmatprep.subr.mxu0 0.0
      %1471 = vmatpush1.msra.mxu0 0.0
      %1472 = vmatprep.subr.mxu0 0.0
      %1473 = vmatpush1.msra.mxu0 0.0
      %1474 = vmatprep.mubr.f32.mxu0 0.0
      %1475 = vmatmul.mubr.f32.gmra.mrb[0].mxu0 %v1198
      %v1476 = vpop.f32.mrb[0].mxu0
      %v1477 = vadd.f32 %v700, %v1476
      %v1478 = vpop.f32.mrb[0].mxu0
      %1479 = vdwg.mxu0
      %1480 = vmatprep.subr.mxu0 0.0
      %1481 = vmatpush1.msra.mxu0 %v684
      %1482 = vmatprep.subr.mxu0 0.0
      %1483 = vmatpush1.msra.mxu0 %v685
      %1484 = vmatprep.subr.mxu0 0.0
      %1485 = vmatpush1.msra.mxu0 %v686
      %1486 = vmatprep.subr.mxu0 0.0
      %1487 = vmatpush1.msra.mxu0 %v687
      %1488 = vmatprep.subr.mxu0 0.0
      %1489 = vmatpush1.msra.mxu0 0.0
      %1490 = vmatprep.subr.mxu0 0.0
      %1491 = vmatpush1.msra.mxu0 0.0
      %1492 = vmatprep.subr.mxu0 0.0
      %1493 = vmatpush1.msra.mxu0 0.0
      %1494 = vmatprep.subr.mxu0 0.0
      %1495 = vmatpush1.msra.mxu0 0.0
      %1496 = vmatprep.subr.mxu0 0.0
      %1497 = vmatpush1.msra.mxu0 0.0
      %1498 = vmatprep.subr.mxu0 0.0
      %1499 = vmatpush1.msra.mxu0 0.0
      %1500 = vmatprep.subr.mxu0 0.0
      %1501 = vmatpush1.msra.mxu0 0.0
      %1502 = vmatprep.subr.mxu0 0.0
      %1503 = vmatpush1.msra.mxu0 0.0
      %1504 = vmatprep.subr.mxu0 0.0
      %1505 = vmatpush1.msra.mxu0 0.0
      %1506 = vmatprep.subr.mxu0 0.0
      %1507 = vmatpush1.msra.mxu0 0.0
      %1508 = vmatprep.subr.mxu0 0.0
      %1509 = vmatpush1.msra.mxu0 0.0
      %1510 = vmatprep.subr.mxu0 0.0
      %1511 = vmatpush1.msra.mxu0 0.0
      %1512 = vmatprep.subr.mxu0 0.0
      %1513 = vmatpush1.msra.mxu0 0.0
      %1514 = vmatprep.subr.mxu0 0.0
      %1515 = vmatpush1.msra.mxu0 0.0
      %1516 = vmatprep.subr.mxu0 0.0
      %1517 = vmatpush1.msra.mxu0 0.0
      %1518 = vmatprep.subr.mxu0 0.0
      %1519 = vmatpush1.msra.mxu0 0.0
      %1520 = vmatprep.subr.mxu0 0.0
      %1521 = vmatpush1.msra.mxu0 0.0
      %1522 = vmatprep.subr.mxu0 0.0
      %1523 = vmatpush1.msra.mxu0 0.0
      %1524 = vmatprep.subr.mxu0 0.0
      %1525 = vmatpush1.msra.mxu0 0.0
      %1526 = vmatprep.subr.mxu0 0.0
      %1527 = vmatpush1.msra.mxu0 0.0
      %1528 = vmatprep.subr.mxu0 0.0
      %1529 = vmatpush1.msra.mxu0 0.0
      %1530 = vmatprep.subr.mxu0 0.0
      %1531 = vmatpush1.msra.mxu0 0.0
      %1532 = vmatprep.subr.mxu0 0.0
      %1533 = vmatpush1.msra.mxu0 0.0
      %1534 = vmatprep.subr.mxu0 0.0
      %1535 = vmatpush1.msra.mxu0 0.0
      %1536 = vmatprep.subr.mxu0 0.0
      %1537 = vmatpush1.msra.mxu0 0.0
      %1538 = vmatprep.subr.mxu0 0.0
      %1539 = vmatpush1.msra.mxu0 0.0
      %1540 = vmatprep.subr.mxu0 0.0
      %1541 = vmatpush1.msra.mxu0 0.0
      %1542 = vmatprep.subr.mxu0 0.0
      %1543 = vmatpush1.msra.mxu0 0.0
      %1544 = vmatprep.mubr.f32.mxu0 0.0
      %1545 = vmatmul.mubr.f32.gmra.mrb[0].mxu0 %v1198
      %v1546 = vpop.f32.mrb[0].mxu0
      %v1547 = vadd.f32 %v707, %v1546
      %v1548 = vpop.f32.mrb[0].mxu0
      %1549 = vdwg.mxu0
      %s1550 = scalar_lea.vmem [#allocation2], 4
      %v1551 = vld [vmem:[%s1550] sm:$0x3]
      %v1552 = vadd.f32 %v1551, %v1407
      %v1553 = vxor.u32 %v1552, 2147483648
      %v1554 = vmul.f32 %v1553, 1.442695
      %v1555 = vpow.pop %v1554
      %v1556 = vadd.f32 %v1555, 1.0
      %v1557 = vrcp.pop %v1556
      %v1558 = vmul.f32 1.0, %v1557
      %s1559 = scalar_lea.vmem [#allocation3], 4
      %v1560 = vld [vmem:[%s1559] sm:$0x3]
      %v1561 = vadd.f32 %v1560, %v1477
      %v1562 = vxor.u32 %v1561, 2147483648
      %v1563 = vmul.f32 %v1562, 1.442695
      %v1564 = vpow.pop %v1563
      %v1565 = vadd.f32 %v1564, 1.0
      %v1566 = vrcp.pop %v1565
      %v1567 = vmul.f32 1.0, %v1566
      %s1568 = scalar_lea.vmem [#allocation4], 4
      %v1569 = vld [vmem:[%s1568] sm:$0x3]
      %v1570 = vmul.f32 %v1558, %v1547
      %v1571 = vadd.f32 %v1569, %v1570
      %v1572 = vtanh.pop %v1571
      %v1573 = vsub.f32 1.0, %v1567
      %v1574 = vmul.f32 %v1573, %v1572
      %v1575 = vmul.f32 %v1567, %v1191
      %v1576 = vadd.f32 %v1574, %v1575
      %s1577 = scalar_lea.vmem %s9, 64
      %v1578 = vld [vmem:[%s1577] sm:$0xff]
      %v1579 = vld [vmem:[%s1577 + $0x8] sm:$0xff]
      %v1580 = vld [vmem:[%s1577 + $0x10] sm:$0xff]
      %v1581 = vld [vmem:[%s1577 + $0x18] sm:$0xff]
      %v1583 = vsel %vm710, %v1576, 0
      %1585 = vmatprep.subr.mxu0 0.0
      %1586 = vmatpush1.msra.mxu0 %v1578
      %1587 = vmatprep.subr.mxu0 0.0
      %1588 = vmatpush1.msra.mxu0 %v1579
      %1589 = vmatprep.subr.mxu0 0.0
      %1590 = vmatpush1.msra.mxu0 %v1580
      %1591 = vmatprep.subr.mxu0 0.0
      %1592 = vmatpush1.msra.mxu0 %v1581
      %1593 = vmatprep.subr.mxu0 0.0
      %1594 = vmatpush1.msra.mxu0 0.0
      %1595 = vmatprep.subr.mxu0 0.0
      %1596 = vmatpush1.msra.mxu0 0.0
      %1597 = vmatprep.subr.mxu0 0.0
      %1598 = vmatpush1.msra.mxu0 0.0
      %1599 = vmatprep.subr.mxu0 0.0
      %1600 = vmatpush1.msra.mxu0 0.0
      %1601 = vmatprep.subr.mxu0 0.0
      %1602 = vmatpush1.msra.mxu0 0.0
      %1603 = vmatprep.subr.mxu0 0.0
      %1604 = vmatpush1.msra.mxu0 0.0
      %1605 = vmatprep.subr.mxu0 0.0
      %1606 = vmatpush1.msra.mxu0 0.0
      %1607 = vmatprep.subr.mxu0 0.0
      %1608 = vmatpush1.msra.mxu0 0.0
      %1609 = vmatprep.subr.mxu0 0.0
      %1610 = vmatpush1.msra.mxu0 0.0
      %1611 = vmatprep.subr.mxu0 0.0
      %1612 = vmatpush1.msra.mxu0 0.0
      %1613 = vmatprep.subr.mxu0 0.0
      %1614 = vmatpush1.msra.mxu0 0.0
      %1615 = vmatprep.subr.mxu0 0.0
      %1616 = vmatpush1.msra.mxu0 0.0
      %1617 = vmatprep.subr.mxu0 0.0
      %1618 = vmatpush1.msra.mxu0 0.0
      %1619 = vmatprep.subr.mxu0 0.0
      %1620 = vmatpush1.msra.mxu0 0.0
      %1621 = vmatprep.subr.mxu0 0.0
      %1622 = vmatpush1.msra.mxu0 0.0
      %1623 = vmatprep.subr.mxu0 0.0
      %1624 = vmatpush1.msra.mxu0 0.0
      %1625 = vmatprep.subr.mxu0 0.0
      %1626 = vmatpush1.msra.mxu0 0.0
      %1627 = vmatprep.subr.mxu0 0.0
      %1628 = vmatpush1.msra.mxu0 0.0
      %1629 = vmatprep.subr.mxu0 0.0
      %1630 = vmatpush1.msra.mxu0 0.0
      %1631 = vmatprep.subr.mxu0 0.0
      %1632 = vmatpush1.msra.mxu0 0.0
      %1633 = vmatprep.subr.mxu0 0.0
      %1634 = vmatpush1.msra.mxu0 0.0
      %1635 = vmatprep.subr.mxu0 0.0
      %1636 = vmatpush1.msra.mxu0 0.0
      %1637 = vmatprep.subr.mxu0 0.0
      %1638 = vmatpush1.msra.mxu0 0.0
      %1639 = vmatprep.subr.mxu0 0.0
      %1640 = vmatpush1.msra.mxu0 0.0
      %1641 = vmatprep.subr.mxu0 0.0
      %1642 = vmatpush1.msra.mxu0 0.0
      %1643 = vmatprep.subr.mxu0 0.0
      %1644 = vmatpush1.msra.mxu0 0.0
      %1645 = vmatprep.subr.mxu0 0.0
      %1646 = vmatpush1.msra.mxu0 0.0
      %1647 = vmatprep.subr.mxu0 0.0
      %1648 = vmatpush1.msra.mxu0 0.0
      %1649 = vmatprep.mubr.f32.mxu0 0.0
      %1650 = vmatmul.mubr.f32.gmra.mrb[0].mxu0 %v1583
      %v1651 = vpop.f32.mrb[0].mxu0
      %v1652 = vadd.f32 0.0, %v1651
      %v1653 = vpop.f32.mrb[0].mxu0
      %1654 = vdwg.mxu0
      %v1655 = vadd.f32 %v1337, %v1652
      %1656 = vmatprep.subr.mxu0 0.0
      %1657 = vmatpush1.msra.mxu0 %v676
      %1658 = vmatprep.subr.mxu0 0.0
      %1659 = vmatpush1.msra.mxu0 %v677
      %1660 = vmatprep.subr.mxu0 0.0
      %1661 = vmatpush1.msra.mxu0 %v678
      %1662 = vmatprep.subr.mxu0 0.0
      %1663 = vmatpush1.msra.mxu0 %v679
      %1664 = vmatprep.subr.mxu0 0.0
      %1665 = vmatpush1.msra.mxu0 0.0
      %1666 = vmatprep.subr.mxu0 0.0
      %1667 = vmatpush1.msra.mxu0 0.0
      %1668 = vmatprep.subr.mxu0 0.0
      %1669 = vmatpush1.msra.mxu0 0.0
      %1670 = vmatprep.subr.mxu0 0.0
      %1671 = vmatpush1.msra.mxu0 0.0
      %1672 = vmatprep.subr.mxu0 0.0
      %1673 = vmatpush1.msra.mxu0 0.0
      %1674 = vmatprep.subr.mxu0 0.0
      %1675 = vmatpush1.msra.mxu0 0.0
      %1676 = vmatprep.subr.mxu0 0.0
      %1677 = vmatpush1.msra.mxu0 0.0
      %1678 = vmatprep.subr.mxu0 0.0
      %1679 = vmatpush1.msra.mxu0 0.0
      %1680 = vmatprep.subr.mxu0 0.0
      %1681 = vmatpush1.msra.mxu0 0.0
      %1682 = vmatprep.subr.mxu0 0.0
      %1683 = vmatpush1.msra.mxu0 0.0
      %1684 = vmatprep.subr.mxu0 0.0
      %1685 = vmatpush1.msra.mxu0 0.0
      %1686 = vmatprep.subr.mxu0 0.0
      %1687 = vmatpush1.msra.mxu0 0.0
      %1688 = vmatprep.subr.mxu0 0.0
      %1689 = vmatpush1.msra.mxu0 0.0
      %1690 = vmatprep.subr.mxu0 0.0
      %1691 = vmatpush1.msra.mxu0 0.0
      %1692 = vmatprep.subr.mxu0 0.0
      %1693 = vmatpush1.msra.mxu0 0.0
      %1694 = vmatprep.subr.mxu0 0.0
      %1695 = vmatpush1.msra.mxu0 0.0
      %1696 = vmatprep.subr.mxu0 0.0
      %1697 = vmatpush1.msra.mxu0 0.0
      %1698 = vmatprep.subr.mxu0 0.0
      %1699 = vmatpush1.msra.mxu0 0.0
      %1700 = vmatprep.subr.mxu0 0.0
      %1701 = vmatpush1.msra.mxu0 0.0
      %1702 = vmatprep.subr.mxu0 0.0
      %1703 = vmatpush1.msra.mxu0 0.0
      %1704 = vmatprep.subr.mxu0 0.0
      %1705 = vmatpush1.msra.mxu0 0.0
      %1706 = vmatprep.subr.mxu0 0.0
      %1707 = vmatpush1.msra.mxu0 0.0
      %1708 = vmatprep.subr.mxu0 0.0
      %1709 = vmatpush1.msra.mxu0 0.0
      %1710 = vmatprep.subr.mxu0 0.0
      %1711 = vmatpush1.msra.mxu0 0.0
      %1712 = vmatprep.subr.mxu0 0.0
      %1713 = vmatpush1.msra.mxu0 0.0
      %1714 = vmatprep.subr.mxu0 0.0
      %1715 = vmatpush1.msra.mxu0 0.0
      %1716 = vmatprep.subr.mxu0 0.0
      %1717 = vmatpush1.msra.mxu0 0.0
      %1718 = vmatprep.subr.mxu0 0.0
      %1719 = vmatpush1.msra.mxu0 0.0
      %1720 = vmatprep.mubr.f32.mxu0 0.0
      %1721 = vmatmul.mubr.f32.gmra.mrb[0].mxu0 %v1583
      %v1722 = vpop.f32.mrb[0].mxu0
      %v1723 = vadd.f32 %v693, %v1722
      %v1724 = vpop.f32.mrb[0].mxu0
      %1725 = vdwg.mxu0
      %1726 = vmatprep.subr.mxu0 0.0
      %1727 = vmatpush1.msra.mxu0 %v680
      %1728 = vmatprep.subr.mxu0 0.0
      %1729 = vmatpush1.msra.mxu0 %v681
      %1730 = vmatprep.subr.mxu0 0.0
      %1731 = vmatpush1.msra.mxu0 %v682
      %1732 = vmatprep.subr.mxu0 0.0
      %1733 = vmatpush1.msra.mxu0 %v683
      %1734 = vmatprep.subr.mxu0 0.0
      %1735 = vmatpush1.msra.mxu0 0.0
      %1736 = vmatprep.subr.mxu0 0.0
      %1737 = vmatpush1.msra.mxu0 0.0
      %1738 = vmatprep.subr.mxu0 0.0
      %1739 = vmatpush1.msra.mxu0 0.0
      %1740 = vmatprep.subr.mxu0 0.0
      %1741 = vmatpush1.msra.mxu0 0.0
      %1742 = vmatprep.subr.mxu0 0.0
      %1743 = vmatpush1.msra.mxu0 0.0
      %1744 = vmatprep.subr.mxu0 0.0
      %1745 = vmatpush1.msra.mxu0 0.0
      %1746 = vmatprep.subr.mxu0 0.0
      %1747 = vmatpush1.msra.mxu0 0.0
      %1748 = vmatprep.subr.mxu0 0.0
      %1749 = vmatpush1.msra.mxu0 0.0
      %1750 = vmatprep.subr.mxu0 0.0
      %1751 = vmatpush1.msra.mxu0 0.0
      %1752 = vmatprep.subr.mxu0 0.0
      %1753 = vmatpush1.msra.mxu0 0.0
      %1754 = vmatprep.subr.mxu0 0.0
      %1755 = vmatpush1.msra.mxu0 0.0
      %1756 = vmatprep.subr.mxu0 0.0
      %1757 = vmatpush1.msra.mxu0 0.0
      %1758 = vmatprep.subr.mxu0 0.0
      %1759 = vmatpush1.msra.mxu0 0.0
      %1760 = vmatprep.subr.mxu0 0.0
      %1761 = vmatpush1.msra.mxu0 0.0
      %1762 = vmatprep.subr.mxu0 0.0
      %1763 = vmatpush1.msra.mxu0 0.0
      %1764 = vmatprep.subr.mxu0 0.0
      %1765 = vmatpush1.msra.mxu0 0.0
      %1766 = vmatprep.subr.mxu0 0.0
      %1767 = vmatpush1.msra.mxu0 0.0
      %1768 = vmatprep.subr.mxu0 0.0
      %1769 = vmatpush1.msra.mxu0 0.0
      %1770 = vmatprep.subr.mxu0 0.0
      %1771 = vmatpush1.msra.mxu0 0.0
      %1772 = vmatprep.subr.mxu0 0.0
      %1773 = vmatpush1.msra.mxu0 0.0
      %1774 = vmatprep.subr.mxu0 0.0
      %1775 = vmatpush1.msra.mxu0 0.0
      %1776 = vmatprep.subr.mxu0 0.0
      %1777 = vmatpush1.msra.mxu0 0.0
      %1778 = vmatprep.subr.mxu0 0.0
      %1779 = vmatpush1.msra.mxu0 0.0
      %1780 = vmatprep.subr.mxu0 0.0
      %1781 = vmatpush1.msra.mxu0 0.0
      %1782 = vmatprep.subr.mxu0 0.0
      %1783 = vmatpush1.msra.mxu0 0.0
      %1784 = vmatprep.subr.mxu0 0.0
      %1785 = vmatpush1.msra.mxu0 0.0
      %1786 = vmatprep.subr.mxu0 0.0
      %1787 = vmatpush1.msra.mxu0 0.0
      %1788 = vmatprep.subr.mxu0 0.0
      %1789 = vmatpush1.msra.mxu0 0.0
      %1790 = vmatprep.mubr.f32.mxu0 0.0
      %1791 = vmatmul.mubr.f32.gmra.mrb[0].mxu0 %v1583
      %v1792 = vpop.f32.mrb[0].mxu0
      %v1793 = vadd.f32 %v700, %v1792
      %v1794 = vpop.f32.mrb[0].mxu0
      %1795 = vdwg.mxu0
      %1796 = vmatprep.subr.mxu0 0.0
      %1797 = vmatpush1.msra.mxu0 %v684
      %1798 = vmatprep.subr.mxu0 0.0
      %1799 = vmatpush1.msra.mxu0 %v685
      %1800 = vmatprep.subr.mxu0 0.0
      %1801 = vmatpush1.msra.mxu0 %v686
      %1802 = vmatprep.subr.mxu0 0.0
      %1803 = vmatpush1.msra.mxu0 %v687
      %1804 = vmatprep.subr.mxu0 0.0
      %1805 = vmatpush1.msra.mxu0 0.0
      %1806 = vmatprep.subr.mxu0 0.0
      %1807 = vmatpush1.msra.mxu0 0.0
      %1808 = vmatprep.subr.mxu0 0.0
      %1809 = vmatpush1.msra.mxu0 0.0
      %1810 = vmatprep.subr.mxu0 0.0
      %1811 = vmatpush1.msra.mxu0 0.0
      %1812 = vmatprep.subr.mxu0 0.0
      %1813 = vmatpush1.msra.mxu0 0.0
      %1814 = vmatprep.subr.mxu0 0.0
      %1815 = vmatpush1.msra.mxu0 0.0
      %1816 = vmatprep.subr.mxu0 0.0
      %1817 = vmatpush1.msra.mxu0 0.0
      %1818 = vmatprep.subr.mxu0 0.0
      %1819 = vmatpush1.msra.mxu0 0.0
      %1820 = vmatprep.subr.mxu0 0.0
      %1821 = vmatpush1.msra.mxu0 0.0
      %1822 = vmatprep.subr.mxu0 0.0
      %1823 = vmatpush1.msra.mxu0 0.0
      %1824 = vmatprep.subr.mxu0 0.0
      %1825 = vmatpush1.msra.mxu0 0.0
      %1826 = vmatprep.subr.mxu0 0.0
      %1827 = vmatpush1.msra.mxu0 0.0
      %1828 = vmatprep.subr.mxu0 0.0
      %1829 = vmatpush1.msra.mxu0 0.0
      %1830 = vmatprep.subr.mxu0 0.0
      %1831 = vmatpush1.msra.mxu0 0.0
      %1832 = vmatprep.subr.mxu0 0.0
      %1833 = vmatpush1.msra.mxu0 0.0
      %1834 = vmatprep.subr.mxu0 0.0
      %1835 = vmatpush1.msra.mxu0 0.0
      %1836 = vmatprep.subr.mxu0 0.0
      %1837 = vmatpush1.msra.mxu0 0.0
      %1838 = vmatprep.subr.mxu0 0.0
      %1839 = vmatpush1.msra.mxu0 0.0
      %1840 = vmatprep.subr.mxu0 0.0
      %1841 = vmatpush1.msra.mxu0 0.0
      %1842 = vmatprep.subr.mxu0 0.0
      %1843 = vmatpush1.msra.mxu0 0.0
      %1844 = vmatprep.subr.mxu0 0.0
      %1845 = vmatpush1.msra.mxu0 0.0
      %1846 = vmatprep.subr.mxu0 0.0
      %1847 = vmatpush1.msra.mxu0 0.0
      %1848 = vmatprep.subr.mxu0 0.0
      %1849 = vmatpush1.msra.mxu0 0.0
      %1850 = vmatprep.subr.mxu0 0.0
      %1851 = vmatpush1.msra.mxu0 0.0
      %1852 = vmatprep.subr.mxu0 0.0
      %1853 = vmatpush1.msra.mxu0 0.0
      %1854 = vmatprep.subr.mxu0 0.0
      %1855 = vmatpush1.msra.mxu0 0.0
      %1856 = vmatprep.subr.mxu0 0.0
      %1857 = vmatpush1.msra.mxu0 0.0
      %1858 = vmatprep.subr.mxu0 0.0
      %1859 = vmatpush1.msra.mxu0 0.0
      %1860 = vmatprep.mubr.f32.mxu0 0.0
      %1861 = vmatmul.mubr.f32.gmra.mrb[0].mxu0 %v1583
      %v1862 = vpop.f32.mrb[0].mxu0
      %v1863 = vadd.f32 %v707, %v1862
      %v1864 = vpop.f32.mrb[0].mxu0
      %1865 = vdwg.mxu0
      %s1866 = scalar_lea.vmem [#allocation2], 6
      %v1867 = vld [vmem:[%s1866] sm:$0x3]
      %v1868 = vadd.f32 %v1867, %v1723
      %v1869 = vxor.u32 %v1868, 2147483648
      %v1870 = vmul.f32 %v1869, 1.442695
      %v1871 = vpow.pop %v1870
      %v1872 = vadd.f32 %v1871, 1.0
      %v1873 = vrcp.pop %v1872
      %v1874 = vmul.f32 1.0, %v1873
      %s1875 = scalar_lea.vmem [#allocation3], 6
      %v1876 = vld [vmem:[%s1875] sm:$0x3]
      %v1877 = vadd.f32 %v1876, %v1793
      %v1878 = vxor.u32 %v1877, 2147483648
      %v1879 = vmul.f32 %v1878, 1.442695
      %v1880 = vpow.pop %v1879
      %v1881 = vadd.f32 %v1880, 1.0
      %v1882 = vrcp.pop %v1881
      %v1883 = vmul.f32 1.0, %v1882
      %s1884 = scalar_lea.vmem [#allocation4], 6
      %v1885 = vld [vmem:[%s1884] sm:$0x3]
      %v1886 = vmul.f32 %v1874, %v1863
      %v1887 = vadd.f32 %v1885, %v1886
      %v1888 = vtanh.pop %v1887
      %v1889 = vsub.f32 1.0, %v1883
      %v1890 = vmul.f32 %v1889, %v1888
      %v1891 = vmul.f32 %v1883, %v1576
      %v1892 = vadd.f32 %v1890, %v1891
      %s1893 = scalar_lea.vmem %s9, 96
      %v1894 = vld [vmem:[%s1893] sm:$0xff]
      %v1895 = vld [vmem:[%s1893 + $0x8] sm:$0xff]
      %v1896 = vld [vmem:[%s1893 + $0x10] sm:$0xff]
      %v1897 = vld [vmem:[%s1893 + $0x18] sm:$0xff]
      %v1899 = vsel %vm710, %v1892, 0
      %1901 = vmatprep.subr.mxu0 0.0
      %1902 = vmatpush1.msra.mxu0 %v1894
      %1903 = vmatprep.subr.mxu0 0.0
      %1904 = vmatpush1.msra.mxu0 %v1895
      %1905 = vmatprep.subr.mxu0 0.0
      %1906 = vmatpush1.msra.mxu0 %v1896
      %1907 = vmatprep.subr.mxu0 0.0
      %1908 = vmatpush1.msra.mxu0 %v1897
      %1909 = vmatprep.subr.mxu0 0.0
      %1910 = vmatpush1.msra.mxu0 0.0
      %1911 = vmatprep.subr.mxu0 0.0
      %1912 = vmatpush1.msra.mxu0 0.0
      %1913 = vmatprep.subr.mxu0 0.0
      %1914 = vmatpush1.msra.mxu0 0.0
      %1915 = vmatprep.subr.mxu0 0.0
      %1916 = vmatpush1.msra.mxu0 0.0
      %1917 = vmatprep.subr.mxu0 0.0
      %1918 = vmatpush1.msra.mxu0 0.0
      %1919 = vmatprep.subr.mxu0 0.0
      %1920 = vmatpush1.msra.mxu0 0.0
      %1921 = vmatprep.subr.mxu0 0.0
      %1922 = vmatpush1.msra.mxu0 0.0
      %1923 = vmatprep.subr.mxu0 0.0
      %1924 = vmatpush1.msra.mxu0 0.0
      %1925 = vmatprep.subr.mxu0 0.0
      %1926 = vmatpush1.msra.mxu0 0.0
      %1927 = vmatprep.subr.mxu0 0.0
      %1928 = vmatpush1.msra.mxu0 0.0
      %1929 = vmatprep.subr.mxu0 0.0
      %1930 = vmatpush1.msra.mxu0 0.0
      %1931 = vmatprep.subr.mxu0 0.0
      %1932 = vmatpush1.msra.mxu0 0.0
      %1933 = vmatprep.subr.mxu0 0.0
      %1934 = vmatpush1.msra.mxu0 0.0
      %1935 = vmatprep.subr.mxu0 0.0
      %1936 = vmatpush1.msra.mxu0 0.0
      %1937 = vmatprep.subr.mxu0 0.0
      %1938 = vmatpush1.msra.mxu0 0.0
      %1939 = vmatprep.subr.mxu0 0.0
      %1940 = vmatpush1.msra.mxu0 0.0
      %1941 = vmatprep.subr.mxu0 0.0
      %1942 = vmatpush1.msra.mxu0 0.0
      %1943 = vmatprep.subr.mxu0 0.0
      %1944 = vmatpush1.msra.mxu0 0.0
      %1945 = vmatprep.subr.mxu0 0.0
      %1946 = vmatpush1.msra.mxu0 0.0
      %1947 = vmatprep.subr.mxu0 0.0
      %1948 = vmatpush1.msra.mxu0 0.0
      %1949 = vmatprep.subr.mxu0 0.0
      %1950 = vmatpush1.msra.mxu0 0.0
      %1951 = vmatprep.subr.mxu0 0.0
      %1952 = vmatpush1.msra.mxu0 0.0
      %1953 = vmatprep.subr.mxu0 0.0
      %1954 = vmatpush1.msra.mxu0 0.0
      %1955 = vmatprep.subr.mxu0 0.0
      %1956 = vmatpush1.msra.mxu0 0.0
      %1957 = vmatprep.subr.mxu0 0.0
      %1958 = vmatpush1.msra.mxu0 0.0
      %1959 = vmatprep.subr.mxu0 0.0
      %1960 = vmatpush1.msra.mxu0 0.0
      %1961 = vmatprep.subr.mxu0 0.0
      %1962 = vmatpush1.msra.mxu0 0.0
      %1963 = vmatprep.subr.mxu0 0.0
      %1964 = vmatpush1.msra.mxu0 0.0
      %1965 = vmatprep.mubr.f32.mxu0 0.0
      %1966 = vmatmul.mubr.f32.gmra.mrb[0].mxu0 %v1899
      %v1967 = vpop.f32.mrb[0].mxu0
      %v1968 = vadd.f32 0.0, %v1967
      %v1969 = vpop.f32.mrb[0].mxu0
      %1970 = vdwg.mxu0
      %v1971 = vadd.f32 %v1655, %v1968
      %1972 = vmatprep.subr.mxu0 0.0
      %1973 = vmatpush1.msra.mxu0 %v676
      %1974 = vmatprep.subr.mxu0 0.0
      %1975 = vmatpush1.msra.mxu0 %v677
      %1976 = vmatprep.subr.mxu0 0.0
      %1977 = vmatpush1.msra.mxu0 %v678
      %1978 = vmatprep.subr.mxu0 0.0
      %1979 = vmatpush1.msra.mxu0 %v679
      %1980 = vmatprep.subr.mxu0 0.0
      %1981 = vmatpush1.msra.mxu0 0.0
      %1982 = vmatprep.subr.mxu0 0.0
      %1983 = vmatpush1.msra.mxu0 0.0
      %1984 = vmatprep.subr.mxu0 0.0
      %1985 = vmatpush1.msra.mxu0 0.0
      %1986 = vmatprep.subr.mxu0 0.0
      %1987 = vmatpush1.msra.mxu0 0.0
      %1988 = vmatprep.subr.mxu0 0.0
      %1989 = vmatpush1.msra.mxu0 0.0
      %1990 = vmatprep.subr.mxu0 0.0
      %1991 = vmatpush1.msra.mxu0 0.0
      %1992 = vmatprep.subr.mxu0 0.0
      %1993 = vmatpush1.msra.mxu0 0.0
      %1994 = vmatprep.subr.mxu0 0.0
      %1995 = vmatpush1.msra.mxu0 0.0
      %1996 = vmatprep.subr.mxu0 0.0
      %1997 = vmatpush1.msra.mxu0 0.0
      %1998 = vmatprep.subr.mxu0 0.0
      %1999 = vmatpush1.msra.mxu0 0.0
      %2000 = vmatprep.subr.mxu0 0.0
      %2001 = vmatpush1.msra.mxu0 0.0
      %2002 = vmatprep.subr.mxu0 0.0
      %2003 = vmatpush1.msra.mxu0 0.0
      %2004 = vmatprep.subr.mxu0 0.0
      %2005 = vmatpush1.msra.mxu0 0.0
      %2006 = vmatprep.subr.mxu0 0.0
      %2007 = vmatpush1.msra.mxu0 0.0
      %2008 = vmatprep.subr.mxu0 0.0
      %2009 = vmatpush1.msra.mxu0 0.0
      %2010 = vmatprep.subr.mxu0 0.0
      %2011 = vmatpush1.msra.mxu0 0.0
      %2012 = vmatprep.subr.mxu0 0.0
      %2013 = vmatpush1.msra.mxu0 0.0
      %2014 = vmatprep.subr.mxu0 0.0
      %2015 = vmatpush1.msra.mxu0 0.0
      %2016 = vmatprep.subr.mxu0 0.0
      %2017 = vmatpush1.msra.mxu0 0.0
      %2018 = vmatprep.subr.mxu0 0.0
      %2019 = vmatpush1.msra.mxu0 0.0
      %2020 = vmatprep.subr.mxu0 0.0
      %2021 = vmatpush1.msra.mxu0 0.0
      %2022 = vmatprep.subr.mxu0 0.0
      %2023 = vmatpush1.msra.mxu0 0.0
      %2024 = vmatprep.subr.mxu0 0.0
      %2025 = vmatpush1.msra.mxu0 0.0
      %2026 = vmatprep.subr.mxu0 0.0
      %2027 = vmatpush1.msra.mxu0 0.0
      %2028 = vmatprep.subr.mxu0 0.0
      %2029 = vmatpush1.msra.mxu0 0.0
      %2030 = vmatprep.subr.mxu0 0.0
      %2031 = vmatpush1.msra.mxu0 0.0
      %2032 = vmatprep.subr.mxu0 0.0
      %2033 = vmatpush1.msra.mxu0 0.0
      %2034 = vmatprep.subr.mxu0 0.0
      %2035 = vmatpush1.msra.mxu0 0.0
      %2036 = vmatprep.mubr.f32.mxu0 0.0
      %2037 = vmatmul.mubr.f32.gmra.mrb[0].mxu0 %v1899
      %v2038 = vpop.f32.mrb[0].mxu0
      %v2039 = vadd.f32 %v693, %v2038
      %v2040 = vpop.f32.mrb[0].mxu0
      %2041 = vdwg.mxu0
      %2042 = vmatprep.subr.mxu0 0.0
      %2043 = vmatpush1.msra.mxu0 %v680
      %2044 = vmatprep.subr.mxu0 0.0
      %2045 = vmatpush1.msra.mxu0 %v681
      %2046 = vmatprep.subr.mxu0 0.0
      %2047 = vmatpush1.msra.mxu0 %v682
      %2048 = vmatprep.subr.mxu0 0.0
      %2049 = vmatpush1.msra.mxu0 %v683
      %2050 = vmatprep.subr.mxu0 0.0
      %2051 = vmatpush1.msra.mxu0 0.0
      %2052 = vmatprep.subr.mxu0 0.0
      %2053 = vmatpush1.msra.mxu0 0.0
      %2054 = vmatprep.subr.mxu0 0.0
      %2055 = vmatpush1.msra.mxu0 0.0
      %2056 = vmatprep.subr.mxu0 0.0
      %2057 = vmatpush1.msra.mxu0 0.0
      %2058 = vmatprep.subr.mxu0 0.0
      %2059 = vmatpush1.msra.mxu0 0.0
      %2060 = vmatprep.subr.mxu0 0.0
      %2061 = vmatpush1.msra.mxu0 0.0
      %2062 = vmatprep.subr.mxu0 0.0
      %2063 = vmatpush1.msra.mxu0 0.0
      %2064 = vmatprep.subr.mxu0 0.0
      %2065 = vmatpush1.msra.mxu0 0.0
      %2066 = vmatprep.subr.mxu0 0.0
      %2067 = vmatpush1.msra.mxu0 0.0
      %2068 = vmatprep.subr.mxu0 0.0
      %2069 = vmatpush1.msra.mxu0 0.0
      %2070 = vmatprep.subr.mxu0 0.0
      %2071 = vmatpush1.msra.mxu0 0.0
      %2072 = vmatprep.subr.mxu0 0.0
      %2073 = vmatpush1.msra.mxu0 0.0
      %2074 = vmatprep.subr.mxu0 0.0
      %2075 = vmatpush1.msra.mxu0 0.0
      %2076 = vmatprep.subr.mxu0 0.0
      %2077 = vmatpush1.msra.mxu0 0.0
      %2078 = vmatprep.subr.mxu0 0.0
      %2079 = vmatpush1.msra.mxu0 0.0
      %2080 = vmatprep.subr.mxu0 0.0
      %2081 = vmatpush1.msra.mxu0 0.0
      %2082 = vmatprep.subr.mxu0 0.0
      %2083 = vmatpush1.msra.mxu0 0.0
      %2084 = vmatprep.subr.mxu0 0.0
      %2085 = vmatpush1.msra.mxu0 0.0
      %2086 = vmatprep.subr.mxu0 0.0
      %2087 = vmatpush1.msra.mxu0 0.0
      %2088 = vmatprep.subr.mxu0 0.0
      %2089 = vmatpush1.msra.mxu0 0.0
      %2090 = vmatprep.subr.mxu0 0.0
      %2091 = vmatpush1.msra.mxu0 0.0
      %2092 = vmatprep.subr.mxu0 0.0
      %2093 = vmatpush1.msra.mxu0 0.0
      %2094 = vmatprep.subr.mxu0 0.0
      %2095 = vmatpush1.msra.mxu0 0.0
      %2096 = vmatprep.subr.mxu0 0.0
      %2097 = vmatpush1.msra.mxu0 0.0
      %2098 = vmatprep.subr.mxu0 0.0
      %2099 = vmatpush1.msra.mxu0 0.0
      %2100 = vmatprep.subr.mxu0 0.0
      %2101 = vmatpush1.msra.mxu0 0.0
      %2102 = vmatprep.subr.mxu0 0.0
      %2103 = vmatpush1.msra.mxu0 0.0
      %2104 = vmatprep.subr.mxu0 0.0
      %2105 = vmatpush1.msra.mxu0 0.0
      %2106 = vmatprep.mubr.f32.mxu0 0.0
      %2107 = vmatmul.mubr.f32.gmra.mrb[0].mxu0 %v1899
      %v2108 = vpop.f32.mrb[0].mxu0
      %v2109 = vadd.f32 %v700, %v2108
      %v2110 = vpop.f32.mrb[0].mxu0
      %2111 = vdwg.mxu0
      %2112 = vmatprep.subr.mxu0 0.0
      %2113 = vmatpush1.msra.mxu0 %v684
      %2114 = vmatprep.subr.mxu0 0.0
      %2115 = vmatpush1.msra.mxu0 %v685
      %2116 = vmatprep.subr.mxu0 0.0
      %2117 = vmatpush1.msra.mxu0 %v686
      %2118 = vmatprep.subr.mxu0 0.0
      %2119 = vmatpush1.msra.mxu0 %v687
      %2120 = vmatprep.subr.mxu0 0.0
      %2121 = vmatpush1.msra.mxu0 0.0
      %2122 = vmatprep.subr.mxu0 0.0
      %2123 = vmatpush1.msra.mxu0 0.0
      %2124 = vmatprep.subr.mxu0 0.0
      %2125 = vmatpush1.msra.mxu0 0.0
      %2126 = vmatprep.subr.mxu0 0.0
      %2127 = vmatpush1.msra.mxu0 0.0
      %2128 = vmatprep.subr.mxu0 0.0
      %2129 = vmatpush1.msra.mxu0 0.0
      %2130 = vmatprep.subr.mxu0 0.0
      %2131 = vmatpush1.msra.mxu0 0.0
      %2132 = vmatprep.subr.mxu0 0.0
      %2133 = vmatpush1.msra.mxu0 0.0
      %2134 = vmatprep.subr.mxu0 0.0
      %2135 = vmatpush1.msra.mxu0 0.0
      %2136 = vmatprep.subr.mxu0 0.0
      %2137 = vmatpush1.msra.mxu0 0.0
      %2138 = vmatprep.subr.mxu0 0.0
      %2139 = vmatpush1.msra.mxu0 0.0
      %2140 = vmatprep.subr.mxu0 0.0
      %2141 = vmatpush1.msra.mxu0 0.0
      %2142 = vmatprep.subr.mxu0 0.0
      %2143 = vmatpush1.msra.mxu0 0.0
      %2144 = vmatprep.subr.mxu0 0.0
      %2145 = vmatpush1.msra.mxu0 0.0
      %2146 = vmatprep.subr.mxu0 0.0
      %2147 = vmatpush1.msra.mxu0 0.0
      %2148 = vmatprep.subr.mxu0 0.0
      %2149 = vmatpush1.msra.mxu0 0.0
      %2150 = vmatprep.subr.mxu0 0.0
      %2151 = vmatpush1.msra.mxu0 0.0
      %2152 = vmatprep.subr.mxu0 0.0
      %2153 = vmatpush1.msra.mxu0 0.0
      %2154 = vmatprep.subr.mxu0 0.0
      %2155 = vmatpush1.msra.mxu0 0.0
      %2156 = vmatprep.subr.mxu0 0.0
      %2157 = vmatpush1.msra.mxu0 0.0
      %2158 = vmatprep.subr.mxu0 0.0
      %2159 = vmatpush1.msra.mxu0 0.0
      %2160 = vmatprep.subr.mxu0 0.0
      %2161 = vmatpush1.msra.mxu0 0.0
      %2162 = vmatprep.subr.mxu0 0.0
      %2163 = vmatpush1.msra.mxu0 0.0
      %2164 = vmatprep.subr.mxu0 0.0
      %2165 = vmatpush1.msra.mxu0 0.0
      %2166 = vmatprep.subr.mxu0 0.0
      %2167 = vmatpush1.msra.mxu0 0.0
      %2168 = vmatprep.subr.mxu0 0.0
      %2169 = vmatpush1.msra.mxu0 0.0
      %2170 = vmatprep.subr.mxu0 0.0
      %2171 = vmatpush1.msra.mxu0 0.0
      %2172 = vmatprep.subr.mxu0 0.0
      %2173 = vmatpush1.msra.mxu0 0.0
      %2174 = vmatprep.subr.mxu0 0.0
      %2175 = vmatpush1.msra.mxu0 0.0
      %2176 = vmatprep.mubr.f32.mxu0 0.0
      %2177 = vmatmul.mubr.f32.gmra.mrb[0].mxu0 %v1899
      %v2178 = vpop.f32.mrb[0].mxu0
      %v2179 = vadd.f32 %v707, %v2178
      %v2180 = vpop.f32.mrb[0].mxu0
      %2181 = vdwg.mxu0
      %s2182 = scalar_lea.vmem [#allocation2], 8
      %v2183 = vld [vmem:[%s2182] sm:$0x3]
      %v2184 = vadd.f32 %v2183, %v2039
      %v2185 = vxor.u32 %v2184, 2147483648
      %v2186 = vmul.f32 %v2185, 1.442695
      %v2187 = vpow.pop %v2186
      %v2188 = vadd.f32 %v2187, 1.0
      %v2189 = vrcp.pop %v2188
      %v2190 = vmul.f32 1.0, %v2189
      %s2191 = scalar_lea.vmem [#allocation3], 8
      %v2192 = vld [vmem:[%s2191] sm:$0x3]
      %v2193 = vadd.f32 %v2192, %v2109
      %v2194 = vxor.u32 %v2193, 2147483648
      %v2195 = vmul.f32 %v2194, 1.442695
      %v2196 = vpow.pop %v2195
      %v2197 = vadd.f32 %v2196, 1.0
      %v2198 = vrcp.pop %v2197
      %v2199 = vmul.f32 1.0, %v2198
      %s2200 = scalar_lea.vmem [#allocation4], 8
      %v2201 = vld [vmem:[%s2200] sm:$0x3]
      %v2202 = vmul.f32 %v2190, %v2179
      %v2203 = vadd.f32 %v2201, %v2202
      %v2204 = vtanh.pop %v2203
      %v2205 = vsub.f32 1.0, %v2199
      %v2206 = vmul.f32 %v2205, %v2204
      %v2207 = vmul.f32 %v2199, %v1892
      %v2208 = vadd.f32 %v2206, %v2207
      %s2209 = scalar_lea.vmem %s9, 128
      %v2210 = vld [vmem:[%s2209] sm:$0xff]
      %v2211 = vld [vmem:[%s2209 + $0x8] sm:$0xff]
      %v2212 = vld [vmem:[%s2209 + $0x10] sm:$0xff]
      %v2213 = vld [vmem:[%s2209 + $0x18] sm:$0xff]
      %v2215 = vsel %vm710, %v2208, 0
      %2217 = vmatprep.subr.mxu0 0.0
      %2218 = vmatpush1.msra.mxu0 %v2210
      %2219 = vmatprep.subr.mxu0 0.0
      %2220 = vmatpush1.msra.mxu0 %v2211
      %2221 = vmatprep.subr.mxu0 0.0
      %2222 = vmatpush1.msra.mxu0 %v2212
      %2223 = vmatprep.subr.mxu0 0.0
      %2224 = vmatpush1.msra.mxu0 %v2213
      %2225 = vmatprep.subr.mxu0 0.0
      %2226 = vmatpush1.msra.mxu0 0.0
      %2227 = vmatprep.subr.mxu0 0.0
      %2228 = vmatpush1.msra.mxu0 0.0
      %2229 = vmatprep.subr.mxu0 0.0
      %2230 = vmatpush1.msra.mxu0 0.0
      %2231 = vmatprep.subr.mxu0 0.0
      %2232 = vmatpush1.msra.mxu0 0.0
      %2233 = vmatprep.subr.mxu0 0.0
      %2234 = vmatpush1.msra.mxu0 0.0
      %2235 = vmatprep.subr.mxu0 0.0
      %2236 = vmatpush1.msra.mxu0 0.0
      %2237 = vmatprep.subr.mxu0 0.0
      %2238 = vmatpush1.msra.mxu0 0.0
      %2239 = vmatprep.subr.mxu0 0.0
      %2240 = vmatpush1.msra.mxu0 0.0
      %2241 = vmatprep.subr.mxu0 0.0
      %2242 = vmatpush1.msra.mxu0 0.0
      %2243 = vmatprep.subr.mxu0 0.0
      %2244 = vmatpush1.msra.mxu0 0.0
      %2245 = vmatprep.subr.mxu0 0.0
      %2246 = vmatpush1.msra.mxu0 0.0
      %2247 = vmatprep.subr.mxu0 0.0
      %2248 = vmatpush1.msra.mxu0 0.0
      %2249 = vmatprep.subr.mxu0 0.0
      %2250 = vmatpush1.msra.mxu0 0.0
      %2251 = vmatprep.subr.mxu0 0.0
      %2252 = vmatpush1.msra.mxu0 0.0
      %2253 = vmatprep.subr.mxu0 0.0
      %2254 = vmatpush1.msra.mxu0 0.0
      %2255 = vmatprep.subr.mxu0 0.0
      %2256 = vmatpush1.msra.mxu0 0.0
      %2257 = vmatprep.subr.mxu0 0.0
      %2258 = vmatpush1.msra.mxu0 0.0
      %2259 = vmatprep.subr.mxu0 0.0
      %2260 = vmatpush1.msra.mxu0 0.0
      %2261 = vmatprep.subr.mxu0 0.0
      %2262 = vmatpush1.msra.mxu0 0.0
      %2263 = vmatprep.subr.mxu0 0.0
      %2264 = vmatpush1.msra.mxu0 0.0
      %2265 = vmatprep.subr.mxu0 0.0
      %2266 = vmatpush1.msra.mxu0 0.0
      %2267 = vmatprep.subr.mxu0 0.0
      %2268 = vmatpush1.msra.mxu0 0.0
      %2269 = vmatprep.subr.mxu0 0.0
      %2270 = vmatpush1.msra.mxu0 0.0
      %2271 = vmatprep.subr.mxu0 0.0
      %2272 = vmatpush1.msra.mxu0 0.0
      %2273 = vmatprep.subr.mxu0 0.0
      %2274 = vmatpush1.msra.mxu0 0.0
      %2275 = vmatprep.subr.mxu0 0.0
      %2276 = vmatpush1.msra.mxu0 0.0
      %2277 = vmatprep.subr.mxu0 0.0
      %2278 = vmatpush1.msra.mxu0 0.0
      %2279 = vmatprep.subr.mxu0 0.0
      %2280 = vmatpush1.msra.mxu0 0.0
      %2281 = vmatprep.mubr.f32.mxu0 0.0
      %2282 = vmatmul.mubr.f32.gmra.mrb[0].mxu0 %v2215
      %v2283 = vpop.f32.mrb[0].mxu0
      %v2284 = vadd.f32 0.0, %v2283
      %v2285 = vpop.f32.mrb[0].mxu0
      %2286 = vdwg.mxu0
      %v2287 = vadd.f32 %v1971, %v2284
      %2288 = vmatprep.subr.mxu0 0.0
      %2289 = vmatpush1.msra.mxu0 %v676
      %2290 = vmatprep.subr.mxu0 0.0
      %2291 = vmatpush1.msra.mxu0 %v677
      %2292 = vmatprep.subr.mxu0 0.0
      %2293 = vmatpush1.msra.mxu0 %v678
      %2294 = vmatprep.subr.mxu0 0.0
      %2295 = vmatpush1.msra.mxu0 %v679
      %2296 = vmatprep.subr.mxu0 0.0
      %2297 = vmatpush1.msra.mxu0 0.0
      %2298 = vmatprep.subr.mxu0 0.0
      %2299 = vmatpush1.msra.mxu0 0.0
      %2300 = vmatprep.subr.mxu0 0.0
      %2301 = vmatpush1.msra.mxu0 0.0
      %2302 = vmatprep.subr.mxu0 0.0
      %2303 = vmatpush1.msra.mxu0 0.0
      %2304 = vmatprep.subr.mxu0 0.0
      %2305 = vmatpush1.msra.mxu0 0.0
      %2306 = vmatprep.subr.mxu0 0.0
      %2307 = vmatpush1.msra.mxu0 0.0
      %2308 = vmatprep.subr.mxu0 0.0
      %2309 = vmatpush1.msra.mxu0 0.0
      %2310 = vmatprep.subr.mxu0 0.0
      %2311 = vmatpush1.msra.mxu0 0.0
      %2312 = vmatprep.subr.mxu0 0.0
      %2313 = vmatpush1.msra.mxu0 0.0
      %2314 = vmatprep.subr.mxu0 0.0
      %2315 = vmatpush1.msra.mxu0 0.0
      %2316 = vmatprep.subr.mxu0 0.0
      %2317 = vmatpush1.msra.mxu0 0.0
      %2318 = vmatprep.subr.mxu0 0.0
      %2319 = vmatpush1.msra.mxu0 0.0
      %2320 = vmatprep.subr.mxu0 0.0
      %2321 = vmatpush1.msra.mxu0 0.0
      %2322 = vmatprep.subr.mxu0 0.0
      %2323 = vmatpush1.msra.mxu0 0.0
      %2324 = vmatprep.subr.mxu0 0.0
      %2325 = vmatpush1.msra.mxu0 0.0
      %2326 = vmatprep.subr.mxu0 0.0
      %2327 = vmatpush1.msra.mxu0 0.0
      %2328 = vmatprep.subr.mxu0 0.0
      %2329 = vmatpush1.msra.mxu0 0.0
      %2330 = vmatprep.subr.mxu0 0.0
      %2331 = vmatpush1.msra.mxu0 0.0
      %2332 = vmatprep.subr.mxu0 0.0
      %2333 = vmatpush1.msra.mxu0 0.0
      %2334 = vmatprep.subr.mxu0 0.0
      %2335 = vmatpush1.msra.mxu0 0.0
      %2336 = vmatprep.subr.mxu0 0.0
      %2337 = vmatpush1.msra.mxu0 0.0
      %2338 = vmatprep.subr.mxu0 0.0
      %2339 = vmatpush1.msra.mxu0 0.0
      %2340 = vmatprep.subr.mxu0 0.0
      %2341 = vmatpush1.msra.mxu0 0.0
      %2342 = vmatprep.subr.mxu0 0.0
      %2343 = vmatpush1.msra.mxu0 0.0
      %2344 = vmatprep.subr.mxu0 0.0
      %2345 = vmatpush1.msra.mxu0 0.0
      %2346 = vmatprep.subr.mxu0 0.0
      %2347 = vmatpush1.msra.mxu0 0.0
      %2348 = vmatprep.subr.mxu0 0.0
      %2349 = vmatpush1.msra.mxu0 0.0
      %2350 = vmatprep.subr.mxu0 0.0
      %2351 = vmatpush1.msra.mxu0 0.0
      %2352 = vmatprep.mubr.f32.mxu0 0.0
      %2353 = vmatmul.mubr.f32.gmra.mrb[0].mxu0 %v2215
      %v2354 = vpop.f32.mrb[0].mxu0
      %v2355 = vadd.f32 %v693, %v2354
      %v2356 = vpop.f32.mrb[0].mxu0
      %2357 = vdwg.mxu0
      %2358 = vmatprep.subr.mxu0 0.0
      %2359 = vmatpush1.msra.mxu0 %v680
      %2360 = vmatprep.subr.mxu0 0.0
      %2361 = vmatpush1.msra.mxu0 %v681
      %2362 = vmatprep.subr.mxu0 0.0
      %2363 = vmatpush1.msra.mxu0 %v682
      %2364 = vmatprep.subr.mxu0 0.0
      %2365 = vmatpush1.msra.mxu0 %v683
      %2366 = vmatprep.subr.mxu0 0.0
      %2367 = vmatpush1.msra.mxu0 0.0
      %2368 = vmatprep.subr.mxu0 0.0
      %2369 = vmatpush1.msra.mxu0 0.0
      %2370 = vmatprep.subr.mxu0 0.0
      %2371 = vmatpush1.msra.mxu0 0.0
      %2372 = vmatprep.subr.mxu0 0.0
      %2373 = vmatpush1.msra.mxu0 0.0
      %2374 = vmatprep.subr.mxu0 0.0
      %2375 = vmatpush1.msra.mxu0 0.0
      %2376 = vmatprep.subr.mxu0 0.0
      %2377 = vmatpush1.msra.mxu0 0.0
      %2378 = vmatprep.subr.mxu0 0.0
      %2379 = vmatpush1.msra.mxu0 0.0
      %2380 = vmatprep.subr.mxu0 0.0
      %2381 = vmatpush1.msra.mxu0 0.0
      %2382 = vmatprep.subr.mxu0 0.0
      %2383 = vmatpush1.msra.mxu0 0.0
      %2384 = vmatprep.subr.mxu0 0.0
      %2385 = vmatpush1.msra.mxu0 0.0
      %2386 = vmatprep.subr.mxu0 0.0
      %2387 = vmatpush1.msra.mxu0 0.0
      %2388 = vmatprep.subr.mxu0 0.0
      %2389 = vmatpush1.msra.mxu0 0.0
      %2390 = vmatprep.subr.mxu0 0.0
      %2391 = vmatpush1.msra.mxu0 0.0
      %2392 = vmatprep.subr.mxu0 0.0
      %2393 = vmatpush1.msra.mxu0 0.0
      %2394 = vmatprep.subr.mxu0 0.0
      %2395 = vmatpush1.msra.mxu0 0.0
      %2396 = vmatprep.subr.mxu0 0.0
      %2397 = vmatpush1.msra.mxu0 0.0
      %2398 = vmatprep.subr.mxu0 0.0
      %2399 = vmatpush1.msra.mxu0 0.0
      %2400 = vmatprep.subr.mxu0 0.0
      %2401 = vmatpush1.msra.mxu0 0.0
      %2402 = vmatprep.subr.mxu0 0.0
      %2403 = vmatpush1.msra.mxu0 0.0
      %2404 = vmatprep.subr.mxu0 0.0
      %2405 = vmatpush1.msra.mxu0 0.0
      %2406 = vmatprep.subr.mxu0 0.0
      %2407 = vmatpush1.msra.mxu0 0.0
      %2408 = vmatprep.subr.mxu0 0.0
      %2409 = vmatpush1.msra.mxu0 0.0
      %2410 = vmatprep.subr.mxu0 0.0
      %2411 = vmatpush1.msra.mxu0 0.0
      %2412 = vmatprep.subr.mxu0 0.0
      %2413 = vmatpush1.msra.mxu0 0.0
      %2414 = vmatprep.subr.mxu0 0.0
      %2415 = vmatpush1.msra.mxu0 0.0
      %2416 = vmatprep.subr.mxu0 0.0
      %2417 = vmatpush1.msra.mxu0 0.0
      %2418 = vmatprep.subr.mxu0 0.0
      %2419 = vmatpush1.msra.mxu0 0.0
      %2420 = vmatprep.subr.mxu0 0.0
      %2421 = vmatpush1.msra.mxu0 0.0
      %2422 = vmatprep.mubr.f32.mxu0 0.0
      %2423 = vmatmul.mubr.f32.gmra.mrb[0].mxu0 %v2215
      %v2424 = vpop.f32.mrb[0].mxu0
      %v2425 = vadd.f32 %v700, %v2424
      %v2426 = vpop.f32.mrb[0].mxu0
      %2427 = vdwg.mxu0
      %2428 = vmatprep.subr.mxu0 0.0
      %2429 = vmatpush1.msra.mxu0 %v684
      %2430 = vmatprep.subr.mxu0 0.0
      %2431 = vmatpush1.msra.mxu0 %v685
      %2432 = vmatprep.subr.mxu0 0.0
      %2433 = vmatpush1.msra.mxu0 %v686
      %2434 = vmatprep.subr.mxu0 0.0
      %2435 = vmatpush1.msra.mxu0 %v687
      %2436 = vmatprep.subr.mxu0 0.0
      %2437 = vmatpush1.msra.mxu0 0.0
      %2438 = vmatprep.subr.mxu0 0.0
      %2439 = vmatpush1.msra.mxu0 0.0
      %2440 = vmatprep.subr.mxu0 0.0
      %2441 = vmatpush1.msra.mxu0 0.0
      %2442 = vmatprep.subr.mxu0 0.0
      %2443 = vmatpush1.msra.mxu0 0.0
      %2444 = vmatprep.subr.mxu0 0.0
      %2445 = vmatpush1.msra.mxu0 0.0
      %2446 = vmatprep.subr.mxu0 0.0
      %2447 = vmatpush1.msra.mxu0 0.0
      %2448 = vmatprep.subr.mxu0 0.0
      %2449 = vmatpush1.msra.mxu0 0.0
      %2450 = vmatprep.subr.mxu0 0.0
      %2451 = vmatpush1.msra.mxu0 0.0
      %2452 = vmatprep.subr.mxu0 0.0
      %2453 = vmatpush1.msra.mxu0 0.0
      %2454 = vmatprep.subr.mxu0 0.0
      %2455 = vmatpush1.msra.mxu0 0.0
      %2456 = vmatprep.subr.mxu0 0.0
      %2457 = vmatpush1.msra.mxu0 0.0
      %2458 = vmatprep.subr.mxu0 0.0
      %2459 = vmatpush1.msra.mxu0 0.0
      %2460 = vmatprep.subr.mxu0 0.0
      %2461 = vmatpush1.msra.mxu0 0.0
      %2462 = vmatprep.subr.mxu0 0.0
      %2463 = vmatpush1.msra.mxu0 0.0
      %2464 = vmatprep.subr.mxu0 0.0
      %2465 = vmatpush1.msra.mxu0 0.0
      %2466 = vmatprep.subr.mxu0 0.0
      %2467 = vmatpush1.msra.mxu0 0.0
      %2468 = vmatprep.subr.mxu0 0.0
      %2469 = vmatpush1.msra.mxu0 0.0
      %2470 = vmatprep.subr.mxu0 0.0
      %2471 = vmatpush1.msra.mxu0 0.0
      %2472 = vmatprep.subr.mxu0 0.0
      %2473 = vmatpush1.msra.mxu0 0.0
      %2474 = vmatprep.subr.mxu0 0.0
      %2475 = vmatpush1.msra.mxu0 0.0
      %2476 = vmatprep.subr.mxu0 0.0
      %2477 = vmatpush1.msra.mxu0 0.0
      %2478 = vmatprep.subr.mxu0 0.0
      %2479 = vmatpush1.msra.mxu0 0.0
      %2480 = vmatprep.subr.mxu0 0.0
      %2481 = vmatpush1.msra.mxu0 0.0
      %2482 = vmatprep.subr.mxu0 0.0
      %2483 = vmatpush1.msra.mxu0 0.0
      %2484 = vmatprep.subr.mxu0 0.0
      %2485 = vmatpush1.msra.mxu0 0.0
      %2486 = vmatprep.subr.mxu0 0.0
      %2487 = vmatpush1.msra.mxu0 0.0
      %2488 = vmatprep.subr.mxu0 0.0
      %2489 = vmatpush1.msra.mxu0 0.0
      %2490 = vmatprep.subr.mxu0 0.0
      %2491 = vmatpush1.msra.mxu0 0.0
      %2492 = vmatprep.mubr.f32.mxu0 0.0
      %2493 = vmatmul.mubr.f32.gmra.mrb[0].mxu0 %v2215
      %v2494 = vpop.f32.mrb[0].mxu0
      %v2495 = vadd.f32 %v707, %v2494
      %v2496 = vpop.f32.mrb[0].mxu0
      %2497 = vdwg.mxu0
      %s2498 = scalar_lea.vmem [#allocation2], 10
      %v2499 = vld [vmem:[%s2498] sm:$0x3]
      %v2500 = vadd.f32 %v2499, %v2355
      %v2501 = vxor.u32 %v2500, 2147483648
      %v2502 = vmul.f32 %v2501, 1.442695
      %v2503 = vpow.pop %v2502
      %v2504 = vadd.f32 %v2503, 1.0
      %v2505 = vrcp.pop %v2504
      %v2506 = vmul.f32 1.0, %v2505
      %s2507 = scalar_lea.vmem [#allocation3], 10
      %v2508 = vld [vmem:[%s2507] sm:$0x3]
      %v2509 = vadd.f32 %v2508, %v2425
      %v2510 = vxor.u32 %v2509, 2147483648
      %v2511 = vmul.f32 %v2510, 1.442695
      %v2512 = vpow.pop %v2511
      %v2513 = vadd.f32 %v2512, 1.0
      %v2514 = vrcp.pop %v2513
      %v2515 = vmul.f32 1.0, %v2514
      %s2516 = scalar_lea.vmem [#allocation4], 10
      %v2517 = vld [vmem:[%s2516] sm:$0x3]
      %v2518 = vmul.f32 %v2506, %v2495
      %v2519 = vadd.f32 %v2517, %v2518
      %v2520 = vtanh.pop %v2519
      %v2521 = vsub.f32 1.0, %v2515
      %v2522 = vmul.f32 %v2521, %v2520
      %v2523 = vmul.f32 %v2515, %v2208
      %v2524 = vadd.f32 %v2522, %v2523
      %s2525 = scalar_lea.vmem %s9, 160
      %v2526 = vld [vmem:[%s2525] sm:$0xff]
      %v2527 = vld [vmem:[%s2525 + $0x8] sm:$0xff]
      %v2528 = vld [vmem:[%s2525 + $0x10] sm:$0xff]
      %v2529 = vld [vmem:[%s2525 + $0x18] sm:$0xff]
      %v2531 = vsel %vm710, %v2524, 0
      %2533 = vmatprep.subr.mxu0 0.0
      %2534 = vmatpush1.msra.mxu0 %v2526
      %2535 = vmatprep.subr.mxu0 0.0
      %2536 = vmatpush1.msra.mxu0 %v2527
      %2537 = vmatprep.subr.mxu0 0.0
      %2538 = vmatpush1.msra.mxu0 %v2528
      %2539 = vmatprep.subr.mxu0 0.0
      %2540 = vmatpush1.msra.mxu0 %v2529
      %2541 = vmatprep.subr.mxu0 0.0
      %2542 = vmatpush1.msra.mxu0 0.0
      %2543 = vmatprep.subr.mxu0 0.0
      %2544 = vmatpush1.msra.mxu0 0.0
      %2545 = vmatprep.subr.mxu0 0.0
      %2546 = vmatpush1.msra.mxu0 0.0
      %2547 = vmatprep.subr.mxu0 0.0
      %2548 = vmatpush1.msra.mxu0 0.0
      %2549 = vmatprep.subr.mxu0 0.0
      %2550 = vmatpush1.msra.mxu0 0.0
      %2551 = vmatprep.subr.mxu0 0.0
      %2552 = vmatpush1.msra.mxu0 0.0
      %2553 = vmatprep.subr.mxu0 0.0
      %2554 = vmatpush1.msra.mxu0 0.0
      %2555 = vmatprep.subr.mxu0 0.0
      %2556 = vmatpush1.msra.mxu0 0.0
      %2557 = vmatprep.subr.mxu0 0.0
      %2558 = vmatpush1.msra.mxu0 0.0
      %2559 = vmatprep.subr.mxu0 0.0
      %2560 = vmatpush1.msra.mxu0 0.0
      %2561 = vmatprep.subr.mxu0 0.0
      %2562 = vmatpush1.msra.mxu0 0.0
      %2563 = vmatprep.subr.mxu0 0.0
      %2564 = vmatpush1.msra.mxu0 0.0
      %2565 = vmatprep.subr.mxu0 0.0
      %2566 = vmatpush1.msra.mxu0 0.0
      %2567 = vmatprep.subr.mxu0 0.0
      %2568 = vmatpush1.msra.mxu0 0.0
      %2569 = vmatprep.subr.mxu0 0.0
      %2570 = vmatpush1.msra.mxu0 0.0
      %2571 = vmatprep.subr.mxu0 0.0
      %2572 = vmatpush1.msra.mxu0 0.0
      %2573 = vmatprep.subr.mxu0 0.0
      %2574 = vmatpush1.msra.mxu0 0.0
      %2575 = vmatprep.subr.mxu0 0.0
      %2576 = vmatpush1.msra.mxu0 0.0
      %2577 = vmatprep.subr.mxu0 0.0
      %2578 = vmatpush1.msra.mxu0 0.0
      %2579 = vmatprep.subr.mxu0 0.0
      %2580 = vmatpush1.msra.mxu0 0.0
      %2581 = vmatprep.subr.mxu0 0.0
      %2582 = vmatpush1.msra.mxu0 0.0
      %2583 = vmatprep.subr.mxu0 0.0
      %2584 = vmatpush1.msra.mxu0 0.0
      %2585 = vmatprep.subr.mxu0 0.0
      %2586 = vmatpush1.msra.mxu0 0.0
      %2587 = vmatprep.subr.mxu0 0.0
      %2588 = vmatpush1.msra.mxu0 0.0
      %2589 = vmatprep.subr.mxu0 0.0
      %2590 = vmatpush1.msra.mxu0 0.0
      %2591 = vmatprep.subr.mxu0 0.0
      %2592 = vmatpush1.msra.mxu0 0.0
      %2593 = vmatprep.subr.mxu0 0.0
      %2594 = vmatpush1.msra.mxu0 0.0
      %2595 = vmatprep.subr.mxu0 0.0
      %2596 = vmatpush1.msra.mxu0 0.0
      %2597 = vmatprep.mubr.f32.mxu0 0.0
      %2598 = vmatmul.mubr.f32.gmra.mrb[0].mxu0 %v2531
      %v2599 = vpop.f32.mrb[0].mxu0
      %v2600 = vadd.f32 0.0, %v2599
      %v2601 = vpop.f32.mrb[0].mxu0
      %2602 = vdwg.mxu0
      %v2603 = vadd.f32 %v2287, %v2600
      %2604 = vmatprep.subr.mxu0 0.0
      %2605 = vmatpush1.msra.mxu0 %v676
      %2606 = vmatprep.subr.mxu0 0.0
      %2607 = vmatpush1.msra.mxu0 %v677
      %2608 = vmatprep.subr.mxu0 0.0
      %2609 = vmatpush1.msra.mxu0 %v678
      %2610 = vmatprep.subr.mxu0 0.0
      %2611 = vmatpush1.msra.mxu0 %v679
      %2612 = vmatprep.subr.mxu0 0.0
      %2613 = vmatpush1.msra.mxu0 0.0
      %2614 = vmatprep.subr.mxu0 0.0
      %2615 = vmatpush1.msra.mxu0 0.0
      %2616 = vmatprep.subr.mxu0 0.0
      %2617 = vmatpush1.msra.mxu0 0.0
      %2618 = vmatprep.subr.mxu0 0.0
      %2619 = vmatpush1.msra.mxu0 0.0
      %2620 = vmatprep.subr.mxu0 0.0
      %2621 = vmatpush1.msra.mxu0 0.0
      %2622 = vmatprep.subr.mxu0 0.0
      %2623 = vmatpush1.msra.mxu0 0.0
      %2624 = vmatprep.subr.mxu0 0.0
      %2625 = vmatpush1.msra.mxu0 0.0
      %2626 = vmatprep.subr.mxu0 0.0
      %2627 = vmatpush1.msra.mxu0 0.0
      %2628 = vmatprep.subr.mxu0 0.0
      %2629 = vmatpush1.msra.mxu0 0.0
      %2630 = vmatprep.subr.mxu0 0.0
      %2631 = vmatpush1.msra.mxu0 0.0
      %2632 = vmatprep.subr.mxu0 0.0
      %2633 = vmatpush1.msra.mxu0 0.0
      %2634 = vmatprep.subr.mxu0 0.0
      %2635 = vmatpush1.msra.mxu0 0.0
      %2636 = vmatprep.subr.mxu0 0.0
      %2637 = vmatpush1.msra.mxu0 0.0
      %2638 = vmatprep.subr.mxu0 0.0
      %2639 = vmatpush1.msra.mxu0 0.0
      %2640 = vmatprep.subr.mxu0 0.0
      %2641 = vmatpush1.msra.mxu0 0.0
      %2642 = vmatprep.subr.mxu0 0.0
      %2643 = vmatpush1.msra.mxu0 0.0
      %2644 = vmatprep.subr.mxu0 0.0
      %2645 = vmatpush1.msra.mxu0 0.0
      %2646 = vmatprep.subr.mxu0 0.0
      %2647 = vmatpush1.msra.mxu0 0.0
      %2648 = vmatprep.subr.mxu0 0.0
      %2649 = vmatpush1.msra.mxu0 0.0
      %2650 = vmatprep.subr.mxu0 0.0
      %2651 = vmatpush1.msra.mxu0 0.0
      %2652 = vmatprep.subr.mxu0 0.0
      %2653 = vmatpush1.msra.mxu0 0.0
      %2654 = vmatprep.subr.mxu0 0.0
      %2655 = vmatpush1.msra.mxu0 0.0
      %2656 = vmatprep.subr.mxu0 0.0
      %2657 = vmatpush1.msra.mxu0 0.0
      %2658 = vmatprep.subr.mxu0 0.0
      %2659 = vmatpush1.msra.mxu0 0.0
      %2660 = vmatprep.subr.mxu0 0.0
      %2661 = vmatpush1.msra.mxu0 0.0
      %2662 = vmatprep.subr.mxu0 0.0
      %2663 = vmatpush1.msra.mxu0 0.0
      %2664 = vmatprep.subr.mxu0 0.0
      %2665 = vmatpush1.msra.mxu0 0.0
      %2666 = vmatprep.subr.mxu0 0.0
      %2667 = vmatpush1.msra.mxu0 0.0
      %2668 = vmatprep.mubr.f32.mxu0 0.0
      %2669 = vmatmul.mubr.f32.gmra.mrb[0].mxu0 %v2531
      %v2670 = vpop.f32.mrb[0].mxu0
      %v2671 = vadd.f32 %v693, %v2670
      %v2672 = vpop.f32.mrb[0].mxu0
      %2673 = vdwg.mxu0
      %2674 = vmatprep.subr.mxu0 0.0
      %2675 = vmatpush1.msra.mxu0 %v680
      %2676 = vmatprep.subr.mxu0 0.0
      %2677 = vmatpush1.msra.mxu0 %v681
      %2678 = vmatprep.subr.mxu0 0.0
      %2679 = vmatpush1.msra.mxu0 %v682
      %2680 = vmatprep.subr.mxu0 0.0
      %2681 = vmatpush1.msra.mxu0 %v683
      %2682 = vmatprep.subr.mxu0 0.0
      %2683 = vmatpush1.msra.mxu0 0.0
      %2684 = vmatprep.subr.mxu0 0.0
      %2685 = vmatpush1.msra.mxu0 0.0
      %2686 = vmatprep.subr.mxu0 0.0
      %2687 = vmatpush1.msra.mxu0 0.0
      %2688 = vmatprep.subr.mxu0 0.0
      %2689 = vmatpush1.msra.mxu0 0.0
      %2690 = vmatprep.subr.mxu0 0.0
      %2691 = vmatpush1.msra.mxu0 0.0
      %2692 = vmatprep.subr.mxu0 0.0
      %2693 = vmatpush1.msra.mxu0 0.0
      %2694 = vmatprep.subr.mxu0 0.0
      %2695 = vmatpush1.msra.mxu0 0.0
      %2696 = vmatprep.subr.mxu0 0.0
      %2697 = vmatpush1.msra.mxu0 0.0
      %2698 = vmatprep.subr.mxu0 0.0
      %2699 = vmatpush1.msra.mxu0 0.0
      %2700 = vmatprep.subr.mxu0 0.0
      %2701 = vmatpush1.msra.mxu0 0.0
      %2702 = vmatprep.subr.mxu0 0.0
      %2703 = vmatpush1.msra.mxu0 0.0
      %2704 = vmatprep.subr.mxu0 0.0
      %2705 = vmatpush1.msra.mxu0 0.0
      %2706 = vmatprep.subr.mxu0 0.0
      %2707 = vmatpush1.msra.mxu0 0.0
      %2708 = vmatprep.subr.mxu0 0.0
      %2709 = vmatpush1.msra.mxu0 0.0
      %2710 = vmatprep.subr.mxu0 0.0
      %2711 = vmatpush1.msra.mxu0 0.0
      %2712 = vmatprep.subr.mxu0 0.0
      %2713 = vmatpush1.msra.mxu0 0.0
      %2714 = vmatprep.subr.mxu0 0.0
      %2715 = vmatpush1.msra.mxu0 0.0
      %2716 = vmatprep.subr.mxu0 0.0
      %2717 = vmatpush1.msra.mxu0 0.0
      %2718 = vmatprep.subr.mxu0 0.0
      %2719 = vmatpush1.msra.mxu0 0.0
      %2720 = vmatprep.subr.mxu0 0.0
      %2721 = vmatpush1.msra.mxu0 0.0
      %2722 = vmatprep.subr.mxu0 0.0
      %2723 = vmatpush1.msra.mxu0 0.0
      %2724 = vmatprep.subr.mxu0 0.0
      %2725 = vmatpush1.msra.mxu0 0.0
      %2726 = vmatprep.subr.mxu0 0.0
      %2727 = vmatpush1.msra.mxu0 0.0
      %2728 = vmatprep.subr.mxu0 0.0
      %2729 = vmatpush1.msra.mxu0 0.0
      %2730 = vmatprep.subr.mxu0 0.0
      %2731 = vmatpush1.msra.mxu0 0.0
      %2732 = vmatprep.subr.mxu0 0.0
      %2733 = vmatpush1.msra.mxu0 0.0
      %2734 = vmatprep.subr.mxu0 0.0
      %2735 = vmatpush1.msra.mxu0 0.0
      %2736 = vmatprep.subr.mxu0 0.0
      %2737 = vmatpush1.msra.mxu0 0.0
      %2738 = vmatprep.mubr.f32.mxu0 0.0
      %2739 = vmatmul.mubr.f32.gmra.mrb[0].mxu0 %v2531
      %v2740 = vpop.f32.mrb[0].mxu0
      %v2741 = vadd.f32 %v700, %v2740
      %v2742 = vpop.f32.mrb[0].mxu0
      %2743 = vdwg.mxu0
      %2744 = vmatprep.subr.mxu0 0.0
      %2745 = vmatpush1.msra.mxu0 %v684
      %2746 = vmatprep.subr.mxu0 0.0
      %2747 = vmatpush1.msra.mxu0 %v685
      %2748 = vmatprep.subr.mxu0 0.0
      %2749 = vmatpush1.msra.mxu0 %v686
      %2750 = vmatprep.subr.mxu0 0.0
      %2751 = vmatpush1.msra.mxu0 %v687
      %2752 = vmatprep.subr.mxu0 0.0
      %2753 = vmatpush1.msra.mxu0 0.0
      %2754 = vmatprep.subr.mxu0 0.0
      %2755 = vmatpush1.msra.mxu0 0.0
      %2756 = vmatprep.subr.mxu0 0.0
      %2757 = vmatpush1.msra.mxu0 0.0
      %2758 = vmatprep.subr.mxu0 0.0
      %2759 = vmatpush1.msra.mxu0 0.0
      %2760 = vmatprep.subr.mxu0 0.0
      %2761 = vmatpush1.msra.mxu0 0.0
      %2762 = vmatprep.subr.mxu0 0.0
      %2763 = vmatpush1.msra.mxu0 0.0
      %2764 = vmatprep.subr.mxu0 0.0
      %2765 = vmatpush1.msra.mxu0 0.0
      %2766 = vmatprep.subr.mxu0 0.0
      %2767 = vmatpush1.msra.mxu0 0.0
      %2768 = vmatprep.subr.mxu0 0.0
      %2769 = vmatpush1.msra.mxu0 0.0
      %2770 = vmatprep.subr.mxu0 0.0
      %2771 = vmatpush1.msra.mxu0 0.0
      %2772 = vmatprep.subr.mxu0 0.0
      %2773 = vmatpush1.msra.mxu0 0.0
      %2774 = vmatprep.subr.mxu0 0.0
      %2775 = vmatpush1.msra.mxu0 0.0
      %2776 = vmatprep.subr.mxu0 0.0
      %2777 = vmatpush1.msra.mxu0 0.0
      %2778 = vmatprep.subr.mxu0 0.0
      %2779 = vmatpush1.msra.mxu0 0.0
      %2780 = vmatprep.subr.mxu0 0.0
      %2781 = vmatpush1.msra.mxu0 0.0
      %2782 = vmatprep.subr.mxu0 0.0
      %2783 = vmatpush1.msra.mxu0 0.0
      %2784 = vmatprep.subr.mxu0 0.0
      %2785 = vmatpush1.msra.mxu0 0.0
      %2786 = vmatprep.subr.mxu0 0.0
      %2787 = vmatpush1.msra.mxu0 0.0
      %2788 = vmatprep.subr.mxu0 0.0
      %2789 = vmatpush1.msra.mxu0 0.0
      %2790 = vmatprep.subr.mxu0 0.0
      %2791 = vmatpush1.msra.mxu0 0.0
      %2792 = vmatprep.subr.mxu0 0.0
      %2793 = vmatpush1.msra.mxu0 0.0
      %2794 = vmatprep.subr.mxu0 0.0
      %2795 = vmatpush1.msra.mxu0 0.0
      %2796 = vmatprep.subr.mxu0 0.0
      %2797 = vmatpush1.msra.mxu0 0.0
      %2798 = vmatprep.subr.mxu0 0.0
      %2799 = vmatpush1.msra.mxu0 0.0
      %2800 = vmatprep.subr.mxu0 0.0
      %2801 = vmatpush1.msra.mxu0 0.0
      %2802 = vmatprep.subr.mxu0 0.0
      %2803 = vmatpush1.msra.mxu0 0.0
      %2804 = vmatprep.subr.mxu0 0.0
      %2805 = vmatpush1.msra.mxu0 0.0
      %2806 = vmatprep.subr.mxu0 0.0
      %2807 = vmatpush1.msra.mxu0 0.0
      %2808 = vmatprep.mubr.f32.mxu0 0.0
      %2809 = vmatmul.mubr.f32.gmra.mrb[0].mxu0 %v2531
      %v2810 = vpop.f32.mrb[0].mxu0
      %v2811 = vadd.f32 %v707, %v2810
      %v2812 = vpop.f32.mrb[0].mxu0
      %2813 = vdwg.mxu0
      %s2814 = scalar_lea.vmem [#allocation2], 12
      %v2815 = vld [vmem:[%s2814] sm:$0x3]
      %v2816 = vadd.f32 %v2815, %v2671
      %v2817 = vxor.u32 %v2816, 2147483648
      %v2818 = vmul.f32 %v2817, 1.442695
      %v2819 = vpow.pop %v2818
      %v2820 = vadd.f32 %v2819, 1.0
      %v2821 = vrcp.pop %v2820
      %v2822 = vmul.f32 1.0, %v2821
      %s2823 = scalar_lea.vmem [#allocation3], 12
      %v2824 = vld [vmem:[%s2823] sm:$0x3]
      %v2825 = vadd.f32 %v2824, %v2741
      %v2826 = vxor.u32 %v2825, 2147483648
      %v2827 = vmul.f32 %v2826, 1.442695
      %v2828 = vpow.pop %v2827
      %v2829 = vadd.f32 %v2828, 1.0
      %v2830 = vrcp.pop %v2829
      %v2831 = vmul.f32 1.0, %v2830
      %s2832 = scalar_lea.vmem [#allocation4], 12
      %v2833 = vld [vmem:[%s2832] sm:$0x3]
      %v2834 = vmul.f32 %v2822, %v2811
      %v2835 = vadd.f32 %v2833, %v2834
      %v2836 = vtanh.pop %v2835
      %v2837 = vsub.f32 1.0, %v2831
      %v2838 = vmul.f32 %v2837, %v2836
      %v2839 = vmul.f32 %v2831, %v2524
      %v2840 = vadd.f32 %v2838, %v2839
      %s2841 = scalar_lea.vmem %s9, 192
      %v2842 = vld [vmem:[%s2841] sm:$0xff]
      %v2843 = vld [vmem:[%s2841 + $0x8] sm:$0xff]
      %v2844 = vld [vmem:[%s2841 + $0x10] sm:$0xff]
      %v2845 = vld [vmem:[%s2841 + $0x18] sm:$0xff]
      %v2847 = vsel %vm710, %v2840, 0
      %2849 = vmatprep.subr.mxu0 0.0
      %2850 = vmatpush1.msra.mxu0 %v2842
      %2851 = vmatprep.subr.mxu0 0.0
      %2852 = vmatpush1.msra.mxu0 %v2843
      %2853 = vmatprep.subr.mxu0 0.0
      %2854 = vmatpush1.msra.mxu0 %v2844
      %2855 = vmatprep.subr.mxu0 0.0
      %2856 = vmatpush1.msra.mxu0 %v2845
      %2857 = vmatprep.subr.mxu0 0.0
      %2858 = vmatpush1.msra.mxu0 0.0
      %2859 = vmatprep.subr.mxu0 0.0
      %2860 = vmatpush1.msra.mxu0 0.0
      %2861 = vmatprep.subr.mxu0 0.0
      %2862 = vmatpush1.msra.mxu0 0.0
      %2863 = vmatprep.subr.mxu0 0.0
      %2864 = vmatpush1.msra.mxu0 0.0
      %2865 = vmatprep.subr.mxu0 0.0
      %2866 = vmatpush1.msra.mxu0 0.0
      %2867 = vmatprep.subr.mxu0 0.0
      %2868 = vmatpush1.msra.mxu0 0.0
      %2869 = vmatprep.subr.mxu0 0.0
      %2870 = vmatpush1.msra.mxu0 0.0
      %2871 = vmatprep.subr.mxu0 0.0
      %2872 = vmatpush1.msra.mxu0 0.0
      %2873 = vmatprep.subr.mxu0 0.0
      %2874 = vmatpush1.msra.mxu0 0.0
      %2875 = vmatprep.subr.mxu0 0.0
      %2876 = vmatpush1.msra.mxu0 0.0
      %2877 = vmatprep.subr.mxu0 0.0
      %2878 = vmatpush1.msra.mxu0 0.0
      %2879 = vmatprep.subr.mxu0 0.0
      %2880 = vmatpush1.msra.mxu0 0.0
      %2881 = vmatprep.subr.mxu0 0.0
      %2882 = vmatpush1.msra.mxu0 0.0
      %2883 = vmatprep.subr.mxu0 0.0
      %2884 = vmatpush1.msra.mxu0 0.0
      %2885 = vmatprep.subr.mxu0 0.0
      %2886 = vmatpush1.msra.mxu0 0.0
      %2887 = vmatprep.subr.mxu0 0.0
      %2888 = vmatpush1.msra.mxu0 0.0
      %2889 = vmatprep.subr.mxu0 0.0
      %2890 = vmatpush1.msra.mxu0 0.0
      %2891 = vmatprep.subr.mxu0 0.0
      %2892 = vmatpush1.msra.mxu0 0.0
      %2893 = vmatprep.subr.mxu0 0.0
      %2894 = vmatpush1.msra.mxu0 0.0
      %2895 = vmatprep.subr.mxu0 0.0
      %2896 = vmatpush1.msra.mxu0 0.0
      %2897 = vmatprep.subr.mxu0 0.0
      %2898 = vmatpush1.msra.mxu0 0.0
      %2899 = vmatprep.subr.mxu0 0.0
      %2900 = vmatpush1.msra.mxu0 0.0
      %2901 = vmatprep.subr.mxu0 0.0
      %2902 = vmatpush1.msra.mxu0 0.0
      %2903 = vmatprep.subr.mxu0 0.0
      %2904 = vmatpush1.msra.mxu0 0.0
      %2905 = vmatprep.subr.mxu0 0.0
      %2906 = vmatpush1.msra.mxu0 0.0
      %2907 = vmatprep.subr.mxu0 0.0
      %2908 = vmatpush1.msra.mxu0 0.0
      %2909 = vmatprep.subr.mxu0 0.0
      %2910 = vmatpush1.msra.mxu0 0.0
      %2911 = vmatprep.subr.mxu0 0.0
      %2912 = vmatpush1.msra.mxu0 0.0
      %2913 = vmatprep.mubr.f32.mxu0 0.0
      %2914 = vmatmul.mubr.f32.gmra.mrb[0].mxu0 %v2847
      %v2915 = vpop.f32.mrb[0].mxu0
      %v2916 = vadd.f32 0.0, %v2915
      %v2917 = vpop.f32.mrb[0].mxu0
      %2918 = vdwg.mxu0
      %v2919 = vadd.f32 %v2603, %v2916
      %2920 = vmatprep.subr.mxu0 0.0
      %2921 = vmatpush1.msra.mxu0 %v676
      %2922 = vmatprep.subr.mxu0 0.0
      %2923 = vmatpush1.msra.mxu0 %v677
      %2924 = vmatprep.subr.mxu0 0.0
      %2925 = vmatpush1.msra.mxu0 %v678
      %2926 = vmatprep.subr.mxu0 0.0
      %2927 = vmatpush1.msra.mxu0 %v679
      %2928 = vmatprep.subr.mxu0 0.0
      %2929 = vmatpush1.msra.mxu0 0.0
      %2930 = vmatprep.subr.mxu0 0.0
      %2931 = vmatpush1.msra.mxu0 0.0
      %2932 = vmatprep.subr.mxu0 0.0
      %2933 = vmatpush1.msra.mxu0 0.0
      %2934 = vmatprep.subr.mxu0 0.0
      %2935 = vmatpush1.msra.mxu0 0.0
      %2936 = vmatprep.subr.mxu0 0.0
      %2937 = vmatpush1.msra.mxu0 0.0
      %2938 = vmatprep.subr.mxu0 0.0
      %2939 = vmatpush1.msra.mxu0 0.0
      %2940 = vmatprep.subr.mxu0 0.0
      %2941 = vmatpush1.msra.mxu0 0.0
      %2942 = vmatprep.subr.mxu0 0.0
      %2943 = vmatpush1.msra.mxu0 0.0
      %2944 = vmatprep.subr.mxu0 0.0
      %2945 = vmatpush1.msra.mxu0 0.0
      %2946 = vmatprep.subr.mxu0 0.0
      %2947 = vmatpush1.msra.mxu0 0.0
      %2948 = vmatprep.subr.mxu0 0.0
      %2949 = vmatpush1.msra.mxu0 0.0
      %2950 = vmatprep.subr.mxu0 0.0
      %2951 = vmatpush1.msra.mxu0 0.0
      %2952 = vmatprep.subr.mxu0 0.0
      %2953 = vmatpush1.msra.mxu0 0.0
      %2954 = vmatprep.subr.mxu0 0.0
      %2955 = vmatpush1.msra.mxu0 0.0
      %2956 = vmatprep.subr.mxu0 0.0
      %2957 = vmatpush1.msra.mxu0 0.0
      %2958 = vmatprep.subr.mxu0 0.0
      %2959 = vmatpush1.msra.mxu0 0.0
      %2960 = vmatprep.subr.mxu0 0.0
      %2961 = vmatpush1.msra.mxu0 0.0
      %2962 = vmatprep.subr.mxu0 0.0
      %2963 = vmatpush1.msra.mxu0 0.0
      %2964 = vmatprep.subr.mxu0 0.0
      %2965 = vmatpush1.msra.mxu0 0.0
      %2966 = vmatprep.subr.mxu0 0.0
      %2967 = vmatpush1.msra.mxu0 0.0
      %2968 = vmatprep.subr.mxu0 0.0
      %2969 = vmatpush1.msra.mxu0 0.0
      %2970 = vmatprep.subr.mxu0 0.0
      %2971 = vmatpush1.msra.mxu0 0.0
      %2972 = vmatprep.subr.mxu0 0.0
      %2973 = vmatpush1.msra.mxu0 0.0
      %2974 = vmatprep.subr.mxu0 0.0
      %2975 = vmatpush1.msra.mxu0 0.0
      %2976 = vmatprep.subr.mxu0 0.0
      %2977 = vmatpush1.msra.mxu0 0.0
      %2978 = vmatprep.subr.mxu0 0.0
      %2979 = vmatpush1.msra.mxu0 0.0
      %2980 = vmatprep.subr.mxu0 0.0
      %2981 = vmatpush1.msra.mxu0 0.0
      %2982 = vmatprep.subr.mxu0 0.0
      %2983 = vmatpush1.msra.mxu0 0.0
      %2984 = vmatprep.mubr.f32.mxu0 0.0
      %2985 = vmatmul.mubr.f32.gmra.mrb[0].mxu0 %v2847
      %v2986 = vpop.f32.mrb[0].mxu0
      %v2987 = vadd.f32 %v693, %v2986
      %v2988 = vpop.f32.mrb[0].mxu0
      %2989 = vdwg.mxu0
      %2990 = vmatprep.subr.mxu0 0.0
      %2991 = vmatpush1.msra.mxu0 %v680
      %2992 = vmatprep.subr.mxu0 0.0
      %2993 = vmatpush1.msra.mxu0 %v681
      %2994 = vmatprep.subr.mxu0 0.0
      %2995 = vmatpush1.msra.mxu0 %v682
      %2996 = vmatprep.subr.mxu0 0.0
      %2997 = vmatpush1.msra.mxu0 %v683
      %2998 = vmatprep.subr.mxu0 0.0
      %2999 = vmatpush1.msra.mxu0 0.0
      %3000 = vmatprep.subr.mxu0 0.0
      %3001 = vmatpush1.msra.mxu0 0.0
      %3002 = vmatprep.subr.mxu0 0.0
      %3003 = vmatpush1.msra.mxu0 0.0
      %3004 = vmatprep.subr.mxu0 0.0
      %3005 = vmatpush1.msra.mxu0 0.0
      %3006 = vmatprep.subr.mxu0 0.0
      %3007 = vmatpush1.msra.mxu0 0.0
      %3008 = vmatprep.subr.mxu0 0.0
      %3009 = vmatpush1.msra.mxu0 0.0
      %3010 = vmatprep.subr.mxu0 0.0
      %3011 = vmatpush1.msra.mxu0 0.0
      %3012 = vmatprep.subr.mxu0 0.0
      %3013 = vmatpush1.msra.mxu0 0.0
      %3014 = vmatprep.subr.mxu0 0.0
      %3015 = vmatpush1.msra.mxu0 0.0
      %3016 = vmatprep.subr.mxu0 0.0
      %3017 = vmatpush1.msra.mxu0 0.0
      %3018 = vmatprep.subr.mxu0 0.0
      %3019 = vmatpush1.msra.mxu0 0.0
      %3020 = vmatprep.subr.mxu0 0.0
      %3021 = vmatpush1.msra.mxu0 0.0
      %3022 = vmatprep.subr.mxu0 0.0
      %3023 = vmatpush1.msra.mxu0 0.0
      %3024 = vmatprep.subr.mxu0 0.0
      %3025 = vmatpush1.msra.mxu0 0.0
      %3026 = vmatprep.subr.mxu0 0.0
      %3027 = vmatpush1.msra.mxu0 0.0
      %3028 = vmatprep.subr.mxu0 0.0
      %3029 = vmatpush1.msra.mxu0 0.0
      %3030 = vmatprep.subr.mxu0 0.0
      %3031 = vmatpush1.msra.mxu0 0.0
      %3032 = vmatprep.subr.mxu0 0.0
      %3033 = vmatpush1.msra.mxu0 0.0
      %3034 = vmatprep.subr.mxu0 0.0
      %3035 = vmatpush1.msra.mxu0 0.0
      %3036 = vmatprep.subr.mxu0 0.0
      %3037 = vmatpush1.msra.mxu0 0.0
      %3038 = vmatprep.subr.mxu0 0.0
      %3039 = vmatpush1.msra.mxu0 0.0
      %3040 = vmatprep.subr.mxu0 0.0
      %3041 = vmatpush1.msra.mxu0 0.0
      %3042 = vmatprep.subr.mxu0 0.0
      %3043 = vmatpush1.msra.mxu0 0.0
      %3044 = vmatprep.subr.mxu0 0.0
      %3045 = vmatpush1.msra.mxu0 0.0
      %3046 = vmatprep.subr.mxu0 0.0
      %3047 = vmatpush1.msra.mxu0 0.0
      %3048 = vmatprep.subr.mxu0 0.0
      %3049 = vmatpush1.msra.mxu0 0.0
      %3050 = vmatprep.subr.mxu0 0.0
      %3051 = vmatpush1.msra.mxu0 0.0
      %3052 = vmatprep.subr.mxu0 0.0
      %3053 = vmatpush1.msra.mxu0 0.0
      %3054 = vmatprep.mubr.f32.mxu0 0.0
      %3055 = vmatmul.mubr.f32.gmra.mrb[0].mxu0 %v2847
      %v3056 = vpop.f32.mrb[0].mxu0
      %v3057 = vadd.f32 %v700, %v3056
      %v3058 = vpop.f32.mrb[0].mxu0
      %3059 = vdwg.mxu0
      %3060 = vmatprep.subr.mxu0 0.0
      %3061 = vmatpush1.msra.mxu0 %v684
      %3062 = vmatprep.subr.mxu0 0.0
      %3063 = vmatpush1.msra.mxu0 %v685
      %3064 = vmatprep.subr.mxu0 0.0
      %3065 = vmatpush1.msra.mxu0 %v686
      %3066 = vmatprep.subr.mxu0 0.0
      %3067 = vmatpush1.msra.mxu0 %v687
      %3068 = vmatprep.subr.mxu0 0.0
      %3069 = vmatpush1.msra.mxu0 0.0
      %3070 = vmatprep.subr.mxu0 0.0
      %3071 = vmatpush1.msra.mxu0 0.0
      %3072 = vmatprep.subr.mxu0 0.0
      %3073 = vmatpush1.msra.mxu0 0.0
      %3074 = vmatprep.subr.mxu0 0.0
      %3075 = vmatpush1.msra.mxu0 0.0
      %3076 = vmatprep.subr.mxu0 0.0
      %3077 = vmatpush1.msra.mxu0 0.0
      %3078 = vmatprep.subr.mxu0 0.0
      %3079 = vmatpush1.msra.mxu0 0.0
      %3080 = vmatprep.subr.mxu0 0.0
      %3081 = vmatpush1.msra.mxu0 0.0
      %3082 = vmatprep.subr.mxu0 0.0
      %3083 = vmatpush1.msra.mxu0 0.0
      %3084 = vmatprep.subr.mxu0 0.0
      %3085 = vmatpush1.msra.mxu0 0.0
      %3086 = vmatprep.subr.mxu0 0.0
      %3087 = vmatpush1.msra.mxu0 0.0
      %3088 = vmatprep.subr.mxu0 0.0
      %3089 = vmatpush1.msra.mxu0 0.0
      %3090 = vmatprep.subr.mxu0 0.0
      %3091 = vmatpush1.msra.mxu0 0.0
      %3092 = vmatprep.subr.mxu0 0.0
      %3093 = vmatpush1.msra.mxu0 0.0
      %3094 = vmatprep.subr.mxu0 0.0
      %3095 = vmatpush1.msra.mxu0 0.0
      %3096 = vmatprep.subr.mxu0 0.0
      %3097 = vmatpush1.msra.mxu0 0.0
      %3098 = vmatprep.subr.mxu0 0.0
      %3099 = vmatpush1.msra.mxu0 0.0
      %3100 = vmatprep.subr.mxu0 0.0
      %3101 = vmatpush1.msra.mxu0 0.0
      %3102 = vmatprep.subr.mxu0 0.0
      %3103 = vmatpush1.msra.mxu0 0.0
      %3104 = vmatprep.subr.mxu0 0.0
      %3105 = vmatpush1.msra.mxu0 0.0
      %3106 = vmatprep.subr.mxu0 0.0
      %3107 = vmatpush1.msra.mxu0 0.0
      %3108 = vmatprep.subr.mxu0 0.0
      %3109 = vmatpush1.msra.mxu0 0.0
      %3110 = vmatprep.subr.mxu0 0.0
      %3111 = vmatpush1.msra.mxu0 0.0
      %3112 = vmatprep.subr.mxu0 0.0
      %3113 = vmatpush1.msra.mxu0 0.0
      %3114 = vmatprep.subr.mxu0 0.0
      %3115 = vmatpush1.msra.mxu0 0.0
      %3116 = vmatprep.subr.mxu0 0.0
      %3117 = vmatpush1.msra.mxu0 0.0
      %3118 = vmatprep.subr.mxu0 0.0
      %3119 = vmatpush1.msra.mxu0 0.0
      %3120 = vmatprep.subr.mxu0 0.0
      %3121 = vmatpush1.msra.mxu0 0.0
      %3122 = vmatprep.subr.mxu0 0.0
      %3123 = vmatpush1.msra.mxu0 0.0
      %3124 = vmatprep.mubr.f32.mxu0 0.0
      %3125 = vmatmul.mubr.f32.gmra.mrb[0].mxu0 %v2847
      %v3126 = vpop.f32.mrb[0].mxu0
      %v3127 = vadd.f32 %v707, %v3126
      %v3128 = vpop.f32.mrb[0].mxu0
      %3129 = vdwg.mxu0
      %s3130 = scalar_lea.vmem [#allocation2], 14
      %v3131 = vld [vmem:[%s3130] sm:$0x3]
      %v3132 = vadd.f32 %v3131, %v2987
      %v3133 = vxor.u32 %v3132, 2147483648
      %v3134 = vmul.f32 %v3133, 1.442695
      %v3135 = vpow.pop %v3134
      %v3136 = vadd.f32 %v3135, 1.0
      %v3137 = vrcp.pop %v3136
      %v3138 = vmul.f32 1.0, %v3137
      %s3139 = scalar_lea.vmem [#allocation3], 14
      %v3140 = vld [vmem:[%s3139] sm:$0x3]
      %v3141 = vadd.f32 %v3140, %v3057
      %v3142 = vxor.u32 %v3141, 2147483648
      %v3143 = vmul.f32 %v3142, 1.442695
      %v3144 = vpow.pop %v3143
      %v3145 = vadd.f32 %v3144, 1.0
      %v3146 = vrcp.pop %v3145
      %v3147 = vmul.f32 1.0, %v3146
      %s3148 = scalar_lea.vmem [#allocation4], 14
      %v3149 = vld [vmem:[%s3148] sm:$0x3]
      %v3150 = vmul.f32 %v3138, %v3127
      %v3151 = vadd.f32 %v3149, %v3150
      %v3152 = vtanh.pop %v3151
      %v3153 = vsub.f32 1.0, %v3147
      %v3154 = vmul.f32 %v3153, %v3152
      %v3155 = vmul.f32 %v3147, %v2840
      %v3156 = vadd.f32 %v3154, %v3155
      %s3157 = scalar_lea.vmem %s9, 224
      %v3158 = vld [vmem:[%s3157] sm:$0xff]
      %v3159 = vld [vmem:[%s3157 + $0x8] sm:$0xff]
      %v3160 = vld [vmem:[%s3157 + $0x10] sm:$0xff]
      %v3161 = vld [vmem:[%s3157 + $0x18] sm:$0xff]
      %v3163 = vsel %vm710, %v3156, 0
      %3165 = vmatprep.subr.mxu0 0.0
      %3166 = vmatpush1.msra.mxu0 %v3158
      %3167 = vmatprep.subr.mxu0 0.0
      %3168 = vmatpush1.msra.mxu0 %v3159
      %3169 = vmatprep.subr.mxu0 0.0
      %3170 = vmatpush1.msra.mxu0 %v3160
      %3171 = vmatprep.subr.mxu0 0.0
      %3172 = vmatpush1.msra.mxu0 %v3161
      %3173 = vmatprep.subr.mxu0 0.0
      %3174 = vmatpush1.msra.mxu0 0.0
      %3175 = vmatprep.subr.mxu0 0.0
      %3176 = vmatpush1.msra.mxu0 0.0
      %3177 = vmatprep.subr.mxu0 0.0
      %3178 = vmatpush1.msra.mxu0 0.0
      %3179 = vmatprep.subr.mxu0 0.0
      %3180 = vmatpush1.msra.mxu0 0.0
      %3181 = vmatprep.subr.mxu0 0.0
      %3182 = vmatpush1.msra.mxu0 0.0
      %3183 = vmatprep.subr.mxu0 0.0
      %3184 = vmatpush1.msra.mxu0 0.0
      %3185 = vmatprep.subr.mxu0 0.0
      %3186 = vmatpush1.msra.mxu0 0.0
      %3187 = vmatprep.subr.mxu0 0.0
      %3188 = vmatpush1.msra.mxu0 0.0
      %3189 = vmatprep.subr.mxu0 0.0
      %3190 = vmatpush1.msra.mxu0 0.0
      %3191 = vmatprep.subr.mxu0 0.0
      %3192 = vmatpush1.msra.mxu0 0.0
      %3193 = vmatprep.subr.mxu0 0.0
      %3194 = vmatpush1.msra.mxu0 0.0
      %3195 = vmatprep.subr.mxu0 0.0
      %3196 = vmatpush1.msra.mxu0 0.0
      %3197 = vmatprep.subr.mxu0 0.0
      %3198 = vmatpush1.msra.mxu0 0.0
      %3199 = vmatprep.subr.mxu0 0.0
      %3200 = vmatpush1.msra.mxu0 0.0
      %3201 = vmatprep.subr.mxu0 0.0
      %3202 = vmatpush1.msra.mxu0 0.0
      %3203 = vmatprep.subr.mxu0 0.0
      %3204 = vmatpush1.msra.mxu0 0.0
      %3205 = vmatprep.subr.mxu0 0.0
      %3206 = vmatpush1.msra.mxu0 0.0
      %3207 = vmatprep.subr.mxu0 0.0
      %3208 = vmatpush1.msra.mxu0 0.0
      %3209 = vmatprep.subr.mxu0 0.0
      %3210 = vmatpush1.msra.mxu0 0.0
      %3211 = vmatprep.subr.mxu0 0.0
      %3212 = vmatpush1.msra.mxu0 0.0
      %3213 = vmatprep.subr.mxu0 0.0
      %3214 = vmatpush1.msra.mxu0 0.0
      %3215 = vmatprep.subr.mxu0 0.0
      %3216 = vmatpush1.msra.mxu0 0.0
      %3217 = vmatprep.subr.mxu0 0.0
      %3218 = vmatpush1.msra.mxu0 0.0
      %3219 = vmatprep.subr.mxu0 0.0
      %3220 = vmatpush1.msra.mxu0 0.0
      %3221 = vmatprep.subr.mxu0 0.0
      %3222 = vmatpush1.msra.mxu0 0.0
      %3223 = vmatprep.subr.mxu0 0.0
      %3224 = vmatpush1.msra.mxu0 0.0
      %3225 = vmatprep.subr.mxu0 0.0
      %3226 = vmatpush1.msra.mxu0 0.0
      %3227 = vmatprep.subr.mxu0 0.0
      %3228 = vmatpush1.msra.mxu0 0.0
      %3229 = vmatprep.mubr.f32.mxu0 0.0
      %3230 = vmatmul.mubr.f32.gmra.mrb[0].mxu0 %v3163
      %v3231 = vpop.f32.mrb[0].mxu0
      %v3232 = vadd.f32 0.0, %v3231
      %v3233 = vpop.f32.mrb[0].mxu0
      %3234 = vdwg.mxu0
      %v3235 = vadd.f32 %v2919, %v3232
      %v3237 = vlaneseq
      %v3238 = vshrl.u32 %v3237, 7
      %v3239 = vsub.s32 0, %v3238
      %v3240 = vrot.slane %v709, %v3239
      %v3242 = vadd.f32 %v3235, %v3240
      %v3243 = vxor.u32 %v3242, 2147483648
      %v3244 = vmul.f32 %v3243, 1.442695
      %v3245 = vpow.pop %v3244
      %v3246 = vadd.f32 %v3245, 1.0
      %v3247 = vrcp.pop %v3246
      %v3248 = vmul.f32 1.0, %v3247
      %vm3249 = vcmask 25600
      %3250 = vst.msk [vmem:[#allocation5] sm:$0x3] %vm3249, %v3248
    $region49: #{tpu_custom_call.1} parent=1 // pred_fallthru
      _
    // Predicated region
    $region50: #{tpu_custom_call.1} parent=1 // pred_check
      _
    $region51: #{tpu_custom_call.1} parent=1 // pred_check_branch
      %3252 = sbr.rel (0) target = $region53
    $region52: #{tpu_custom_call.1} parent=1 // pred_region
      %s3254 = ssub.s32 32, 32
      %3255 = vsyncadd [#allocation6], %s3254
      %s3257 = sshll.u32 [#allocation5], 4
      %s3258 = int_to_ptr.vmem [resolvable:$true] %s3257
      %3260 = dma.vmem_to_hbm [thread:$0]  %s3258, 32, %s11, [#allocation6]
    $region53: #{tpu_custom_call.1} parent=1 // pred_fallthru
      _
    // Predicated region
    $region54: #{tpu_custom_call.1} parent=1 // pred_check
      _
    $region55: #{tpu_custom_call.1} parent=1 // pred_check_branch
      %3262 = sbr.rel (0) target = $region57
    $region56: #{tpu_custom_call.1} parent=1 // pred_region
      %3263 = dma.done [#allocation6], 32
    $region57: #{tpu_custom_call.1} parent=1 // pred_fallthru
      _
    %3264 = vsyncpa [#allocation6], 1

</llo_original>
